<compile_context>
chip_gen: v5e
topology: v5e:2x2
jax: 0.10.0
libtpu: 0.0.40
codegen_flags: <defaults>
</compile_context>

<pallas_src>
import functools

import jax
import jax.numpy as jnp
from jax import lax
from jax.experimental import pallas as pl
from jax.experimental.pallas import tpu as pltpu

NEG_SLOPE = 0.2  # LeakyReLU(0.2)


def _leaky(x):
    return jnp.where(x >= 0, x, NEG_SLOPE * x)


# ----------------------------------------------------------------------------
# Single fused kernel: q/k/v LSTMs for all heads -> masked graph attention
# -> head mixing + residual + LeakyReLU -> time_linear.
# ----------------------------------------------------------------------------
def _fused_kernel(x_ref, mask_ref,
                  whh_ref, wih_ref, b_ref,
                  wihv_ref, whhv_ref, bv_ref,
                  dimw_ref, dimb_ref, tw_ref, tb_ref,
                  out_ref, v_buf):
    x = x_ref[...]                       # [N, T] f32
    N, T = x.shape
    whh = whh_ref[...]                   # [G, 4G] bf16, block-diag over (q heads | k heads)
    G = whh.shape[0]                     # 2 * n_heads * H
    nh = dimw_ref.shape[1]               # n_heads
    H = G // (2 * nh)                    # d_model
    mask = mask_ref[...]                 # [N, N] block-diag graph mask (cross-batch = -1e9)

    # ---- Loop-invariant broadcasts hoisted out of the unrolled time loop ----
    wih_bc = jnp.broadcast_to(wih_ref[...], (N, 4 * G))      # f32 [N, 4G]
    b_bc = jnp.broadcast_to(b_ref[...], (N, 4 * G))          # f32 [N, 4G]
    wihv = wihv_ref[...]                                      # [4, nh] (gate-major rows)
    whhv = whhv_ref[...]
    bv = bv_ref[...]
    wiv = [jnp.broadcast_to(wihv[g:g + 1, :], (N, nh)) for g in range(4)]
    whv = [jnp.broadcast_to(whhv[g:g + 1, :], (N, nh)) for g in range(4)]
    bvb = [jnp.broadcast_to(bv[g:g + 1, :], (N, nh)) for g in range(4)]

    def lstm_step(gates, c):
        ig = jax.nn.sigmoid(gates[:, 0:G])                    # gate-major columns (f32 math)
        fg = jax.nn.sigmoid(gates[:, G:2 * G])
        gg = jnp.tanh(gates[:, 2 * G:3 * G])
        og = jax.nn.sigmoid(gates[:, 3 * G:4 * G])
        c_new = fg * c + ig * gg
        return og * jnp.tanh(c_new), c_new

    # ---- t = 0: h == hv == 0, so skip the recurrent matmul and the hv terms.
    x0 = x[:, 0:1]
    h, c = lstm_step(x0 * wih_bc + b_bc, jnp.zeros((N, G), jnp.float32))

    giv = jax.nn.sigmoid(x0 * wiv[0] + bvb[0])
    ggv = jnp.tanh(x0 * wiv[2] + bvb[2])
    gov = jax.nn.sigmoid(x0 * wiv[3] + bvb[3])
    cv = giv * ggv
    hv = gov * jnp.tanh(cv)
    for hd in range(nh):
        v_buf[hd, :, 0:1] = hv[:, hd:hd + 1]                  # head-major [nh, N, T] scratch

    # ---- t >= 1: one block-diag bf16 MXU matmul per step for all q/k heads.
    # (T is static & small, so a fully unrolled loop is fine; switch to lax.fori_loop with a
    #  VMEM scratch if T ever grows past ~32.)
    for t in range(1, T):
        x_t = x[:, t:t + 1]                                                   # [N, 1]
        gates = (x_t * wih_bc
                 + jnp.dot(h.astype(jnp.bfloat16), whh,
                           preferred_element_type=jnp.float32)
                 + b_bc)
        h, c = lstm_step(gates, c)

        # v LSTMs (hidden = 1), all heads at once on the lane axis (f32 VPU work).
        giv = jax.nn.sigmoid(x_t * wiv[0] + hv * whv[0] + bvb[0])
        gfv = jax.nn.sigmoid(x_t * wiv[1] + hv * whv[1] + bvb[1])
        ggv = jnp.tanh(x_t * wiv[2] + hv * whv[2] + bvb[2])
        gov = jax.nn.sigmoid(x_t * wiv[3] + hv * whv[3] + bvb[3])
        cv = gfv * cv + giv * ggv
        hv = gov * jnp.tanh(cv)
        for hd in range(nh):
            v_buf[hd, :, t:t + 1] = hv[:, hd:hd + 1]

    # ---- Attention per head (batched over batch via the block-diag [N, N] mask),
    #      folded directly into the dim_linear head mix (no per-head HBM intermediate).
    scale = 1.0 / (float(H) ** 0.5)
    h2 = jnp.zeros((N, T), jnp.float32)
    for hd in range(nh):
        qh = h[:, hd * H:(hd + 1) * H]                         # [N, H]
        kh = h[:, (nh + hd) * H:(nh + hd + 1) * H]             # [N, H]
        att = lax.dot_general(qh, kh, (((1,), (1,)), ((), ())),
                              preferred_element_type=jnp.float32) * scale     # [N, N]
        att = _leaky(att) + mask
        att = att - jnp.max(att, axis=-1, keepdims=True)
        e = jnp.exp(att)
        p = e * pl.reciprocal(jnp.sum(e, axis=-1, keepdims=True), approx=True)
        v_h = v_buf[hd]                                        # contiguous [N, T]
        o_hd = _leaky(jnp.dot(p, v_h, preferred_element_type=jnp.float32))    # [N, T]
        h2 = h2 + o_hd * dimw_ref[0, hd]                       # dim_linear accumulate

    # dim_linear bias + residual input, LeakyReLU, then time_linear: [T] -> [O_pad].
    h2 = _leaky(h2 + dimb_ref[0, 0] + x)
    out = jnp.dot(h2, tw_ref[...], preferred_element_type=jnp.float32) + tb_ref[...]
    out_ref[...] = out                                         # full-lane store [N, O_pad]


# ----------------------------------------------------------------------------
# Parameter init (deterministic, PyTorch-like uniform(-1/sqrt(H), 1/sqrt(H)))
# ----------------------------------------------------------------------------
def _init_lstm_bank(key, n_heads, hidden):
    k = 1.0 / (hidden ** 0.5)
    ks = jax.random.split(key, 4)
    wih = jax.random.uniform(ks[0], (n_heads, 4 * hidden), jnp.float32, -k, k)          # input_size = 1
    whh = jax.random.uniform(ks[1], (n_heads, hidden, 4 * hidden), jnp.float32, -k, k)   # stored as [H, 4H]
    b_ih = jax.random.uniform(ks[2], (n_heads, 4 * hidden), jnp.float32, -k, k)
    b_hh = jax.random.uniform(ks[3], (n_heads, 4 * hidden), jnp.float32, -k, k)
    return wih, whh, b_ih + b_hh


def init_params(key, *, d_model, n_heads, input_len, output_len):
    kq, kk, kv, kd, kt = jax.random.split(key, 5)
    wih_q, whh_q, b_q = _init_lstm_bank(kq, n_heads, d_model)
    wih_k, whh_k, b_k = _init_lstm_bank(kk, n_heads, d_model)
    wih_v, whh_v1, b_v = _init_lstm_bank(kv, n_heads, 1)     # hidden = 1
    whh_v = whh_v1.reshape(n_heads, 4)

    kd1, kd2 = jax.random.split(kd)
    kdim = 1.0 / (n_heads ** 0.5)
    dim_w = jax.random.uniform(kd1, (1, n_heads), jnp.float32, -kdim, kdim)
    dim_b = jax.random.uniform(kd2, (1, 1), jnp.float32, -kdim, kdim)

    kt1, kt2 = jax.random.split(kt)
    ktime = 1.0 / (input_len ** 0.5)
    time_w = jax.random.uniform(kt1, (output_len, input_len), jnp.float32, -ktime, ktime)
    time_b = jax.random.uniform(kt2, (1, output_len), jnp.float32, -ktime, ktime)

    return dict(wih_q=wih_q, whh_q=whh_q, b_q=b_q,
                wih_k=wih_k, whh_k=whh_k, b_k=b_k,
                wih_v=wih_v, whh_v=whh_v, b_v=b_v,
                dim_w=dim_w, dim_b=dim_b, time_w=time_w, time_b=time_b)


# ----------------------------------------------------------------------------
# Pack per-head LSTM weights into the fused layouts consumed by the kernel.
#   w_big  : block-diag over the 2*n_heads (q-heads | k-heads) streams, columns gate-major
#            [i | f | g | o], each gate chunk stream-major with H lanes per stream.  bf16.
#   wih_row / b_row : f32 row vectors with the same column ordering (hoisted in-kernel).
#   wihv/whhv/bv    : [4, n_heads] gate-major rows for the hidden=1 v LSTMs.
#   time_w_t/time_b : pre-transposed [T, O_pad] / [1, O_pad] with O padded to 128 lanes.
# ----------------------------------------------------------------------------
def pack_params(params):
    # TODO(synk): optionally ship whh compact as [2*n_heads, H, 4H] and expand to the
    # block-diagonal inside the kernel to cut HBM bytes another 8x; skipped at toy sizes.
    whh_q, whh_k = params["whh_q"], params["whh_k"]
    nh, H, _ = whh_q.shape
    SH = 2 * nh
    G = SH * H

    whh_all = jnp.concatenate([whh_q, whh_k], axis=0)                 # [SH, H, 4H]
    whh_g = whh_all.reshape(SH, H, 4, H)
    eye_sh = jnp.eye(SH, dtype=jnp.float32)
    w_big = jnp.einsum('st,sigj->sigtj', eye_sh, whh_g).reshape(G, 4 * G)

    wih_all = jnp.concatenate([params["wih_q"], params["wih_k"]], axis=0)   # [SH, 4H]
    wih_row = jnp.transpose(wih_all.reshape(SH, 4, H), (1, 0, 2)).reshape(1, 4 * G)
    b_all = jnp.concatenate([params["b_q"], params["b_k"]], axis=0)
    b_row = jnp.transpose(b_all.reshape(SH, 4, H), (1, 0, 2)).reshape(1, 4 * G)

    time_w = params["time_w"]                                          # [O, T]
    O, T = time_w.shape
    O_pad = ((O + 127) // 128) * 128
    tw_t = jnp.zeros((T, O_pad), jnp.float32).at[:, :O].set(time_w.T)
    tb_pad = jnp.zeros((1, O_pad), jnp.float32).at[:, :O].set(params["time_b"])

    return dict(w_big=w_big.astype(jnp.bfloat16),      # bf16: halves the dominant weight DMA
                wih_row=wih_row, b_row=b_row,          # f32 (elementwise path stays f32)
                wihv=params["wih_v"].T, whhv=params["whh_v"].T, bv=params["b_v"].T,
                dim_w=params["dim_w"], dim_b=params["dim_b"],
                time_w_t=tw_t, time_b_pad=tb_pad)


# ----------------------------------------------------------------------------
# Model forward (encoding_x / input_y / encoding_y are unused, as in PyTorch).
# ----------------------------------------------------------------------------
@functools.partial(jax.jit, static_argnames=("output_len",))
def model_forward(input_x, encoding_x, input_y, encoding_y, graph, packed, *, output_len):
    del encoding_x, input_y, encoding_y
    B, T, S = input_x.shape
    N = B * S
    nh = packed["dim_w"].shape[1]
    O_pad = packed["time_w_t"].shape[1]

    # input_x.transpose(1,2).unsqueeze(-1): [B, S, T, 1] -> squeeze feature dim -> [N, T]
    x_nt = jnp.transpose(input_x, (0, 2, 1)).astype(jnp.float32).reshape(N, T)

    # Graph mask (as in Attention.forward), lifted to a block-diagonal [N, N] mask so the
    # per-batch attention runs as one dense [N, N] score matrix.
    graph_t = graph.astype(jnp.float32).T + jnp.eye(S, dtype=jnp.float32)
    mask_within = jnp.where(graph_t == 0, -1e9, 0.0).astype(jnp.float32)      # [S, S]
    blockpat = jnp.kron(jnp.eye(B, dtype=jnp.float32), jnp.ones((S, S), jnp.float32))
    mask_full = jnp.where(blockpat > 0,
                          jnp.kron(jnp.eye(B, dtype=jnp.float32), mask_within),
                          -1e9).astype(jnp.float32)                          # [N, N]

    vspec = pl.BlockSpec(memory_space=pltpu.MemorySpace.VMEM)
    sspec = pl.BlockSpec(memory_space=pltpu.MemorySpace.SMEM)

    out_pad = pl.pallas_call(
        _fused_kernel,
        out_shape=jax.ShapeDtypeStruct((N, O_pad), jnp.float32),
        in_specs=[vspec, vspec,               # x, mask
                  vspec, vspec, vspec,        # w_big (bf16), wih_row, b_row
                  vspec, vspec, vspec,        # wihv, whhv, bv
                  sspec, sspec,               # dim_w, dim_b (scalar reads)
                  vspec, vspec],              # time_w_t, time_b_pad
        out_specs=vspec,
        scratch_shapes=[pltpu.VMEM((nh, N, T), jnp.float32)],   # per-head v sequences
    )(x_nt, mask_full,
      packed["w_big"], packed["wih_row"], packed["b_row"],
      packed["wihv"], packed["whhv"], packed["bv"],
      packed["dim_w"], packed["dim_b"],
      packed["time_w_t"], packed["time_b_pad"])

    out_nt = out_pad[:, :output_len]                                         # drop lane padding
    # h.transpose(1, 2): [B, output_len, sensors]
    return jnp.transpose(out_nt.reshape(B, S, output_len), (0, 2, 1))


if __name__ == "__main__":
    # Small shapes consistent with the module's forward.
    batch, input_len, sensors = 2, 8, 4
    output_len = 6
    d_model = 32
    n_heads = 4

    root = jax.random.PRNGKey(0)
    k_par, k_x, k_g, k_ex, k_y, k_ey = jax.random.split(root, 6)

    params = init_params(k_par, d_model=d_model, n_heads=n_heads,
                         input_len=input_len, output_len=output_len)
    packed = pack_params(params)

    input_x = jax.random.normal(k_x, (batch, input_len, sensors), jnp.float32)
    graph = (jax.random.uniform(k_g, (sensors, sensors)) > 0.5).astype(jnp.float32)
    # Unused by the forward pass (kept to mirror the PyTorch signature).
    encoding_x = jax.random.normal(k_ex, (batch, input_len, 4), jnp.float32)
    input_y = jax.random.normal(k_y, (batch, output_len, sensors), jnp.float32)
    encoding_y = jax.random.normal(k_ey, (batch, output_len, 4), jnp.float32)

    # TODO(synk): only the individual=False path is implemented; dropout is unused in the
    # reference forward and therefore omitted.
    out = model_forward(input_x, encoding_x, input_y, encoding_y, graph, packed,
                        output_len=output_len)
    out = jax.block_until_ready(out)

    assert out.shape == (batch, output_len, sensors)
    assert bool(jnp.all(jnp.isfinite(out)))
    print("KERNEL_OK")
</pallas_src>

<mosaic_0001>
module attributes {stable_mosaic.version = 11 : i64} {
  func.func @_fused_kernel(%arg0: memref<8x8xf32, #tpu.memory_space<vmem>>, %arg1: memref<8x8xf32, #tpu.memory_space<vmem>>, %arg2: memref<256x1024xbf16, #tpu.memory_space<vmem>>, %arg3: memref<1x1024xf32, #tpu.memory_space<vmem>>, %arg4: memref<1x1024xf32, #tpu.memory_space<vmem>>, %arg5: memref<4x4xf32, #tpu.memory_space<vmem>>, %arg6: memref<4x4xf32, #tpu.memory_space<vmem>>, %arg7: memref<4x4xf32, #tpu.memory_space<vmem>>, %arg8: memref<1x4xf32, #tpu.memory_space<smem>>, %arg9: memref<1x1xf32, #tpu.memory_space<smem>>, %arg10: memref<8x128xf32, #tpu.memory_space<vmem>>, %arg11: memref<1x128xf32, #tpu.memory_space<vmem>>, %arg12: memref<8x128xf32, #tpu.memory_space<vmem>>, %arg13: memref<4x8x8xf32, #tpu.memory_space<vmem>>) attributes {dimension_semantics = [], scalar_prefetch = 0 : i64, scratch_operands = 1 : i64, tpu.core_type = #tpu.core_type<tc>} {
    %c0 = arith.constant 0 : index
    %c0_0 = arith.constant 0 : index
    %0 = vector.load %arg0[%c0, %c0_0] : memref<8x8xf32, #tpu.memory_space<vmem>>, vector<8x8xf32>
    %c0_1 = arith.constant 0 : index
    %c0_2 = arith.constant 0 : index
    %1 = vector.load %arg2[%c0_1, %c0_2] : memref<256x1024xbf16, #tpu.memory_space<vmem>>, vector<256x1024xbf16>
    %c0_3 = arith.constant 0 : index
    %c0_4 = arith.constant 0 : index
    %2 = vector.load %arg1[%c0_3, %c0_4] : memref<8x8xf32, #tpu.memory_space<vmem>>, vector<8x8xf32>
    %c0_5 = arith.constant 0 : index
    %c0_6 = arith.constant 0 : index
    %3 = vector.load %arg3[%c0_5, %c0_6] : memref<1x1024xf32, #tpu.memory_space<vmem>>, vector<1x1024xf32>
    %4 = vector.shape_cast %3 : vector<1x1024xf32> to vector<1x1024xf32>
    %5 = vector.broadcast %4 : vector<1x1024xf32> to vector<8x1024xf32>
    %c0_7 = arith.constant 0 : index
    %c0_8 = arith.constant 0 : index
    %6 = vector.load %arg4[%c0_7, %c0_8] : memref<1x1024xf32, #tpu.memory_space<vmem>>, vector<1x1024xf32>
    %7 = vector.shape_cast %6 : vector<1x1024xf32> to vector<1x1024xf32>
    %8 = vector.broadcast %7 : vector<1x1024xf32> to vector<8x1024xf32>
    %c0_9 = arith.constant 0 : index
    %c0_10 = arith.constant 0 : index
    %9 = vector.load %arg5[%c0_9, %c0_10] : memref<4x4xf32, #tpu.memory_space<vmem>>, vector<4x4xf32>
    %c0_11 = arith.constant 0 : index
    %c0_12 = arith.constant 0 : index
    %10 = vector.load %arg6[%c0_11, %c0_12] : memref<4x4xf32, #tpu.memory_space<vmem>>, vector<4x4xf32>
    %c0_13 = arith.constant 0 : index
    %c0_14 = arith.constant 0 : index
    %11 = vector.load %arg7[%c0_13, %c0_14] : memref<4x4xf32, #tpu.memory_space<vmem>>, vector<4x4xf32>
    %12 = vector.extract_strided_slice %9 {offsets = [0, 0], sizes = [1, 4], strides = [1, 1]} : vector<4x4xf32> to vector<1x4xf32>
    %13 = vector.shape_cast %12 : vector<1x4xf32> to vector<1x4xf32>
    %14 = vector.broadcast %13 : vector<1x4xf32> to vector<8x4xf32>
    %15 = vector.extract_strided_slice %9 {offsets = [1, 0], sizes = [1, 4], strides = [1, 1]} : vector<4x4xf32> to vector<1x4xf32>
    %16 = vector.shape_cast %15 : vector<1x4xf32> to vector<1x4xf32>
    %17 = vector.broadcast %16 : vector<1x4xf32> to vector<8x4xf32>
    %18 = vector.extract_strided_slice %9 {offsets = [2, 0], sizes = [1, 4], strides = [1, 1]} : vector<4x4xf32> to vector<1x4xf32>
    %19 = vector.shape_cast %18 : vector<1x4xf32> to vector<1x4xf32>
    %20 = vector.broadcast %19 : vector<1x4xf32> to vector<8x4xf32>
    %21 = vector.extract_strided_slice %9 {offsets = [3, 0], sizes = [1, 4], strides = [1, 1]} : vector<4x4xf32> to vector<1x4xf32>
    %22 = vector.shape_cast %21 : vector<1x4xf32> to vector<1x4xf32>
    %23 = vector.broadcast %22 : vector<1x4xf32> to vector<8x4xf32>
    %24 = vector.extract_strided_slice %10 {offsets = [0, 0], sizes = [1, 4], strides = [1, 1]} : vector<4x4xf32> to vector<1x4xf32>
    %25 = vector.shape_cast %24 : vector<1x4xf32> to vector<1x4xf32>
    %26 = vector.broadcast %25 : vector<1x4xf32> to vector<8x4xf32>
    %27 = vector.extract_strided_slice %10 {offsets = [1, 0], sizes = [1, 4], strides = [1, 1]} : vector<4x4xf32> to vector<1x4xf32>
    %28 = vector.shape_cast %27 : vector<1x4xf32> to vector<1x4xf32>
    %29 = vector.broadcast %28 : vector<1x4xf32> to vector<8x4xf32>
    %30 = vector.extract_strided_slice %10 {offsets = [2, 0], sizes = [1, 4], strides = [1, 1]} : vector<4x4xf32> to vector<1x4xf32>
    %31 = vector.shape_cast %30 : vector<1x4xf32> to vector<1x4xf32>
    %32 = vector.broadcast %31 : vector<1x4xf32> to vector<8x4xf32>
    %33 = vector.extract_strided_slice %10 {offsets = [3, 0], sizes = [1, 4], strides = [1, 1]} : vector<4x4xf32> to vector<1x4xf32>
    %34 = vector.shape_cast %33 : vector<1x4xf32> to vector<1x4xf32>
    %35 = vector.broadcast %34 : vector<1x4xf32> to vector<8x4xf32>
    %36 = vector.extract_strided_slice %11 {offsets = [0, 0], sizes = [1, 4], strides = [1, 1]} : vector<4x4xf32> to vector<1x4xf32>
    %37 = vector.shape_cast %36 : vector<1x4xf32> to vector<1x4xf32>
    %38 = vector.broadcast %37 : vector<1x4xf32> to vector<8x4xf32>
    %39 = vector.extract_strided_slice %11 {offsets = [1, 0], sizes = [1, 4], strides = [1, 1]} : vector<4x4xf32> to vector<1x4xf32>
    %40 = vector.shape_cast %39 : vector<1x4xf32> to vector<1x4xf32>
    %41 = vector.broadcast %40 : vector<1x4xf32> to vector<8x4xf32>
    %42 = vector.extract_strided_slice %11 {offsets = [2, 0], sizes = [1, 4], strides = [1, 1]} : vector<4x4xf32> to vector<1x4xf32>
    %43 = vector.shape_cast %42 : vector<1x4xf32> to vector<1x4xf32>
    %44 = vector.broadcast %43 : vector<1x4xf32> to vector<8x4xf32>
    %45 = vector.extract_strided_slice %11 {offsets = [3, 0], sizes = [1, 4], strides = [1, 1]} : vector<4x4xf32> to vector<1x4xf32>
    %46 = vector.shape_cast %45 : vector<1x4xf32> to vector<1x4xf32>
    %47 = vector.broadcast %46 : vector<1x4xf32> to vector<8x4xf32>
    %48 = vector.extract_strided_slice %0 {offsets = [0, 0], sizes = [8, 1], strides = [1, 1]} : vector<8x8xf32> to vector<8x1xf32>
    %49 = vector.broadcast %48 : vector<8x1xf32> to vector<8x1024xf32>
    %50 = arith.mulf %49, %5 : vector<8x1024xf32>
    %51 = arith.addf %50, %8 : vector<8x1024xf32>
    %cst = arith.constant 0.000000e+00 : f32
    %52 = vector.broadcast %cst : f32 to vector<8x256xf32>
    %53 = vector.extract_strided_slice %51 {offsets = [0, 0], sizes = [8, 256], strides = [1, 1]} : vector<8x1024xf32> to vector<8x256xf32>
    %54 = arith.negf %53 : vector<8x256xf32>
    %55 = math.exp %54 : vector<8x256xf32>
    %cst_15 = arith.constant 1.000000e+00 : f32
    %56 = vector.broadcast %cst_15 : f32 to vector<8x256xf32>
    %57 = arith.addf %56, %55 : vector<8x256xf32>
    %58 = arith.divf %56, %57 : vector<8x256xf32>
    %59 = vector.extract_strided_slice %51 {offsets = [0, 256], sizes = [8, 256], strides = [1, 1]} : vector<8x1024xf32> to vector<8x256xf32>
    %60 = arith.negf %59 : vector<8x256xf32>
    %61 = math.exp %60 : vector<8x256xf32>
    %cst_16 = arith.constant 1.000000e+00 : f32
    %62 = vector.broadcast %cst_16 : f32 to vector<8x256xf32>
    %63 = arith.addf %62, %61 : vector<8x256xf32>
    %64 = arith.divf %62, %63 : vector<8x256xf32>
    %65 = vector.extract_strided_slice %51 {offsets = [0, 512], sizes = [8, 256], strides = [1, 1]} : vector<8x1024xf32> to vector<8x256xf32>
    %66 = math.tanh %65 : vector<8x256xf32>
    %67 = vector.extract_strided_slice %51 {offsets = [0, 768], sizes = [8, 256], strides = [1, 1]} : vector<8x1024xf32> to vector<8x256xf32>
    %68 = arith.negf %67 : vector<8x256xf32>
    %69 = math.exp %68 : vector<8x256xf32>
    %cst_17 = arith.constant 1.000000e+00 : f32
    %70 = vector.broadcast %cst_17 : f32 to vector<8x256xf32>
    %71 = arith.addf %70, %69 : vector<8x256xf32>
    %72 = arith.divf %70, %71 : vector<8x256xf32>
    %73 = arith.mulf %64, %52 : vector<8x256xf32>
    %74 = arith.mulf %58, %66 : vector<8x256xf32>
    %75 = arith.addf %73, %74 : vector<8x256xf32>
    %76 = math.tanh %75 : vector<8x256xf32>
    %77 = arith.mulf %72, %76 : vector<8x256xf32>
    %78 = vector.broadcast %48 : vector<8x1xf32> to vector<8x4xf32>
    %79 = arith.mulf %78, %14 : vector<8x4xf32>
    %80 = arith.addf %79, %38 : vector<8x4xf32>
    %81 = arith.negf %80 : vector<8x4xf32>
    %82 = math.exp %81 : vector<8x4xf32>
    %cst_18 = arith.constant 1.000000e+00 : f32
    %83 = vector.broadcast %cst_18 : f32 to vector<8x4xf32>
    %84 = arith.addf %83, %82 : vector<8x4xf32>
    %85 = arith.divf %83, %84 : vector<8x4xf32>
    %86 = vector.broadcast %48 : vector<8x1xf32> to vector<8x4xf32>
    %87 = arith.mulf %86, %20 : vector<8x4xf32>
    %88 = arith.addf %87, %44 : vector<8x4xf32>
    %89 = math.tanh %88 : vector<8x4xf32>
    %90 = vector.broadcast %48 : vector<8x1xf32> to vector<8x4xf32>
    %91 = arith.mulf %90, %23 : vector<8x4xf32>
    %92 = arith.addf %91, %47 : vector<8x4xf32>
    %93 = arith.negf %92 : vector<8x4xf32>
    %94 = math.exp %93 : vector<8x4xf32>
    %cst_19 = arith.constant 1.000000e+00 : f32
    %95 = vector.broadcast %cst_19 : f32 to vector<8x4xf32>
    %96 = arith.addf %95, %94 : vector<8x4xf32>
    %97 = arith.divf %95, %96 : vector<8x4xf32>
    %98 = arith.mulf %85, %89 : vector<8x4xf32>
    %99 = math.tanh %98 : vector<8x4xf32>
    %100 = arith.mulf %97, %99 : vector<8x4xf32>
    %101 = vector.extract_strided_slice %100 {offsets = [0, 0], sizes = [8, 1], strides = [1, 1]} : vector<8x4xf32> to vector<8x1xf32>
    %c0_20 = arith.constant 0 : index
    %c0_21 = arith.constant 0 : index
    %c0_22 = arith.constant 0 : index
    %102 = vector.load %arg13[%c0_20, %c0_21, %c0_22] : memref<4x8x8xf32, #tpu.memory_space<vmem>>, vector<1x8x1xf32>
    %103 = vector.shape_cast %102 : vector<1x8x1xf32> to vector<8x1xf32>
    %104 = vector.shape_cast %101 : vector<8x1xf32> to vector<1x8x1xf32>
    tpu.vector_store %arg13[%c0_20, %c0_21, %c0_22], %104 {strides = array<i32>} : memref<4x8x8xf32, #tpu.memory_space<vmem>>, vector<1x8x1xf32>,
    %105 = vector.extract_strided_slice %100 {offsets = [0, 1], sizes = [8, 1], strides = [1, 1]} : vector<8x4xf32> to vector<8x1xf32>
    %c1 = arith.constant 1 : index
    %c0_23 = arith.constant 0 : index
    %c0_24 = arith.constant 0 : index
    %106 = vector.load %arg13[%c1, %c0_23, %c0_24] : memref<4x8x8xf32, #tpu.memory_space<vmem>>, vector<1x8x1xf32>
    %107 = vector.shape_cast %106 : vector<1x8x1xf32> to vector<8x1xf32>
    %108 = vector.shape_cast %105 : vector<8x1xf32> to vector<1x8x1xf32>
    tpu.vector_store %arg13[%c1, %c0_23, %c0_24], %108 {strides = array<i32>} : memref<4x8x8xf32, #tpu.memory_space<vmem>>, vector<1x8x1xf32>,
    %109 = vector.extract_strided_slice %100 {offsets = [0, 2], sizes = [8, 1], strides = [1, 1]} : vector<8x4xf32> to vector<8x1xf32>
    %c2 = arith.constant 2 : index
    %c0_25 = arith.constant 0 : index
    %c0_26 = arith.constant 0 : index
    %110 = vector.load %arg13[%c2, %c0_25, %c0_26] : memref<4x8x8xf32, #tpu.memory_space<vmem>>, vector<1x8x1xf32>
    %111 = vector.shape_cast %110 : vector<1x8x1xf32> to vector<8x1xf32>
    %112 = vector.shape_cast %109 : vector<8x1xf32> to vector<1x8x1xf32>
    tpu.vector_store %arg13[%c2, %c0_25, %c0_26], %112 {strides = array<i32>} : memref<4x8x8xf32, #tpu.memory_space<vmem>>, vector<1x8x1xf32>,
    %113 = vector.extract_strided_slice %100 {offsets = [0, 3], sizes = [8, 1], strides = [1, 1]} : vector<8x4xf32> to vector<8x1xf32>
    %c3 = arith.constant 3 : index
    %c0_27 = arith.constant 0 : index
    %c0_28 = arith.constant 0 : index
    %114 = vector.load %arg13[%c3, %c0_27, %c0_28] : memref<4x8x8xf32, #tpu.memory_space<vmem>>, vector<1x8x1xf32>
    %115 = vector.shape_cast %114 : vector<1x8x1xf32> to vector<8x1xf32>
    %116 = vector.shape_cast %113 : vector<8x1xf32> to vector<1x8x1xf32>
    tpu.vector_store %arg13[%c3, %c0_27, %c0_28], %116 {strides = array<i32>} : memref<4x8x8xf32, #tpu.memory_space<vmem>>, vector<1x8x1xf32>,
    %117 = vector.extract_strided_slice %0 {offsets = [0, 1], sizes = [8, 1], strides = [1, 1]} : vector<8x8xf32> to vector<8x1xf32>
    %118 = vector.broadcast %117 : vector<8x1xf32> to vector<8x1024xf32>
    %119 = arith.mulf %118, %5 : vector<8x1024xf32>
    %120 = arith.truncf %77 : vector<8x256xf32> to vector<8x256xbf16>
    %cst_29 = arith.constant dense<0.000000e+00> : vector<8x1024xf32>
    %121 = tpu.matmul %120, %1, %cst_29 {dimension_numbers = #tpu.dot_dimension_numbers<[1], [0], [0], [1], [0, 0, 1, 1], [], []>} : vector<8x256xbf16>, vector<256x1024xbf16>, vector<8x1024xf32> -> vector<8x1024xf32>
    %122 = arith.addf %119, %121 : vector<8x1024xf32>
    %123 = arith.addf %122, %8 : vector<8x1024xf32>
    %124 = vector.extract_strided_slice %123 {offsets = [0, 0], sizes = [8, 256], strides = [1, 1]} : vector<8x1024xf32> to vector<8x256xf32>
    %125 = arith.negf %124 : vector<8x256xf32>
    %126 = math.exp %125 : vector<8x256xf32>
    %cst_30 = arith.constant 1.000000e+00 : f32
    %127 = vector.broadcast %cst_30 : f32 to vector<8x256xf32>
    %128 = arith.addf %127, %126 : vector<8x256xf32>
    %129 = arith.divf %127, %128 : vector<8x256xf32>
    %130 = vector.extract_strided_slice %123 {offsets = [0, 256], sizes = [8, 256], strides = [1, 1]} : vector<8x1024xf32> to vector<8x256xf32>
    %131 = arith.negf %130 : vector<8x256xf32>
    %132 = math.exp %131 : vector<8x256xf32>
    %cst_31 = arith.constant 1.000000e+00 : f32
    %133 = vector.broadcast %cst_31 : f32 to vector<8x256xf32>
    %134 = arith.addf %133, %132 : vector<8x256xf32>
    %135 = arith.divf %133, %134 : vector<8x256xf32>
    %136 = vector.extract_strided_slice %123 {offsets = [0, 512], sizes = [8, 256], strides = [1, 1]} : vector<8x1024xf32> to vector<8x256xf32>
    %137 = math.tanh %136 : vector<8x256xf32>
    %138 = vector.extract_strided_slice %123 {offsets = [0, 768], sizes = [8, 256], strides = [1, 1]} : vector<8x1024xf32> to vector<8x256xf32>
    %139 = arith.negf %138 : vector<8x256xf32>
    %140 = math.exp %139 : vector<8x256xf32>
    %cst_32 = arith.constant 1.000000e+00 : f32
    %141 = vector.broadcast %cst_32 : f32 to vector<8x256xf32>
    %142 = arith.addf %141, %140 : vector<8x256xf32>
    %143 = arith.divf %141, %142 : vector<8x256xf32>
    %144 = arith.mulf %135, %75 : vector<8x256xf32>
    %145 = arith.mulf %129, %137 : vector<8x256xf32>
    %146 = arith.addf %144, %145 : vector<8x256xf32>
    %147 = math.tanh %146 : vector<8x256xf32>
    %148 = arith.mulf %143, %147 : vector<8x256xf32>
    %149 = vector.broadcast %117 : vector<8x1xf32> to vector<8x4xf32>
    %150 = arith.mulf %149, %14 : vector<8x4xf32>
    %151 = arith.mulf %100, %26 : vector<8x4xf32>
    %152 = arith.addf %150, %151 : vector<8x4xf32>
    %153 = arith.addf %152, %38 : vector<8x4xf32>
    %154 = arith.negf %153 : vector<8x4xf32>
    %155 = math.exp %154 : vector<8x4xf32>
    %cst_33 = arith.constant 1.000000e+00 : f32
    %156 = vector.broadcast %cst_33 : f32 to vector<8x4xf32>
    %157 = arith.addf %156, %155 : vector<8x4xf32>
    %158 = arith.divf %156, %157 : vector<8x4xf32>
    %159 = vector.broadcast %117 : vector<8x1xf32> to vector<8x4xf32>
    %160 = arith.mulf %159, %17 : vector<8x4xf32>
    %161 = arith.mulf %100, %29 : vector<8x4xf32>
    %162 = arith.addf %160, %161 : vector<8x4xf32>
    %163 = arith.addf %162, %41 : vector<8x4xf32>
    %164 = arith.negf %163 : vector<8x4xf32>
    %165 = math.exp %164 : vector<8x4xf32>
    %cst_34 = arith.constant 1.000000e+00 : f32
    %166 = vector.broadcast %cst_34 : f32 to vector<8x4xf32>
    %167 = arith.addf %166, %165 : vector<8x4xf32>
    %168 = arith.divf %166, %167 : vector<8x4xf32>
    %169 = vector.broadcast %117 : vector<8x1xf32> to vector<8x4xf32>
    %170 = arith.mulf %169, %20 : vector<8x4xf32>
    %171 = arith.mulf %100, %32 : vector<8x4xf32>
    %172 = arith.addf %170, %171 : vector<8x4xf32>
    %173 = arith.addf %172, %44 : vector<8x4xf32>
    %174 = math.tanh %173 : vector<8x4xf32>
    %175 = vector.broadcast %117 : vector<8x1xf32> to vector<8x4xf32>
    %176 = arith.mulf %175, %23 : vector<8x4xf32>
    %177 = arith.mulf %100, %35 : vector<8x4xf32>
    %178 = arith.addf %176, %177 : vector<8x4xf32>
    %179 = arith.addf %178, %47 : vector<8x4xf32>
    %180 = arith.negf %179 : vector<8x4xf32>
    %181 = math.exp %180 : vector<8x4xf32>
    %cst_35 = arith.constant 1.000000e+00 : f32
    %182 = vector.broadcast %cst_35 : f32 to vector<8x4xf32>
    %183 = arith.addf %182, %181 : vector<8x4xf32>
    %184 = arith.divf %182, %183 : vector<8x4xf32>
    %185 = arith.mulf %168, %98 : vector<8x4xf32>
    %186 = arith.mulf %158, %174 : vector<8x4xf32>
    %187 = arith.addf %185, %186 : vector<8x4xf32>
    %188 = math.tanh %187 : vector<8x4xf32>
    %189 = arith.mulf %184, %188 : vector<8x4xf32>
    %190 = vector.extract_strided_slice %189 {offsets = [0, 0], sizes = [8, 1], strides = [1, 1]} : vector<8x4xf32> to vector<8x1xf32>
    %c0_36 = arith.constant 0 : index
    %c0_37 = arith.constant 0 : index
    %c1_38 = arith.constant 1 : index
    %191 = vector.load %arg13[%c0_36, %c0_37, %c1_38] : memref<4x8x8xf32, #tpu.memory_space<vmem>>, vector<1x8x1xf32>
    %192 = vector.shape_cast %191 : vector<1x8x1xf32> to vector<8x1xf32>
    %193 = vector.shape_cast %190 : vector<8x1xf32> to vector<1x8x1xf32>
    tpu.vector_store %arg13[%c0_36, %c0_37, %c1_38], %193 {strides = array<i32>} : memref<4x8x8xf32, #tpu.memory_space<vmem>>, vector<1x8x1xf32>,
    %194 = vector.extract_strided_slice %189 {offsets = [0, 1], sizes = [8, 1], strides = [1, 1]} : vector<8x4xf32> to vector<8x1xf32>
    %c1_39 = arith.constant 1 : index
    %c0_40 = arith.constant 0 : index
    %c1_41 = arith.constant 1 : index
    %195 = vector.load %arg13[%c1_39, %c0_40, %c1_41] : memref<4x8x8xf32, #tpu.memory_space<vmem>>, vector<1x8x1xf32>
    %196 = vector.shape_cast %195 : vector<1x8x1xf32> to vector<8x1xf32>
    %197 = vector.shape_cast %194 : vector<8x1xf32> to vector<1x8x1xf32>
    tpu.vector_store %arg13[%c1_39, %c0_40, %c1_41], %197 {strides = array<i32>} : memref<4x8x8xf32, #tpu.memory_space<vmem>>, vector<1x8x1xf32>,
    %198 = vector.extract_strided_slice %189 {offsets = [0, 2], sizes = [8, 1], strides = [1, 1]} : vector<8x4xf32> to vector<8x1xf32>
    %c2_42 = arith.constant 2 : index
    %c0_43 = arith.constant 0 : index
    %c1_44 = arith.constant 1 : index
    %199 = vector.load %arg13[%c2_42, %c0_43, %c1_44] : memref<4x8x8xf32, #tpu.memory_space<vmem>>, vector<1x8x1xf32>
    %200 = vector.shape_cast %199 : vector<1x8x1xf32> to vector<8x1xf32>
    %201 = vector.shape_cast %198 : vector<8x1xf32> to vector<1x8x1xf32>
    tpu.vector_store %arg13[%c2_42, %c0_43, %c1_44], %201 {strides = array<i32>} : memref<4x8x8xf32, #tpu.memory_space<vmem>>, vector<1x8x1xf32>,
    %202 = vector.extract_strided_slice %189 {offsets = [0, 3], sizes = [8, 1], strides = [1, 1]} : vector<8x4xf32> to vector<8x1xf32>
    %c3_45 = arith.constant 3 : index
    %c0_46 = arith.constant 0 : index
    %c1_47 = arith.constant 1 : index
    %203 = vector.load %arg13[%c3_45, %c0_46, %c1_47] : memref<4x8x8xf32, #tpu.memory_space<vmem>>, vector<1x8x1xf32>
    %204 = vector.shape_cast %203 : vector<1x8x1xf32> to vector<8x1xf32>
    %205 = vector.shape_cast %202 : vector<8x1xf32> to vector<1x8x1xf32>
    tpu.vector_store %arg13[%c3_45, %c0_46, %c1_47], %205 {strides = array<i32>} : memref<4x8x8xf32, #tpu.memory_space<vmem>>, vector<1x8x1xf32>,
    %206 = vector.extract_strided_slice %0 {offsets = [0, 2], sizes = [8, 1], strides = [1, 1]} : vector<8x8xf32> to vector<8x1xf32>
    %207 = vector.broadcast %206 : vector<8x1xf32> to vector<8x1024xf32>
    %208 = arith.mulf %207, %5 : vector<8x1024xf32>
    %209 = arith.truncf %148 : vector<8x256xf32> to vector<8x256xbf16>
    %cst_48 = arith.constant dense<0.000000e+00> : vector<8x1024xf32>
    %210 = tpu.matmul %209, %1, %cst_48 {dimension_numbers = #tpu.dot_dimension_numbers<[1], [0], [0], [1], [0, 0, 1, 1], [], []>} : vector<8x256xbf16>, vector<256x1024xbf16>, vector<8x1024xf32> -> vector<8x1024xf32>
    %211 = arith.addf %208, %210 : vector<8x1024xf32>
    %212 = arith.addf %211, %8 : vector<8x1024xf32>
    %213 = vector.extract_strided_slice %212 {offsets = [0, 0], sizes = [8, 256], strides = [1, 1]} : vector<8x1024xf32> to vector<8x256xf32>
    %214 = arith.negf %213 : vector<8x256xf32>
    %215 = math.exp %214 : vector<8x256xf32>
    %cst_49 = arith.constant 1.000000e+00 : f32
    %216 = vector.broadcast %cst_49 : f32 to vector<8x256xf32>
    %217 = arith.addf %216, %215 : vector<8x256xf32>
    %218 = arith.divf %216, %217 : vector<8x256xf32>
    %219 = vector.extract_strided_slice %212 {offsets = [0, 256], sizes = [8, 256], strides = [1, 1]} : vector<8x1024xf32> to vector<8x256xf32>
    %220 = arith.negf %219 : vector<8x256xf32>
    %221 = math.exp %220 : vector<8x256xf32>
    %cst_50 = arith.constant 1.000000e+00 : f32
    %222 = vector.broadcast %cst_50 : f32 to vector<8x256xf32>
    %223 = arith.addf %222, %221 : vector<8x256xf32>
    %224 = arith.divf %222, %223 : vector<8x256xf32>
    %225 = vector.extract_strided_slice %212 {offsets = [0, 512], sizes = [8, 256], strides = [1, 1]} : vector<8x1024xf32> to vector<8x256xf32>
    %226 = math.tanh %225 : vector<8x256xf32>
    %227 = vector.extract_strided_slice %212 {offsets = [0, 768], sizes = [8, 256], strides = [1, 1]} : vector<8x1024xf32> to vector<8x256xf32>
    %228 = arith.negf %227 : vector<8x256xf32>
    %229 = math.exp %228 : vector<8x256xf32>
    %cst_51 = arith.constant 1.000000e+00 : f32
    %230 = vector.broadcast %cst_51 : f32 to vector<8x256xf32>
    %231 = arith.addf %230, %229 : vector<8x256xf32>
    %232 = arith.divf %230, %231 : vector<8x256xf32>
    %233 = arith.mulf %224, %146 : vector<8x256xf32>
    %234 = arith.mulf %218, %226 : vector<8x256xf32>
    %235 = arith.addf %233, %234 : vector<8x256xf32>
    %236 = math.tanh %235 : vector<8x256xf32>
    %237 = arith.mulf %232, %236 : vector<8x256xf32>
    %238 = vector.broadcast %206 : vector<8x1xf32> to vector<8x4xf32>
    %239 = arith.mulf %238, %14 : vector<8x4xf32>
    %240 = arith.mulf %189, %26 : vector<8x4xf32>
    %241 = arith.addf %239, %240 : vector<8x4xf32>
    %242 = arith.addf %241, %38 : vector<8x4xf32>
    %243 = arith.negf %242 : vector<8x4xf32>
    %244 = math.exp %243 : vector<8x4xf32>
    %cst_52 = arith.constant 1.000000e+00 : f32
    %245 = vector.broadcast %cst_52 : f32 to vector<8x4xf32>
    %246 = arith.addf %245, %244 : vector<8x4xf32>
    %247 = arith.divf %245, %246 : vector<8x4xf32>
    %248 = vector.broadcast %206 : vector<8x1xf32> to vector<8x4xf32>
    %249 = arith.mulf %248, %17 : vector<8x4xf32>
    %250 = arith.mulf %189, %29 : vector<8x4xf32>
    %251 = arith.addf %249, %250 : vector<8x4xf32>
    %252 = arith.addf %251, %41 : vector<8x4xf32>
    %253 = arith.negf %252 : vector<8x4xf32>
    %254 = math.exp %253 : vector<8x4xf32>
    %cst_53 = arith.constant 1.000000e+00 : f32
    %255 = vector.broadcast %cst_53 : f32 to vector<8x4xf32>
    %256 = arith.addf %255, %254 : vector<8x4xf32>
    %257 = arith.divf %255, %256 : vector<8x4xf32>
    %258 = vector.broadcast %206 : vector<8x1xf32> to vector<8x4xf32>
    %259 = arith.mulf %258, %20 : vector<8x4xf32>
    %260 = arith.mulf %189, %32 : vector<8x4xf32>
    %261 = arith.addf %259, %260 : vector<8x4xf32>
    %262 = arith.addf %261, %44 : vector<8x4xf32>
    %263 = math.tanh %262 : vector<8x4xf32>
    %264 = vector.broadcast %206 : vector<8x1xf32> to vector<8x4xf32>
    %265 = arith.mulf %264, %23 : vector<8x4xf32>
    %266 = arith.mulf %189, %35 : vector<8x4xf32>
    %267 = arith.addf %265, %266 : vector<8x4xf32>
    %268 = arith.addf %267, %47 : vector<8x4xf32>
    %269 = arith.negf %268 : vector<8x4xf32>
    %270 = math.exp %269 : vector<8x4xf32>
    %cst_54 = arith.constant 1.000000e+00 : f32
    %271 = vector.broadcast %cst_54 : f32 to vector<8x4xf32>
    %272 = arith.addf %271, %270 : vector<8x4xf32>
    %273 = arith.divf %271, %272 : vector<8x4xf32>
    %274 = arith.mulf %257, %187 : vector<8x4xf32>
    %275 = arith.mulf %247, %263 : vector<8x4xf32>
    %276 = arith.addf %274, %275 : vector<8x4xf32>
    %277 = math.tanh %276 : vector<8x4xf32>
    %278 = arith.mulf %273, %277 : vector<8x4xf32>
    %279 = vector.extract_strided_slice %278 {offsets = [0, 0], sizes = [8, 1], strides = [1, 1]} : vector<8x4xf32> to vector<8x1xf32>
    %c0_55 = arith.constant 0 : index
    %c0_56 = arith.constant 0 : index
    %c2_57 = arith.constant 2 : index
    %280 = vector.load %arg13[%c0_55, %c0_56, %c2_57] : memref<4x8x8xf32, #tpu.memory_space<vmem>>, vector<1x8x1xf32>
    %281 = vector.shape_cast %280 : vector<1x8x1xf32> to vector<8x1xf32>
    %282 = vector.shape_cast %279 : vector<8x1xf32> to vector<1x8x1xf32>
    tpu.vector_store %arg13[%c0_55, %c0_56, %c2_57], %282 {strides = array<i32>} : memref<4x8x8xf32, #tpu.memory_space<vmem>>, vector<1x8x1xf32>,
    %283 = vector.extract_strided_slice %278 {offsets = [0, 1], sizes = [8, 1], strides = [1, 1]} : vector<8x4xf32> to vector<8x1xf32>
    %c1_58 = arith.constant 1 : index
    %c0_59 = arith.constant 0 : index
    %c2_60 = arith.constant 2 : index
    %284 = vector.load %arg13[%c1_58, %c0_59, %c2_60] : memref<4x8x8xf32, #tpu.memory_space<vmem>>, vector<1x8x1xf32>
    %285 = vector.shape_cast %284 : vector<1x8x1xf32> to vector<8x1xf32>
    %286 = vector.shape_cast %283 : vector<8x1xf32> to vector<1x8x1xf32>
    tpu.vector_store %arg13[%c1_58, %c0_59, %c2_60], %286 {strides = array<i32>} : memref<4x8x8xf32, #tpu.memory_space<vmem>>, vector<1x8x1xf32>,
    %287 = vector.extract_strided_slice %278 {offsets = [0, 2], sizes = [8, 1], strides = [1, 1]} : vector<8x4xf32> to vector<8x1xf32>
    %c2_61 = arith.constant 2 : index
    %c0_62 = arith.constant 0 : index
    %c2_63 = arith.constant 2 : index
    %288 = vector.load %arg13[%c2_61, %c0_62, %c2_63] : memref<4x8x8xf32, #tpu.memory_space<vmem>>, vector<1x8x1xf32>
    %289 = vector.shape_cast %288 : vector<1x8x1xf32> to vector<8x1xf32>
    %290 = vector.shape_cast %287 : vector<8x1xf32> to vector<1x8x1xf32>
    tpu.vector_store %arg13[%c2_61, %c0_62, %c2_63], %290 {strides = array<i32>} : memref<4x8x8xf32, #tpu.memory_space<vmem>>, vector<1x8x1xf32>,
    %291 = vector.extract_strided_slice %278 {offsets = [0, 3], sizes = [8, 1], strides = [1, 1]} : vector<8x4xf32> to vector<8x1xf32>
    %c3_64 = arith.constant 3 : index
    %c0_65 = arith.constant 0 : index
    %c2_66 = arith.constant 2 : index
    %292 = vector.load %arg13[%c3_64, %c0_65, %c2_66] : memref<4x8x8xf32, #tpu.memory_space<vmem>>, vector<1x8x1xf32>
    %293 = vector.shape_cast %292 : vector<1x8x1xf32> to vector<8x1xf32>
    %294 = vector.shape_cast %291 : vector<8x1xf32> to vector<1x8x1xf32>
    tpu.vector_store %arg13[%c3_64, %c0_65, %c2_66], %294 {strides = array<i32>} : memref<4x8x8xf32, #tpu.memory_space<vmem>>, vector<1x8x1xf32>,
    %295 = vector.extract_strided_slice %0 {offsets = [0, 3], sizes = [8, 1], strides = [1, 1]} : vector<8x8xf32> to vector<8x1xf32>
    %296 = vector.broadcast %295 : vector<8x1xf32> to vector<8x1024xf32>
    %297 = arith.mulf %296, %5 : vector<8x1024xf32>
    %298 = arith.truncf %237 : vector<8x256xf32> to vector<8x256xbf16>
    %cst_67 = arith.constant dense<0.000000e+00> : vector<8x1024xf32>
    %299 = tpu.matmul %298, %1, %cst_67 {dimension_numbers = #tpu.dot_dimension_numbers<[1], [0], [0], [1], [0, 0, 1, 1], [], []>} : vector<8x256xbf16>, vector<256x1024xbf16>, vector<8x1024xf32> -> vector<8x1024xf32>
    %300 = arith.addf %297, %299 : vector<8x1024xf32>
    %301 = arith.addf %300, %8 : vector<8x1024xf32>
    %302 = vector.extract_strided_slice %301 {offsets = [0, 0], sizes = [8, 256], strides = [1, 1]} : vector<8x1024xf32> to vector<8x256xf32>
    %303 = arith.negf %302 : vector<8x256xf32>
    %304 = math.exp %303 : vector<8x256xf32>
    %cst_68 = arith.constant 1.000000e+00 : f32
    %305 = vector.broadcast %cst_68 : f32 to vector<8x256xf32>
    %306 = arith.addf %305, %304 : vector<8x256xf32>
    %307 = arith.divf %305, %306 : vector<8x256xf32>
    %308 = vector.extract_strided_slice %301 {offsets = [0, 256], sizes = [8, 256], strides = [1, 1]} : vector<8x1024xf32> to vector<8x256xf32>
    %309 = arith.negf %308 : vector<8x256xf32>
    %310 = math.exp %309 : vector<8x256xf32>
    %cst_69 = arith.constant 1.000000e+00 : f32
    %311 = vector.broadcast %cst_69 : f32 to vector<8x256xf32>
    %312 = arith.addf %311, %310 : vector<8x256xf32>
    %313 = arith.divf %311, %312 : vector<8x256xf32>
    %314 = vector.extract_strided_slice %301 {offsets = [0, 512], sizes = [8, 256], strides = [1, 1]} : vector<8x1024xf32> to vector<8x256xf32>
    %315 = math.tanh %314 : vector<8x256xf32>
    %316 = vector.extract_strided_slice %301 {offsets = [0, 768], sizes = [8, 256], strides = [1, 1]} : vector<8x1024xf32> to vector<8x256xf32>
    %317 = arith.negf %316 : vector<8x256xf32>
    %318 = math.exp %317 : vector<8x256xf32>
    %cst_70 = arith.constant 1.000000e+00 : f32
    %319 = vector.broadcast %cst_70 : f32 to vector<8x256xf32>
    %320 = arith.addf %319, %318 : vector<8x256xf32>
    %321 = arith.divf %319, %320 : vector<8x256xf32>
    %322 = arith.mulf %313, %235 : vector<8x256xf32>
    %323 = arith.mulf %307, %315 : vector<8x256xf32>
    %324 = arith.addf %322, %323 : vector<8x256xf32>
    %325 = math.tanh %324 : vector<8x256xf32>
    %326 = arith.mulf %321, %325 : vector<8x256xf32>
    %327 = vector.broadcast %295 : vector<8x1xf32> to vector<8x4xf32>
    %328 = arith.mulf %327, %14 : vector<8x4xf32>
    %329 = arith.mulf %278, %26 : vector<8x4xf32>
    %330 = arith.addf %328, %329 : vector<8x4xf32>
    %331 = arith.addf %330, %38 : vector<8x4xf32>
    %332 = arith.negf %331 : vector<8x4xf32>
    %333 = math.exp %332 : vector<8x4xf32>
    %cst_71 = arith.constant 1.000000e+00 : f32
    %334 = vector.broadcast %cst_71 : f32 to vector<8x4xf32>
    %335 = arith.addf %334, %333 : vector<8x4xf32>
    %336 = arith.divf %334, %335 : vector<8x4xf32>
    %337 = vector.broadcast %295 : vector<8x1xf32> to vector<8x4xf32>
    %338 = arith.mulf %337, %17 : vector<8x4xf32>
    %339 = arith.mulf %278, %29 : vector<8x4xf32>
    %340 = arith.addf %338, %339 : vector<8x4xf32>
    %341 = arith.addf %340, %41 : vector<8x4xf32>
    %342 = arith.negf %341 : vector<8x4xf32>
    %343 = math.exp %342 : vector<8x4xf32>
    %cst_72 = arith.constant 1.000000e+00 : f32
    %344 = vector.broadcast %cst_72 : f32 to vector<8x4xf32>
    %345 = arith.addf %344, %343 : vector<8x4xf32>
    %346 = arith.divf %344, %345 : vector<8x4xf32>
    %347 = vector.broadcast %295 : vector<8x1xf32> to vector<8x4xf32>
    %348 = arith.mulf %347, %20 : vector<8x4xf32>
    %349 = arith.mulf %278, %32 : vector<8x4xf32>
    %350 = arith.addf %348, %349 : vector<8x4xf32>
    %351 = arith.addf %350, %44 : vector<8x4xf32>
    %352 = math.tanh %351 : vector<8x4xf32>
    %353 = vector.broadcast %295 : vector<8x1xf32> to vector<8x4xf32>
    %354 = arith.mulf %353, %23 : vector<8x4xf32>
    %355 = arith.mulf %278, %35 : vector<8x4xf32>
    %356 = arith.addf %354, %355 : vector<8x4xf32>
    %357 = arith.addf %356, %47 : vector<8x4xf32>
    %358 = arith.negf %357 : vector<8x4xf32>
    %359 = math.exp %358 : vector<8x4xf32>
    %cst_73 = arith.constant 1.000000e+00 : f32
    %360 = vector.broadcast %cst_73 : f32 to vector<8x4xf32>
    %361 = arith.addf %360, %359 : vector<8x4xf32>
    %362 = arith.divf %360, %361 : vector<8x4xf32>
    %363 = arith.mulf %346, %276 : vector<8x4xf32>
    %364 = arith.mulf %336, %352 : vector<8x4xf32>
    %365 = arith.addf %363, %364 : vector<8x4xf32>
    %366 = math.tanh %365 : vector<8x4xf32>
    %367 = arith.mulf %362, %366 : vector<8x4xf32>
    %368 = vector.extract_strided_slice %367 {offsets = [0, 0], sizes = [8, 1], strides = [1, 1]} : vector<8x4xf32> to vector<8x1xf32>
    %c0_74 = arith.constant 0 : index
    %c0_75 = arith.constant 0 : index
    %c3_76 = arith.constant 3 : index
    %369 = vector.load %arg13[%c0_74, %c0_75, %c3_76] : memref<4x8x8xf32, #tpu.memory_space<vmem>>, vector<1x8x1xf32>
    %370 = vector.shape_cast %369 : vector<1x8x1xf32> to vector<8x1xf32>
    %371 = vector.shape_cast %368 : vector<8x1xf32> to vector<1x8x1xf32>
    tpu.vector_store %arg13[%c0_74, %c0_75, %c3_76], %371 {strides = array<i32>} : memref<4x8x8xf32, #tpu.memory_space<vmem>>, vector<1x8x1xf32>,
    %372 = vector.extract_strided_slice %367 {offsets = [0, 1], sizes = [8, 1], strides = [1, 1]} : vector<8x4xf32> to vector<8x1xf32>
    %c1_77 = arith.constant 1 : index
    %c0_78 = arith.constant 0 : index
    %c3_79 = arith.constant 3 : index
    %373 = vector.load %arg13[%c1_77, %c0_78, %c3_79] : memref<4x8x8xf32, #tpu.memory_space<vmem>>, vector<1x8x1xf32>
    %374 = vector.shape_cast %373 : vector<1x8x1xf32> to vector<8x1xf32>
    %375 = vector.shape_cast %372 : vector<8x1xf32> to vector<1x8x1xf32>
    tpu.vector_store %arg13[%c1_77, %c0_78, %c3_79], %375 {strides = array<i32>} : memref<4x8x8xf32, #tpu.memory_space<vmem>>, vector<1x8x1xf32>,
    %376 = vector.extract_strided_slice %367 {offsets = [0, 2], sizes = [8, 1], strides = [1, 1]} : vector<8x4xf32> to vector<8x1xf32>
    %c2_80 = arith.constant 2 : index
    %c0_81 = arith.constant 0 : index
    %c3_82 = arith.constant 3 : index
    %377 = vector.load %arg13[%c2_80, %c0_81, %c3_82] : memref<4x8x8xf32, #tpu.memory_space<vmem>>, vector<1x8x1xf32>
    %378 = vector.shape_cast %377 : vector<1x8x1xf32> to vector<8x1xf32>
    %379 = vector.shape_cast %376 : vector<8x1xf32> to vector<1x8x1xf32>
    tpu.vector_store %arg13[%c2_80, %c0_81, %c3_82], %379 {strides = array<i32>} : memref<4x8x8xf32, #tpu.memory_space<vmem>>, vector<1x8x1xf32>,
    %380 = vector.extract_strided_slice %367 {offsets = [0, 3], sizes = [8, 1], strides = [1, 1]} : vector<8x4xf32> to vector<8x1xf32>
    %c3_83 = arith.constant 3 : index
    %c0_84 = arith.constant 0 : index
    %c3_85 = arith.constant 3 : index
    %381 = vector.load %arg13[%c3_83, %c0_84, %c3_85] : memref<4x8x8xf32, #tpu.memory_space<vmem>>, vector<1x8x1xf32>
    %382 = vector.shape_cast %381 : vector<1x8x1xf32> to vector<8x1xf32>
    %383 = vector.shape_cast %380 : vector<8x1xf32> to vector<1x8x1xf32>
    tpu.vector_store %arg13[%c3_83, %c0_84, %c3_85], %383 {strides = array<i32>} : memref<4x8x8xf32, #tpu.memory_space<vmem>>, vector<1x8x1xf32>,
    %384 = vector.extract_strided_slice %0 {offsets = [0, 4], sizes = [8, 1], strides = [1, 1]} : vector<8x8xf32> to vector<8x1xf32>
    %385 = vector.broadcast %384 : vector<8x1xf32> to vector<8x1024xf32>
    %386 = arith.mulf %385, %5 : vector<8x1024xf32>
    %387 = arith.truncf %326 : vector<8x256xf32> to vector<8x256xbf16>
    %cst_86 = arith.constant dense<0.000000e+00> : vector<8x1024xf32>
    %388 = tpu.matmul %387, %1, %cst_86 {dimension_numbers = #tpu.dot_dimension_numbers<[1], [0], [0], [1], [0, 0, 1, 1], [], []>} : vector<8x256xbf16>, vector<256x1024xbf16>, vector<8x1024xf32> -> vector<8x1024xf32>
    %389 = arith.addf %386, %388 : vector<8x1024xf32>
    %390 = arith.addf %389, %8 : vector<8x1024xf32>
    %391 = vector.extract_strided_slice %390 {offsets = [0, 0], sizes = [8, 256], strides = [1, 1]} : vector<8x1024xf32> to vector<8x256xf32>
    %392 = arith.negf %391 : vector<8x256xf32>
    %393 = math.exp %392 : vector<8x256xf32>
    %cst_87 = arith.constant 1.000000e+00 : f32
    %394 = vector.broadcast %cst_87 : f32 to vector<8x256xf32>
    %395 = arith.addf %394, %393 : vector<8x256xf32>
    %396 = arith.divf %394, %395 : vector<8x256xf32>
    %397 = vector.extract_strided_slice %390 {offsets = [0, 256], sizes = [8, 256], strides = [1, 1]} : vector<8x1024xf32> to vector<8x256xf32>
    %398 = arith.negf %397 : vector<8x256xf32>
    %399 = math.exp %398 : vector<8x256xf32>
    %cst_88 = arith.constant 1.000000e+00 : f32
    %400 = vector.broadcast %cst_88 : f32 to vector<8x256xf32>
    %401 = arith.addf %400, %399 : vector<8x256xf32>
    %402 = arith.divf %400, %401 : vector<8x256xf32>
    %403 = vector.extract_strided_slice %390 {offsets = [0, 512], sizes = [8, 256], strides = [1, 1]} : vector<8x1024xf32> to vector<8x256xf32>
    %404 = math.tanh %403 : vector<8x256xf32>
    %405 = vector.extract_strided_slice %390 {offsets = [0, 768], sizes = [8, 256], strides = [1, 1]} : vector<8x1024xf32> to vector<8x256xf32>
    %406 = arith.negf %405 : vector<8x256xf32>
    %407 = math.exp %406 : vector<8x256xf32>
    %cst_89 = arith.constant 1.000000e+00 : f32
    %408 = vector.broadcast %cst_89 : f32 to vector<8x256xf32>
    %409 = arith.addf %408, %407 : vector<8x256xf32>
    %410 = arith.divf %408, %409 : vector<8x256xf32>
    %411 = arith.mulf %402, %324 : vector<8x256xf32>
    %412 = arith.mulf %396, %404 : vector<8x256xf32>
    %413 = arith.addf %411, %412 : vector<8x256xf32>
    %414 = math.tanh %413 : vector<8x256xf32>
    %415 = arith.mulf %410, %414 : vector<8x256xf32>
    %416 = vector.broadcast %384 : vector<8x1xf32> to vector<8x4xf32>
    %417 = arith.mulf %416, %14 : vector<8x4xf32>
    %418 = arith.mulf %367, %26 : vector<8x4xf32>
    %419 = arith.addf %417, %418 : vector<8x4xf32>
    %420 = arith.addf %419, %38 : vector<8x4xf32>
    %421 = arith.negf %420 : vector<8x4xf32>
    %422 = math.exp %421 : vector<8x4xf32>
    %cst_90 = arith.constant 1.000000e+00 : f32
    %423 = vector.broadcast %cst_90 : f32 to vector<8x4xf32>
    %424 = arith.addf %423, %422 : vector<8x4xf32>
    %425 = arith.divf %423, %424 : vector<8x4xf32>
    %426 = vector.broadcast %384 : vector<8x1xf32> to vector<8x4xf32>
    %427 = arith.mulf %426, %17 : vector<8x4xf32>
    %428 = arith.mulf %367, %29 : vector<8x4xf32>
    %429 = arith.addf %427, %428 : vector<8x4xf32>
    %430 = arith.addf %429, %41 : vector<8x4xf32>
    %431 = arith.negf %430 : vector<8x4xf32>
    %432 = math.exp %431 : vector<8x4xf32>
    %cst_91 = arith.constant 1.000000e+00 : f32
    %433 = vector.broadcast %cst_91 : f32 to vector<8x4xf32>
    %434 = arith.addf %433, %432 : vector<8x4xf32>
    %435 = arith.divf %433, %434 : vector<8x4xf32>
    %436 = vector.broadcast %384 : vector<8x1xf32> to vector<8x4xf32>
    %437 = arith.mulf %436, %20 : vector<8x4xf32>
    %438 = arith.mulf %367, %32 : vector<8x4xf32>
    %439 = arith.addf %437, %438 : vector<8x4xf32>
    %440 = arith.addf %439, %44 : vector<8x4xf32>
    %441 = math.tanh %440 : vector<8x4xf32>
    %442 = vector.broadcast %384 : vector<8x1xf32> to vector<8x4xf32>
    %443 = arith.mulf %442, %23 : vector<8x4xf32>
    %444 = arith.mulf %367, %35 : vector<8x4xf32>
    %445 = arith.addf %443, %444 : vector<8x4xf32>
    %446 = arith.addf %445, %47 : vector<8x4xf32>
    %447 = arith.negf %446 : vector<8x4xf32>
    %448 = math.exp %447 : vector<8x4xf32>
    %cst_92 = arith.constant 1.000000e+00 : f32
    %449 = vector.broadcast %cst_92 : f32 to vector<8x4xf32>
    %450 = arith.addf %449, %448 : vector<8x4xf32>
    %451 = arith.divf %449, %450 : vector<8x4xf32>
    %452 = arith.mulf %435, %365 : vector<8x4xf32>
    %453 = arith.mulf %425, %441 : vector<8x4xf32>
    %454 = arith.addf %452, %453 : vector<8x4xf32>
    %455 = math.tanh %454 : vector<8x4xf32>
    %456 = arith.mulf %451, %455 : vector<8x4xf32>
    %457 = vector.extract_strided_slice %456 {offsets = [0, 0], sizes = [8, 1], strides = [1, 1]} : vector<8x4xf32> to vector<8x1xf32>
    %c0_93 = arith.constant 0 : index
    %c0_94 = arith.constant 0 : index
    %c4 = arith.constant 4 : index
    %458 = vector.load %arg13[%c0_93, %c0_94, %c4] : memref<4x8x8xf32, #tpu.memory_space<vmem>>, vector<1x8x1xf32>
    %459 = vector.shape_cast %458 : vector<1x8x1xf32> to vector<8x1xf32>
    %460 = vector.shape_cast %457 : vector<8x1xf32> to vector<1x8x1xf32>
    tpu.vector_store %arg13[%c0_93, %c0_94, %c4], %460 {strides = array<i32>} : memref<4x8x8xf32, #tpu.memory_space<vmem>>, vector<1x8x1xf32>,
    %461 = vector.extract_strided_slice %456 {offsets = [0, 1], sizes = [8, 1], strides = [1, 1]} : vector<8x4xf32> to vector<8x1xf32>
    %c1_95 = arith.constant 1 : index
    %c0_96 = arith.constant 0 : index
    %c4_97 = arith.constant 4 : index
    %462 = vector.load %arg13[%c1_95, %c0_96, %c4_97] : memref<4x8x8xf32, #tpu.memory_space<vmem>>, vector<1x8x1xf32>
    %463 = vector.shape_cast %462 : vector<1x8x1xf32> to vector<8x1xf32>
    %464 = vector.shape_cast %461 : vector<8x1xf32> to vector<1x8x1xf32>
    tpu.vector_store %arg13[%c1_95, %c0_96, %c4_97], %464 {strides = array<i32>} : memref<4x8x8xf32, #tpu.memory_space<vmem>>, vector<1x8x1xf32>,
    %465 = vector.extract_strided_slice %456 {offsets = [0, 2], sizes = [8, 1], strides = [1, 1]} : vector<8x4xf32> to vector<8x1xf32>
    %c2_98 = arith.constant 2 : index
    %c0_99 = arith.constant 0 : index
    %c4_100 = arith.constant 4 : index
    %466 = vector.load %arg13[%c2_98, %c0_99, %c4_100] : memref<4x8x8xf32, #tpu.memory_space<vmem>>, vector<1x8x1xf32>
    %467 = vector.shape_cast %466 : vector<1x8x1xf32> to vector<8x1xf32>
    %468 = vector.shape_cast %465 : vector<8x1xf32> to vector<1x8x1xf32>
    tpu.vector_store %arg13[%c2_98, %c0_99, %c4_100], %468 {strides = array<i32>} : memref<4x8x8xf32, #tpu.memory_space<vmem>>, vector<1x8x1xf32>,
    %469 = vector.extract_strided_slice %456 {offsets = [0, 3], sizes = [8, 1], strides = [1, 1]} : vector<8x4xf32> to vector<8x1xf32>
    %c3_101 = arith.constant 3 : index
    %c0_102 = arith.constant 0 : index
    %c4_103 = arith.constant 4 : index
    %470 = vector.load %arg13[%c3_101, %c0_102, %c4_103] : memref<4x8x8xf32, #tpu.memory_space<vmem>>, vector<1x8x1xf32>
    %471 = vector.shape_cast %470 : vector<1x8x1xf32> to vector<8x1xf32>
    %472 = vector.shape_cast %469 : vector<8x1xf32> to vector<1x8x1xf32>
    tpu.vector_store %arg13[%c3_101, %c0_102, %c4_103], %472 {strides = array<i32>} : memref<4x8x8xf32, #tpu.memory_space<vmem>>, vector<1x8x1xf32>,
    %473 = vector.extract_strided_slice %0 {offsets = [0, 5], sizes = [8, 1], strides = [1, 1]} : vector<8x8xf32> to vector<8x1xf32>
    %474 = vector.broadcast %473 : vector<8x1xf32> to vector<8x1024xf32>
    %475 = arith.mulf %474, %5 : vector<8x1024xf32>
    %476 = arith.truncf %415 : vector<8x256xf32> to vector<8x256xbf16>
    %cst_104 = arith.constant dense<0.000000e+00> : vector<8x1024xf32>
    %477 = tpu.matmul %476, %1, %cst_104 {dimension_numbers = #tpu.dot_dimension_numbers<[1], [0], [0], [1], [0, 0, 1, 1], [], []>} : vector<8x256xbf16>, vector<256x1024xbf16>, vector<8x1024xf32> -> vector<8x1024xf32>
    %478 = arith.addf %475, %477 : vector<8x1024xf32>
    %479 = arith.addf %478, %8 : vector<8x1024xf32>
    %480 = vector.extract_strided_slice %479 {offsets = [0, 0], sizes = [8, 256], strides = [1, 1]} : vector<8x1024xf32> to vector<8x256xf32>
    %481 = arith.negf %480 : vector<8x256xf32>
    %482 = math.exp %481 : vector<8x256xf32>
    %cst_105 = arith.constant 1.000000e+00 : f32
    %483 = vector.broadcast %cst_105 : f32 to vector<8x256xf32>
    %484 = arith.addf %483, %482 : vector<8x256xf32>
    %485 = arith.divf %483, %484 : vector<8x256xf32>
    %486 = vector.extract_strided_slice %479 {offsets = [0, 256], sizes = [8, 256], strides = [1, 1]} : vector<8x1024xf32> to vector<8x256xf32>
    %487 = arith.negf %486 : vector<8x256xf32>
    %488 = math.exp %487 : vector<8x256xf32>
    %cst_106 = arith.constant 1.000000e+00 : f32
    %489 = vector.broadcast %cst_106 : f32 to vector<8x256xf32>
    %490 = arith.addf %489, %488 : vector<8x256xf32>
    %491 = arith.divf %489, %490 : vector<8x256xf32>
    %492 = vector.extract_strided_slice %479 {offsets = [0, 512], sizes = [8, 256], strides = [1, 1]} : vector<8x1024xf32> to vector<8x256xf32>
    %493 = math.tanh %492 : vector<8x256xf32>
    %494 = vector.extract_strided_slice %479 {offsets = [0, 768], sizes = [8, 256], strides = [1, 1]} : vector<8x1024xf32> to vector<8x256xf32>
    %495 = arith.negf %494 : vector<8x256xf32>
    %496 = math.exp %495 : vector<8x256xf32>
    %cst_107 = arith.constant 1.000000e+00 : f32
    %497 = vector.broadcast %cst_107 : f32 to vector<8x256xf32>
    %498 = arith.addf %497, %496 : vector<8x256xf32>
    %499 = arith.divf %497, %498 : vector<8x256xf32>
    %500 = arith.mulf %491, %413 : vector<8x256xf32>
    %501 = arith.mulf %485, %493 : vector<8x256xf32>
    %502 = arith.addf %500, %501 : vector<8x256xf32>
    %503 = math.tanh %502 : vector<8x256xf32>
    %504 = arith.mulf %499, %503 : vector<8x256xf32>
    %505 = vector.broadcast %473 : vector<8x1xf32> to vector<8x4xf32>
    %506 = arith.mulf %505, %14 : vector<8x4xf32>
    %507 = arith.mulf %456, %26 : vector<8x4xf32>
    %508 = arith.addf %506, %507 : vector<8x4xf32>
    %509 = arith.addf %508, %38 : vector<8x4xf32>
    %510 = arith.negf %509 : vector<8x4xf32>
    %511 = math.exp %510 : vector<8x4xf32>
    %cst_108 = arith.constant 1.000000e+00 : f32
    %512 = vector.broadcast %cst_108 : f32 to vector<8x4xf32>
    %513 = arith.addf %512, %511 : vector<8x4xf32>
    %514 = arith.divf %512, %513 : vector<8x4xf32>
    %515 = vector.broadcast %473 : vector<8x1xf32> to vector<8x4xf32>
    %516 = arith.mulf %515, %17 : vector<8x4xf32>
    %517 = arith.mulf %456, %29 : vector<8x4xf32>
    %518 = arith.addf %516, %517 : vector<8x4xf32>
    %519 = arith.addf %518, %41 : vector<8x4xf32>
    %520 = arith.negf %519 : vector<8x4xf32>
    %521 = math.exp %520 : vector<8x4xf32>
    %cst_109 = arith.constant 1.000000e+00 : f32
    %522 = vector.broadcast %cst_109 : f32 to vector<8x4xf32>
    %523 = arith.addf %522, %521 : vector<8x4xf32>
    %524 = arith.divf %522, %523 : vector<8x4xf32>
    %525 = vector.broadcast %473 : vector<8x1xf32> to vector<8x4xf32>
    %526 = arith.mulf %525, %20 : vector<8x4xf32>
    %527 = arith.mulf %456, %32 : vector<8x4xf32>
    %528 = arith.addf %526, %527 : vector<8x4xf32>
    %529 = arith.addf %528, %44 : vector<8x4xf32>
    %530 = math.tanh %529 : vector<8x4xf32>
    %531 = vector.broadcast %473 : vector<8x1xf32> to vector<8x4xf32>
    %532 = arith.mulf %531, %23 : vector<8x4xf32>
    %533 = arith.mulf %456, %35 : vector<8x4xf32>
    %534 = arith.addf %532, %533 : vector<8x4xf32>
    %535 = arith.addf %534, %47 : vector<8x4xf32>
    %536 = arith.negf %535 : vector<8x4xf32>
    %537 = math.exp %536 : vector<8x4xf32>
    %cst_110 = arith.constant 1.000000e+00 : f32
    %538 = vector.broadcast %cst_110 : f32 to vector<8x4xf32>
    %539 = arith.addf %538, %537 : vector<8x4xf32>
    %540 = arith.divf %538, %539 : vector<8x4xf32>
    %541 = arith.mulf %524, %454 : vector<8x4xf32>
    %542 = arith.mulf %514, %530 : vector<8x4xf32>
    %543 = arith.addf %541, %542 : vector<8x4xf32>
    %544 = math.tanh %543 : vector<8x4xf32>
    %545 = arith.mulf %540, %544 : vector<8x4xf32>
    %546 = vector.extract_strided_slice %545 {offsets = [0, 0], sizes = [8, 1], strides = [1, 1]} : vector<8x4xf32> to vector<8x1xf32>
    %c0_111 = arith.constant 0 : index
    %c0_112 = arith.constant 0 : index
    %c5 = arith.constant 5 : index
    %547 = vector.load %arg13[%c0_111, %c0_112, %c5] : memref<4x8x8xf32, #tpu.memory_space<vmem>>, vector<1x8x1xf32>
    %548 = vector.shape_cast %547 : vector<1x8x1xf32> to vector<8x1xf32>
    %549 = vector.shape_cast %546 : vector<8x1xf32> to vector<1x8x1xf32>
    tpu.vector_store %arg13[%c0_111, %c0_112, %c5], %549 {strides = array<i32>} : memref<4x8x8xf32, #tpu.memory_space<vmem>>, vector<1x8x1xf32>,
    %550 = vector.extract_strided_slice %545 {offsets = [0, 1], sizes = [8, 1], strides = [1, 1]} : vector<8x4xf32> to vector<8x1xf32>
    %c1_113 = arith.constant 1 : index
    %c0_114 = arith.constant 0 : index
    %c5_115 = arith.constant 5 : index
    %551 = vector.load %arg13[%c1_113, %c0_114, %c5_115] : memref<4x8x8xf32, #tpu.memory_space<vmem>>, vector<1x8x1xf32>
    %552 = vector.shape_cast %551 : vector<1x8x1xf32> to vector<8x1xf32>
    %553 = vector.shape_cast %550 : vector<8x1xf32> to vector<1x8x1xf32>
    tpu.vector_store %arg13[%c1_113, %c0_114, %c5_115], %553 {strides = array<i32>} : memref<4x8x8xf32, #tpu.memory_space<vmem>>, vector<1x8x1xf32>,
    %554 = vector.extract_strided_slice %545 {offsets = [0, 2], sizes = [8, 1], strides = [1, 1]} : vector<8x4xf32> to vector<8x1xf32>
    %c2_116 = arith.constant 2 : index
    %c0_117 = arith.constant 0 : index
    %c5_118 = arith.constant 5 : index
    %555 = vector.load %arg13[%c2_116, %c0_117, %c5_118] : memref<4x8x8xf32, #tpu.memory_space<vmem>>, vector<1x8x1xf32>
    %556 = vector.shape_cast %555 : vector<1x8x1xf32> to vector<8x1xf32>
    %557 = vector.shape_cast %554 : vector<8x1xf32> to vector<1x8x1xf32>
    tpu.vector_store %arg13[%c2_116, %c0_117, %c5_118], %557 {strides = array<i32>} : memref<4x8x8xf32, #tpu.memory_space<vmem>>, vector<1x8x1xf32>,
    %558 = vector.extract_strided_slice %545 {offsets = [0, 3], sizes = [8, 1], strides = [1, 1]} : vector<8x4xf32> to vector<8x1xf32>
    %c3_119 = arith.constant 3 : index
    %c0_120 = arith.constant 0 : index
    %c5_121 = arith.constant 5 : index
    %559 = vector.load %arg13[%c3_119, %c0_120, %c5_121] : memref<4x8x8xf32, #tpu.memory_space<vmem>>, vector<1x8x1xf32>
    %560 = vector.shape_cast %559 : vector<1x8x1xf32> to vector<8x1xf32>
    %561 = vector.shape_cast %558 : vector<8x1xf32> to vector<1x8x1xf32>
    tpu.vector_store %arg13[%c3_119, %c0_120, %c5_121], %561 {strides = array<i32>} : memref<4x8x8xf32, #tpu.memory_space<vmem>>, vector<1x8x1xf32>,
    %562 = vector.extract_strided_slice %0 {offsets = [0, 6], sizes = [8, 1], strides = [1, 1]} : vector<8x8xf32> to vector<8x1xf32>
    %563 = vector.broadcast %562 : vector<8x1xf32> to vector<8x1024xf32>
    %564 = arith.mulf %563, %5 : vector<8x1024xf32>
    %565 = arith.truncf %504 : vector<8x256xf32> to vector<8x256xbf16>
    %cst_122 = arith.constant dense<0.000000e+00> : vector<8x1024xf32>
    %566 = tpu.matmul %565, %1, %cst_122 {dimension_numbers = #tpu.dot_dimension_numbers<[1], [0], [0], [1], [0, 0, 1, 1], [], []>} : vector<8x256xbf16>, vector<256x1024xbf16>, vector<8x1024xf32> -> vector<8x1024xf32>
    %567 = arith.addf %564, %566 : vector<8x1024xf32>
    %568 = arith.addf %567, %8 : vector<8x1024xf32>
    %569 = vector.extract_strided_slice %568 {offsets = [0, 0], sizes = [8, 256], strides = [1, 1]} : vector<8x1024xf32> to vector<8x256xf32>
    %570 = arith.negf %569 : vector<8x256xf32>
    %571 = math.exp %570 : vector<8x256xf32>
    %cst_123 = arith.constant 1.000000e+00 : f32
    %572 = vector.broadcast %cst_123 : f32 to vector<8x256xf32>
    %573 = arith.addf %572, %571 : vector<8x256xf32>
    %574 = arith.divf %572, %573 : vector<8x256xf32>
    %575 = vector.extract_strided_slice %568 {offsets = [0, 256], sizes = [8, 256], strides = [1, 1]} : vector<8x1024xf32> to vector<8x256xf32>
    %576 = arith.negf %575 : vector<8x256xf32>
    %577 = math.exp %576 : vector<8x256xf32>
    %cst_124 = arith.constant 1.000000e+00 : f32
    %578 = vector.broadcast %cst_124 : f32 to vector<8x256xf32>
    %579 = arith.addf %578, %577 : vector<8x256xf32>
    %580 = arith.divf %578, %579 : vector<8x256xf32>
    %581 = vector.extract_strided_slice %568 {offsets = [0, 512], sizes = [8, 256], strides = [1, 1]} : vector<8x1024xf32> to vector<8x256xf32>
    %582 = math.tanh %581 : vector<8x256xf32>
    %583 = vector.extract_strided_slice %568 {offsets = [0, 768], sizes = [8, 256], strides = [1, 1]} : vector<8x1024xf32> to vector<8x256xf32>
    %584 = arith.negf %583 : vector<8x256xf32>
    %585 = math.exp %584 : vector<8x256xf32>
    %cst_125 = arith.constant 1.000000e+00 : f32
    %586 = vector.broadcast %cst_125 : f32 to vector<8x256xf32>
    %587 = arith.addf %586, %585 : vector<8x256xf32>
    %588 = arith.divf %586, %587 : vector<8x256xf32>
    %589 = arith.mulf %580, %502 : vector<8x256xf32>
    %590 = arith.mulf %574, %582 : vector<8x256xf32>
    %591 = arith.addf %589, %590 : vector<8x256xf32>
    %592 = math.tanh %591 : vector<8x256xf32>
    %593 = arith.mulf %588, %592 : vector<8x256xf32>
    %594 = vector.broadcast %562 : vector<8x1xf32> to vector<8x4xf32>
    %595 = arith.mulf %594, %14 : vector<8x4xf32>
    %596 = arith.mulf %545, %26 : vector<8x4xf32>
    %597 = arith.addf %595, %596 : vector<8x4xf32>
    %598 = arith.addf %597, %38 : vector<8x4xf32>
    %599 = arith.negf %598 : vector<8x4xf32>
    %600 = math.exp %599 : vector<8x4xf32>
    %cst_126 = arith.constant 1.000000e+00 : f32
    %601 = vector.broadcast %cst_126 : f32 to vector<8x4xf32>
    %602 = arith.addf %601, %600 : vector<8x4xf32>
    %603 = arith.divf %601, %602 : vector<8x4xf32>
    %604 = vector.broadcast %562 : vector<8x1xf32> to vector<8x4xf32>
    %605 = arith.mulf %604, %17 : vector<8x4xf32>
    %606 = arith.mulf %545, %29 : vector<8x4xf32>
    %607 = arith.addf %605, %606 : vector<8x4xf32>
    %608 = arith.addf %607, %41 : vector<8x4xf32>
    %609 = arith.negf %608 : vector<8x4xf32>
    %610 = math.exp %609 : vector<8x4xf32>
    %cst_127 = arith.constant 1.000000e+00 : f32
    %611 = vector.broadcast %cst_127 : f32 to vector<8x4xf32>
    %612 = arith.addf %611, %610 : vector<8x4xf32>
    %613 = arith.divf %611, %612 : vector<8x4xf32>
    %614 = vector.broadcast %562 : vector<8x1xf32> to vector<8x4xf32>
    %615 = arith.mulf %614, %20 : vector<8x4xf32>
    %616 = arith.mulf %545, %32 : vector<8x4xf32>
    %617 = arith.addf %615, %616 : vector<8x4xf32>
    %618 = arith.addf %617, %44 : vector<8x4xf32>
    %619 = math.tanh %618 : vector<8x4xf32>
    %620 = vector.broadcast %562 : vector<8x1xf32> to vector<8x4xf32>
    %621 = arith.mulf %620, %23 : vector<8x4xf32>
    %622 = arith.mulf %545, %35 : vector<8x4xf32>
    %623 = arith.addf %621, %622 : vector<8x4xf32>
    %624 = arith.addf %623, %47 : vector<8x4xf32>
    %625 = arith.negf %624 : vector<8x4xf32>
    %626 = math.exp %625 : vector<8x4xf32>
    %cst_128 = arith.constant 1.000000e+00 : f32
    %627 = vector.broadcast %cst_128 : f32 to vector<8x4xf32>
    %628 = arith.addf %627, %626 : vector<8x4xf32>
    %629 = arith.divf %627, %628 : vector<8x4xf32>
    %630 = arith.mulf %613, %543 : vector<8x4xf32>
    %631 = arith.mulf %603, %619 : vector<8x4xf32>
    %632 = arith.addf %630, %631 : vector<8x4xf32>
    %633 = math.tanh %632 : vector<8x4xf32>
    %634 = arith.mulf %629, %633 : vector<8x4xf32>
    %635 = vector.extract_strided_slice %634 {offsets = [0, 0], sizes = [8, 1], strides = [1, 1]} : vector<8x4xf32> to vector<8x1xf32>
    %c0_129 = arith.constant 0 : index
    %c0_130 = arith.constant 0 : index
    %c6 = arith.constant 6 : index
    %636 = vector.load %arg13[%c0_129, %c0_130, %c6] : memref<4x8x8xf32, #tpu.memory_space<vmem>>, vector<1x8x1xf32>
    %637 = vector.shape_cast %636 : vector<1x8x1xf32> to vector<8x1xf32>
    %638 = vector.shape_cast %635 : vector<8x1xf32> to vector<1x8x1xf32>
    tpu.vector_store %arg13[%c0_129, %c0_130, %c6], %638 {strides = array<i32>} : memref<4x8x8xf32, #tpu.memory_space<vmem>>, vector<1x8x1xf32>,
    %639 = vector.extract_strided_slice %634 {offsets = [0, 1], sizes = [8, 1], strides = [1, 1]} : vector<8x4xf32> to vector<8x1xf32>
    %c1_131 = arith.constant 1 : index
    %c0_132 = arith.constant 0 : index
    %c6_133 = arith.constant 6 : index
    %640 = vector.load %arg13[%c1_131, %c0_132, %c6_133] : memref<4x8x8xf32, #tpu.memory_space<vmem>>, vector<1x8x1xf32>
    %641 = vector.shape_cast %640 : vector<1x8x1xf32> to vector<8x1xf32>
    %642 = vector.shape_cast %639 : vector<8x1xf32> to vector<1x8x1xf32>
    tpu.vector_store %arg13[%c1_131, %c0_132, %c6_133], %642 {strides = array<i32>} : memref<4x8x8xf32, #tpu.memory_space<vmem>>, vector<1x8x1xf32>,
    %643 = vector.extract_strided_slice %634 {offsets = [0, 2], sizes = [8, 1], strides = [1, 1]} : vector<8x4xf32> to vector<8x1xf32>
    %c2_134 = arith.constant 2 : index
    %c0_135 = arith.constant 0 : index
    %c6_136 = arith.constant 6 : index
    %644 = vector.load %arg13[%c2_134, %c0_135, %c6_136] : memref<4x8x8xf32, #tpu.memory_space<vmem>>, vector<1x8x1xf32>
    %645 = vector.shape_cast %644 : vector<1x8x1xf32> to vector<8x1xf32>
    %646 = vector.shape_cast %643 : vector<8x1xf32> to vector<1x8x1xf32>
    tpu.vector_store %arg13[%c2_134, %c0_135, %c6_136], %646 {strides = array<i32>} : memref<4x8x8xf32, #tpu.memory_space<vmem>>, vector<1x8x1xf32>,
    %647 = vector.extract_strided_slice %634 {offsets = [0, 3], sizes = [8, 1], strides = [1, 1]} : vector<8x4xf32> to vector<8x1xf32>
    %c3_137 = arith.constant 3 : index
    %c0_138 = arith.constant 0 : index
    %c6_139 = arith.constant 6 : index
    %648 = vector.load %arg13[%c3_137, %c0_138, %c6_139] : memref<4x8x8xf32, #tpu.memory_space<vmem>>, vector<1x8x1xf32>
    %649 = vector.shape_cast %648 : vector<1x8x1xf32> to vector<8x1xf32>
    %650 = vector.shape_cast %647 : vector<8x1xf32> to vector<1x8x1xf32>
    tpu.vector_store %arg13[%c3_137, %c0_138, %c6_139], %650 {strides = array<i32>} : memref<4x8x8xf32, #tpu.memory_space<vmem>>, vector<1x8x1xf32>,
    %651 = vector.extract_strided_slice %0 {offsets = [0, 7], sizes = [8, 1], strides = [1, 1]} : vector<8x8xf32> to vector<8x1xf32>
    %652 = vector.broadcast %651 : vector<8x1xf32> to vector<8x1024xf32>
    %653 = arith.mulf %652, %5 : vector<8x1024xf32>
    %654 = arith.truncf %593 : vector<8x256xf32> to vector<8x256xbf16>
    %cst_140 = arith.constant dense<0.000000e+00> : vector<8x1024xf32>
    %655 = tpu.matmul %654, %1, %cst_140 {dimension_numbers = #tpu.dot_dimension_numbers<[1], [0], [0], [1], [0, 0, 1, 1], [], []>} : vector<8x256xbf16>, vector<256x1024xbf16>, vector<8x1024xf32> -> vector<8x1024xf32>
    %656 = arith.addf %653, %655 : vector<8x1024xf32>
    %657 = arith.addf %656, %8 : vector<8x1024xf32>
    %658 = vector.extract_strided_slice %657 {offsets = [0, 0], sizes = [8, 256], strides = [1, 1]} : vector<8x1024xf32> to vector<8x256xf32>
    %659 = arith.negf %658 : vector<8x256xf32>
    %660 = math.exp %659 : vector<8x256xf32>
    %cst_141 = arith.constant 1.000000e+00 : f32
    %661 = vector.broadcast %cst_141 : f32 to vector<8x256xf32>
    %662 = arith.addf %661, %660 : vector<8x256xf32>
    %663 = arith.divf %661, %662 : vector<8x256xf32>
    %664 = vector.extract_strided_slice %657 {offsets = [0, 256], sizes = [8, 256], strides = [1, 1]} : vector<8x1024xf32> to vector<8x256xf32>
    %665 = arith.negf %664 : vector<8x256xf32>
    %666 = math.exp %665 : vector<8x256xf32>
    %cst_142 = arith.constant 1.000000e+00 : f32
    %667 = vector.broadcast %cst_142 : f32 to vector<8x256xf32>
    %668 = arith.addf %667, %666 : vector<8x256xf32>
    %669 = arith.divf %667, %668 : vector<8x256xf32>
    %670 = vector.extract_strided_slice %657 {offsets = [0, 512], sizes = [8, 256], strides = [1, 1]} : vector<8x1024xf32> to vector<8x256xf32>
    %671 = math.tanh %670 : vector<8x256xf32>
    %672 = vector.extract_strided_slice %657 {offsets = [0, 768], sizes = [8, 256], strides = [1, 1]} : vector<8x1024xf32> to vector<8x256xf32>
    %673 = arith.negf %672 : vector<8x256xf32>
    %674 = math.exp %673 : vector<8x256xf32>
    %cst_143 = arith.constant 1.000000e+00 : f32
    %675 = vector.broadcast %cst_143 : f32 to vector<8x256xf32>
    %676 = arith.addf %675, %674 : vector<8x256xf32>
    %677 = arith.divf %675, %676 : vector<8x256xf32>
    %678 = arith.mulf %669, %591 : vector<8x256xf32>
    %679 = arith.mulf %663, %671 : vector<8x256xf32>
    %680 = arith.addf %678, %679 : vector<8x256xf32>
    %681 = math.tanh %680 : vector<8x256xf32>
    %682 = arith.mulf %677, %681 : vector<8x256xf32>
    %683 = vector.broadcast %651 : vector<8x1xf32> to vector<8x4xf32>
    %684 = arith.mulf %683, %14 : vector<8x4xf32>
    %685 = arith.mulf %634, %26 : vector<8x4xf32>
    %686 = arith.addf %684, %685 : vector<8x4xf32>
    %687 = arith.addf %686, %38 : vector<8x4xf32>
    %688 = arith.negf %687 : vector<8x4xf32>
    %689 = math.exp %688 : vector<8x4xf32>
    %cst_144 = arith.constant 1.000000e+00 : f32
    %690 = vector.broadcast %cst_144 : f32 to vector<8x4xf32>
    %691 = arith.addf %690, %689 : vector<8x4xf32>
    %692 = arith.divf %690, %691 : vector<8x4xf32>
    %693 = vector.broadcast %651 : vector<8x1xf32> to vector<8x4xf32>
    %694 = arith.mulf %693, %17 : vector<8x4xf32>
    %695 = arith.mulf %634, %29 : vector<8x4xf32>
    %696 = arith.addf %694, %695 : vector<8x4xf32>
    %697 = arith.addf %696, %41 : vector<8x4xf32>
    %698 = arith.negf %697 : vector<8x4xf32>
    %699 = math.exp %698 : vector<8x4xf32>
    %cst_145 = arith.constant 1.000000e+00 : f32
    %700 = vector.broadcast %cst_145 : f32 to vector<8x4xf32>
    %701 = arith.addf %700, %699 : vector<8x4xf32>
    %702 = arith.divf %700, %701 : vector<8x4xf32>
    %703 = vector.broadcast %651 : vector<8x1xf32> to vector<8x4xf32>
    %704 = arith.mulf %703, %20 : vector<8x4xf32>
    %705 = arith.mulf %634, %32 : vector<8x4xf32>
    %706 = arith.addf %704, %705 : vector<8x4xf32>
    %707 = arith.addf %706, %44 : vector<8x4xf32>
    %708 = math.tanh %707 : vector<8x4xf32>
    %709 = vector.broadcast %651 : vector<8x1xf32> to vector<8x4xf32>
    %710 = arith.mulf %709, %23 : vector<8x4xf32>
    %711 = arith.mulf %634, %35 : vector<8x4xf32>
    %712 = arith.addf %710, %711 : vector<8x4xf32>
    %713 = arith.addf %712, %47 : vector<8x4xf32>
    %714 = arith.negf %713 : vector<8x4xf32>
    %715 = math.exp %714 : vector<8x4xf32>
    %cst_146 = arith.constant 1.000000e+00 : f32
    %716 = vector.broadcast %cst_146 : f32 to vector<8x4xf32>
    %717 = arith.addf %716, %715 : vector<8x4xf32>
    %718 = arith.divf %716, %717 : vector<8x4xf32>
    %719 = arith.mulf %702, %632 : vector<8x4xf32>
    %720 = arith.mulf %692, %708 : vector<8x4xf32>
    %721 = arith.addf %719, %720 : vector<8x4xf32>
    %722 = math.tanh %721 : vector<8x4xf32>
    %723 = arith.mulf %718, %722 : vector<8x4xf32>
    %724 = vector.extract_strided_slice %723 {offsets = [0, 0], sizes = [8, 1], strides = [1, 1]} : vector<8x4xf32> to vector<8x1xf32>
    %c0_147 = arith.constant 0 : index
    %c0_148 = arith.constant 0 : index
    %c7 = arith.constant 7 : index
    %725 = vector.load %arg13[%c0_147, %c0_148, %c7] : memref<4x8x8xf32, #tpu.memory_space<vmem>>, vector<1x8x1xf32>
    %726 = vector.shape_cast %725 : vector<1x8x1xf32> to vector<8x1xf32>
    %727 = vector.shape_cast %724 : vector<8x1xf32> to vector<1x8x1xf32>
    tpu.vector_store %arg13[%c0_147, %c0_148, %c7], %727 {strides = array<i32>} : memref<4x8x8xf32, #tpu.memory_space<vmem>>, vector<1x8x1xf32>,
    %728 = vector.extract_strided_slice %723 {offsets = [0, 1], sizes = [8, 1], strides = [1, 1]} : vector<8x4xf32> to vector<8x1xf32>
    %c1_149 = arith.constant 1 : index
    %c0_150 = arith.constant 0 : index
    %c7_151 = arith.constant 7 : index
    %729 = vector.load %arg13[%c1_149, %c0_150, %c7_151] : memref<4x8x8xf32, #tpu.memory_space<vmem>>, vector<1x8x1xf32>
    %730 = vector.shape_cast %729 : vector<1x8x1xf32> to vector<8x1xf32>
    %731 = vector.shape_cast %728 : vector<8x1xf32> to vector<1x8x1xf32>
    tpu.vector_store %arg13[%c1_149, %c0_150, %c7_151], %731 {strides = array<i32>} : memref<4x8x8xf32, #tpu.memory_space<vmem>>, vector<1x8x1xf32>,
    %732 = vector.extract_strided_slice %723 {offsets = [0, 2], sizes = [8, 1], strides = [1, 1]} : vector<8x4xf32> to vector<8x1xf32>
    %c2_152 = arith.constant 2 : index
    %c0_153 = arith.constant 0 : index
    %c7_154 = arith.constant 7 : index
    %733 = vector.load %arg13[%c2_152, %c0_153, %c7_154] : memref<4x8x8xf32, #tpu.memory_space<vmem>>, vector<1x8x1xf32>
    %734 = vector.shape_cast %733 : vector<1x8x1xf32> to vector<8x1xf32>
    %735 = vector.shape_cast %732 : vector<8x1xf32> to vector<1x8x1xf32>
    tpu.vector_store %arg13[%c2_152, %c0_153, %c7_154], %735 {strides = array<i32>} : memref<4x8x8xf32, #tpu.memory_space<vmem>>, vector<1x8x1xf32>,
    %736 = vector.extract_strided_slice %723 {offsets = [0, 3], sizes = [8, 1], strides = [1, 1]} : vector<8x4xf32> to vector<8x1xf32>
    %c3_155 = arith.constant 3 : index
    %c0_156 = arith.constant 0 : index
    %c7_157 = arith.constant 7 : index
    %737 = vector.load %arg13[%c3_155, %c0_156, %c7_157] : memref<4x8x8xf32, #tpu.memory_space<vmem>>, vector<1x8x1xf32>
    %738 = vector.shape_cast %737 : vector<1x8x1xf32> to vector<8x1xf32>
    %739 = vector.shape_cast %736 : vector<8x1xf32> to vector<1x8x1xf32>
    tpu.vector_store %arg13[%c3_155, %c0_156, %c7_157], %739 {strides = array<i32>} : memref<4x8x8xf32, #tpu.memory_space<vmem>>, vector<1x8x1xf32>,
    %cst_158 = arith.constant 0.000000e+00 : f32
    %740 = vector.broadcast %cst_158 : f32 to vector<8x8xf32>
    %741 = vector.extract_strided_slice %682 {offsets = [0, 0], sizes = [8, 32], strides = [1, 1]} : vector<8x256xf32> to vector<8x32xf32>
    %742 = vector.extract_strided_slice %682 {offsets = [0, 128], sizes = [8, 32], strides = [1, 1]} : vector<8x256xf32> to vector<8x32xf32>
    %cst_159 = arith.constant dense<0.000000e+00> : vector<8x8xf32>
    %743 = tpu.matmul %741, %742, %cst_159 {dimension_numbers = #tpu.dot_dimension_numbers<[1], [1], [0], [0], [0, 0, 1, 0], [], []>} : vector<8x32xf32>, vector<8x32xf32>, vector<8x8xf32> -> vector<8x8xf32>
    %cst_160 = arith.constant 0.176776692 : f32
    %744 = vector.broadcast %cst_160 : f32 to vector<8x8xf32>
    %745 = arith.mulf %743, %744 : vector<8x8xf32>
    %cst_161 = arith.constant 0.000000e+00 : f32
    %746 = vector.broadcast %cst_161 : f32 to vector<8x8xf32>
    %747 = arith.cmpf oge, %745, %746 : vector<8x8xf32>
    %cst_162 = arith.constant 2.000000e-01 : f32
    %748 = vector.broadcast %cst_162 : f32 to vector<8x8xf32>
    %749 = arith.mulf %748, %745 : vector<8x8xf32>
    %750 = arith.select %747, %745, %749 : vector<8x8xi1>, vector<8x8xf32>
    %751 = arith.addf %750, %2 : vector<8x8xf32>
    %cst_163 = arith.constant dense<0xFF800000> : vector<8xf32>
    %752 = vector.multi_reduction <maximumf>, %751, %cst_163 [1] : vector<8x8xf32> to vector<8xf32>
    %753 = vector.shape_cast %752 : vector<8xf32> to vector<8x1xf32>
    %754 = vector.broadcast %753 : vector<8x1xf32> to vector<8x8xf32>
    %755 = arith.subf %751, %754 : vector<8x8xf32>
    %756 = math.exp %755 : vector<8x8xf32>
    %cst_164 = arith.constant dense<0.000000e+00> : vector<8xf32>
    %757 = vector.multi_reduction <add>, %756, %cst_164 [1] : vector<8x8xf32> to vector<8xf32>
    %758 = vector.shape_cast %757 : vector<8xf32> to vector<8x1xf32>
    %759 = tpu.reciprocal %758 {approx = true} : vector<8x1xf32> -> vector<8x1xf32>
    %760 = vector.broadcast %759 : vector<8x1xf32> to vector<8x8xf32>
    %761 = arith.mulf %756, %760 : vector<8x8xf32>
    %c0_165 = arith.constant 0 : index
    %c0_166 = arith.constant 0 : index
    %c0_167 = arith.constant 0 : index
    %762 = vector.load %arg13[%c0_165, %c0_166, %c0_167] : memref<4x8x8xf32, #tpu.memory_space<vmem>>, vector<1x8x8xf32>
    %763 = vector.shape_cast %762 : vector<1x8x8xf32> to vector<8x8xf32>
    %cst_168 = arith.constant dense<0.000000e+00> : vector<8x8xf32>
    %764 = tpu.matmul %761, %763, %cst_168 {dimension_numbers = #tpu.dot_dimension_numbers<[1], [0], [0], [1], [0, 0, 1, 1], [], []>} : vector<8x8xf32>, vector<8x8xf32>, vector<8x8xf32> -> vector<8x8xf32>
    %cst_169 = arith.constant 0.000000e+00 : f32
    %765 = vector.broadcast %cst_169 : f32 to vector<8x8xf32>
    %766 = arith.cmpf oge, %764, %765 : vector<8x8xf32>
    %cst_170 = arith.constant 2.000000e-01 : f32
    %767 = vector.broadcast %cst_170 : f32 to vector<8x8xf32>
    %768 = arith.mulf %767, %764 : vector<8x8xf32>
    %769 = arith.select %766, %764, %768 : vector<8x8xi1>, vector<8x8xf32>
    %c0_171 = arith.constant 0 : index
    %c0_172 = arith.constant 0 : index
    %770 = memref.load %arg8[%c0_171, %c0_172] : memref<1x4xf32, #tpu.memory_space<smem>>
    %771 = vector.broadcast %770 : f32 to vector<8x8xf32>
    %772 = arith.mulf %769, %771 : vector<8x8xf32>
    %773 = arith.addf %740, %772 : vector<8x8xf32>
    %774 = vector.extract_strided_slice %682 {offsets = [0, 32], sizes = [8, 32], strides = [1, 1]} : vector<8x256xf32> to vector<8x32xf32>
    %775 = vector.extract_strided_slice %682 {offsets = [0, 160], sizes = [8, 32], strides = [1, 1]} : vector<8x256xf32> to vector<8x32xf32>
    %cst_173 = arith.constant dense<0.000000e+00> : vector<8x8xf32>
    %776 = tpu.matmul %774, %775, %cst_173 {dimension_numbers = #tpu.dot_dimension_numbers<[1], [1], [0], [0], [0, 0, 1, 0], [], []>} : vector<8x32xf32>, vector<8x32xf32>, vector<8x8xf32> -> vector<8x8xf32>
    %cst_174 = arith.constant 0.176776692 : f32
    %777 = vector.broadcast %cst_174 : f32 to vector<8x8xf32>
    %778 = arith.mulf %776, %777 : vector<8x8xf32>
    %cst_175 = arith.constant 0.000000e+00 : f32
    %779 = vector.broadcast %cst_175 : f32 to vector<8x8xf32>
    %780 = arith.cmpf oge, %778, %779 : vector<8x8xf32>
    %cst_176 = arith.constant 2.000000e-01 : f32
    %781 = vector.broadcast %cst_176 : f32 to vector<8x8xf32>
    %782 = arith.mulf %781, %778 : vector<8x8xf32>
    %783 = arith.select %780, %778, %782 : vector<8x8xi1>, vector<8x8xf32>
    %784 = arith.addf %783, %2 : vector<8x8xf32>
    %cst_177 = arith.constant dense<0xFF800000> : vector<8xf32>
    %785 = vector.multi_reduction <maximumf>, %784, %cst_177 [1] : vector<8x8xf32> to vector<8xf32>
    %786 = vector.shape_cast %785 : vector<8xf32> to vector<8x1xf32>
    %787 = vector.broadcast %786 : vector<8x1xf32> to vector<8x8xf32>
    %788 = arith.subf %784, %787 : vector<8x8xf32>
    %789 = math.exp %788 : vector<8x8xf32>
    %cst_178 = arith.constant dense<0.000000e+00> : vector<8xf32>
    %790 = vector.multi_reduction <add>, %789, %cst_178 [1] : vector<8x8xf32> to vector<8xf32>
    %791 = vector.shape_cast %790 : vector<8xf32> to vector<8x1xf32>
    %792 = tpu.reciprocal %791 {approx = true} : vector<8x1xf32> -> vector<8x1xf32>
    %793 = vector.broadcast %792 : vector<8x1xf32> to vector<8x8xf32>
    %794 = arith.mulf %789, %793 : vector<8x8xf32>
    %c1_179 = arith.constant 1 : index
    %c0_180 = arith.constant 0 : index
    %c0_181 = arith.constant 0 : index
    %795 = vector.load %arg13[%c1_179, %c0_180, %c0_181] : memref<4x8x8xf32, #tpu.memory_space<vmem>>, vector<1x8x8xf32>
    %796 = vector.shape_cast %795 : vector<1x8x8xf32> to vector<8x8xf32>
    %cst_182 = arith.constant dense<0.000000e+00> : vector<8x8xf32>
    %797 = tpu.matmul %794, %796, %cst_182 {dimension_numbers = #tpu.dot_dimension_numbers<[1], [0], [0], [1], [0, 0, 1, 1], [], []>} : vector<8x8xf32>, vector<8x8xf32>, vector<8x8xf32> -> vector<8x8xf32>
    %cst_183 = arith.constant 0.000000e+00 : f32
    %798 = vector.broadcast %cst_183 : f32 to vector<8x8xf32>
    %799 = arith.cmpf oge, %797, %798 : vector<8x8xf32>
    %cst_184 = arith.constant 2.000000e-01 : f32
    %800 = vector.broadcast %cst_184 : f32 to vector<8x8xf32>
    %801 = arith.mulf %800, %797 : vector<8x8xf32>
    %802 = arith.select %799, %797, %801 : vector<8x8xi1>, vector<8x8xf32>
    %c0_185 = arith.constant 0 : index
    %c1_186 = arith.constant 1 : index
    %803 = memref.load %arg8[%c0_185, %c1_186] : memref<1x4xf32, #tpu.memory_space<smem>>
    %804 = vector.broadcast %803 : f32 to vector<8x8xf32>
    %805 = arith.mulf %802, %804 : vector<8x8xf32>
    %806 = arith.addf %773, %805 : vector<8x8xf32>
    %807 = vector.extract_strided_slice %682 {offsets = [0, 64], sizes = [8, 32], strides = [1, 1]} : vector<8x256xf32> to vector<8x32xf32>
    %808 = vector.extract_strided_slice %682 {offsets = [0, 192], sizes = [8, 32], strides = [1, 1]} : vector<8x256xf32> to vector<8x32xf32>
    %cst_187 = arith.constant dense<0.000000e+00> : vector<8x8xf32>
    %809 = tpu.matmul %807, %808, %cst_187 {dimension_numbers = #tpu.dot_dimension_numbers<[1], [1], [0], [0], [0, 0, 1, 0], [], []>} : vector<8x32xf32>, vector<8x32xf32>, vector<8x8xf32> -> vector<8x8xf32>
    %cst_188 = arith.constant 0.176776692 : f32
    %810 = vector.broadcast %cst_188 : f32 to vector<8x8xf32>
    %811 = arith.mulf %809, %810 : vector<8x8xf32>
    %cst_189 = arith.constant 0.000000e+00 : f32
    %812 = vector.broadcast %cst_189 : f32 to vector<8x8xf32>
    %813 = arith.cmpf oge, %811, %812 : vector<8x8xf32>
    %cst_190 = arith.constant 2.000000e-01 : f32
    %814 = vector.broadcast %cst_190 : f32 to vector<8x8xf32>
    %815 = arith.mulf %814, %811 : vector<8x8xf32>
    %816 = arith.select %813, %811, %815 : vector<8x8xi1>, vector<8x8xf32>
    %817 = arith.addf %816, %2 : vector<8x8xf32>
    %cst_191 = arith.constant dense<0xFF800000> : vector<8xf32>
    %818 = vector.multi_reduction <maximumf>, %817, %cst_191 [1] : vector<8x8xf32> to vector<8xf32>
    %819 = vector.shape_cast %818 : vector<8xf32> to vector<8x1xf32>
    %820 = vector.broadcast %819 : vector<8x1xf32> to vector<8x8xf32>
    %821 = arith.subf %817, %820 : vector<8x8xf32>
    %822 = math.exp %821 : vector<8x8xf32>
    %cst_192 = arith.constant dense<0.000000e+00> : vector<8xf32>
    %823 = vector.multi_reduction <add>, %822, %cst_192 [1] : vector<8x8xf32> to vector<8xf32>
    %824 = vector.shape_cast %823 : vector<8xf32> to vector<8x1xf32>
    %825 = tpu.reciprocal %824 {approx = true} : vector<8x1xf32> -> vector<8x1xf32>
    %826 = vector.broadcast %825 : vector<8x1xf32> to vector<8x8xf32>
    %827 = arith.mulf %822, %826 : vector<8x8xf32>
    %c2_193 = arith.constant 2 : index
    %c0_194 = arith.constant 0 : index
    %c0_195 = arith.constant 0 : index
    %828 = vector.load %arg13[%c2_193, %c0_194, %c0_195] : memref<4x8x8xf32, #tpu.memory_space<vmem>>, vector<1x8x8xf32>
    %829 = vector.shape_cast %828 : vector<1x8x8xf32> to vector<8x8xf32>
    %cst_196 = arith.constant dense<0.000000e+00> : vector<8x8xf32>
    %830 = tpu.matmul %827, %829, %cst_196 {dimension_numbers = #tpu.dot_dimension_numbers<[1], [0], [0], [1], [0, 0, 1, 1], [], []>} : vector<8x8xf32>, vector<8x8xf32>, vector<8x8xf32> -> vector<8x8xf32>
    %cst_197 = arith.constant 0.000000e+00 : f32
    %831 = vector.broadcast %cst_197 : f32 to vector<8x8xf32>
    %832 = arith.cmpf oge, %830, %831 : vector<8x8xf32>
    %cst_198 = arith.constant 2.000000e-01 : f32
    %833 = vector.broadcast %cst_198 : f32 to vector<8x8xf32>
    %834 = arith.mulf %833, %830 : vector<8x8xf32>
    %835 = arith.select %832, %830, %834 : vector<8x8xi1>, vector<8x8xf32>
    %c0_199 = arith.constant 0 : index
    %c2_200 = arith.constant 2 : index
    %836 = memref.load %arg8[%c0_199, %c2_200] : memref<1x4xf32, #tpu.memory_space<smem>>
    %837 = vector.broadcast %836 : f32 to vector<8x8xf32>
    %838 = arith.mulf %835, %837 : vector<8x8xf32>
    %839 = arith.addf %806, %838 : vector<8x8xf32>
    %840 = vector.extract_strided_slice %682 {offsets = [0, 96], sizes = [8, 32], strides = [1, 1]} : vector<8x256xf32> to vector<8x32xf32>
    %841 = vector.extract_strided_slice %682 {offsets = [0, 224], sizes = [8, 32], strides = [1, 1]} : vector<8x256xf32> to vector<8x32xf32>
    %cst_201 = arith.constant dense<0.000000e+00> : vector<8x8xf32>
    %842 = tpu.matmul %840, %841, %cst_201 {dimension_numbers = #tpu.dot_dimension_numbers<[1], [1], [0], [0], [0, 0, 1, 0], [], []>} : vector<8x32xf32>, vector<8x32xf32>, vector<8x8xf32> -> vector<8x8xf32>
    %cst_202 = arith.constant 0.176776692 : f32
    %843 = vector.broadcast %cst_202 : f32 to vector<8x8xf32>
    %844 = arith.mulf %842, %843 : vector<8x8xf32>
    %cst_203 = arith.constant 0.000000e+00 : f32
    %845 = vector.broadcast %cst_203 : f32 to vector<8x8xf32>
    %846 = arith.cmpf oge, %844, %845 : vector<8x8xf32>
    %cst_204 = arith.constant 2.000000e-01 : f32
    %847 = vector.broadcast %cst_204 : f32 to vector<8x8xf32>
    %848 = arith.mulf %847, %844 : vector<8x8xf32>
    %849 = arith.select %846, %844, %848 : vector<8x8xi1>, vector<8x8xf32>
    %850 = arith.addf %849, %2 : vector<8x8xf32>
    %cst_205 = arith.constant dense<0xFF800000> : vector<8xf32>
    %851 = vector.multi_reduction <maximumf>, %850, %cst_205 [1] : vector<8x8xf32> to vector<8xf32>
    %852 = vector.shape_cast %851 : vector<8xf32> to vector<8x1xf32>
    %853 = vector.broadcast %852 : vector<8x1xf32> to vector<8x8xf32>
    %854 = arith.subf %850, %853 : vector<8x8xf32>
    %855 = math.exp %854 : vector<8x8xf32>
    %cst_206 = arith.constant dense<0.000000e+00> : vector<8xf32>
    %856 = vector.multi_reduction <add>, %855, %cst_206 [1] : vector<8x8xf32> to vector<8xf32>
    %857 = vector.shape_cast %856 : vector<8xf32> to vector<8x1xf32>
    %858 = tpu.reciprocal %857 {approx = true} : vector<8x1xf32> -> vector<8x1xf32>
    %859 = vector.broadcast %858 : vector<8x1xf32> to vector<8x8xf32>
    %860 = arith.mulf %855, %859 : vector<8x8xf32>
    %c3_207 = arith.constant 3 : index
    %c0_208 = arith.constant 0 : index
    %c0_209 = arith.constant 0 : index
    %861 = vector.load %arg13[%c3_207, %c0_208, %c0_209] : memref<4x8x8xf32, #tpu.memory_space<vmem>>, vector<1x8x8xf32>
    %862 = vector.shape_cast %861 : vector<1x8x8xf32> to vector<8x8xf32>
    %cst_210 = arith.constant dense<0.000000e+00> : vector<8x8xf32>
    %863 = tpu.matmul %860, %862, %cst_210 {dimension_numbers = #tpu.dot_dimension_numbers<[1], [0], [0], [1], [0, 0, 1, 1], [], []>} : vector<8x8xf32>, vector<8x8xf32>, vector<8x8xf32> -> vector<8x8xf32>
    %cst_211 = arith.constant 0.000000e+00 : f32
    %864 = vector.broadcast %cst_211 : f32 to vector<8x8xf32>
    %865 = arith.cmpf oge, %863, %864 : vector<8x8xf32>
    %cst_212 = arith.constant 2.000000e-01 : f32
    %866 = vector.broadcast %cst_212 : f32 to vector<8x8xf32>
    %867 = arith.mulf %866, %863 : vector<8x8xf32>
    %868 = arith.select %865, %863, %867 : vector<8x8xi1>, vector<8x8xf32>
    %c0_213 = arith.constant 0 : index
    %c3_214 = arith.constant 3 : index
    %869 = memref.load %arg8[%c0_213, %c3_214] : memref<1x4xf32, #tpu.memory_space<smem>>
    %870 = vector.broadcast %869 : f32 to vector<8x8xf32>
    %871 = arith.mulf %868, %870 : vector<8x8xf32>
    %872 = arith.addf %839, %871 : vector<8x8xf32>
    %c0_215 = arith.constant 0 : index
    %c0_216 = arith.constant 0 : index
    %873 = memref.load %arg9[%c0_215, %c0_216] : memref<1x1xf32, #tpu.memory_space<smem>>
    %874 = vector.broadcast %873 : f32 to vector<8x8xf32>
    %875 = arith.addf %872, %874 : vector<8x8xf32>
    %876 = arith.addf %875, %0 : vector<8x8xf32>
    %cst_217 = arith.constant 0.000000e+00 : f32
    %877 = vector.broadcast %cst_217 : f32 to vector<8x8xf32>
    %878 = arith.cmpf oge, %876, %877 : vector<8x8xf32>
    %cst_218 = arith.constant 2.000000e-01 : f32
    %879 = vector.broadcast %cst_218 : f32 to vector<8x8xf32>
    %880 = arith.mulf %879, %876 : vector<8x8xf32>
    %881 = arith.select %878, %876, %880 : vector<8x8xi1>, vector<8x8xf32>
    %c0_219 = arith.constant 0 : index
    %c0_220 = arith.constant 0 : index
    %882 = vector.load %arg10[%c0_219, %c0_220] : memref<8x128xf32, #tpu.memory_space<vmem>>, vector<8x128xf32>
    %cst_221 = arith.constant dense<0.000000e+00> : vector<8x128xf32>
    %883 = tpu.matmul %881, %882, %cst_221 {dimension_numbers = #tpu.dot_dimension_numbers<[1], [0], [0], [1], [0, 0, 1, 1], [], []>} : vector<8x8xf32>, vector<8x128xf32>, vector<8x128xf32> -> vector<8x128xf32>
    %c0_222 = arith.constant 0 : index
    %c0_223 = arith.constant 0 : index
    %884 = vector.load %arg11[%c0_222, %c0_223] : memref<1x128xf32, #tpu.memory_space<vmem>>, vector<1x128xf32>
    %885 = vector.broadcast %884 : vector<1x128xf32> to vector<8x128xf32>
    %886 = arith.addf %883, %885 : vector<8x128xf32>
    %c0_224 = arith.constant 0 : index
    %c0_225 = arith.constant 0 : index
    %887 = vector.load %arg12[%c0_224, %c0_225] : memref<8x128xf32, #tpu.memory_space<vmem>>, vector<8x128xf32>
    tpu.vector_store %arg12[%c0_224, %c0_225], %886 {strides = array<i32>} : memref<8x128xf32, #tpu.memory_space<vmem>>, vector<8x128xf32>,
    return
  }
}

</mosaic_0001>

<llo_original>
// kernel: model_forward.1
$region0: #{model_forward.1}
  #allocation0 [shape = 'u32[]', space=smem, size = 0x4, offset = 0x4, fixed_abs, tag = 'smem constant byte address 0x4 - core index']
  #allocation1 [shape = 'u32[72,128]{1,0:T(1,128)}', space=vmem, size = 0x9000, scoped, tag = 'internal scratch']
  #allocation2 [shape = 'f32[4,8,8]{2,1,0:T(8,128)}', space=vmem, size = 0x4000, scoped, tag = 'scratch operand']
  #allocation3 [shape = 'f32[1,1]{1,0:T(1,128)S(6)}', space=smem, size = 0x200, scoped, tag = 'scoped memory for model_forward.1']
  %s0 = inlined_call_operand.vmem [shape: f32[8,8], index: 0, kind: input, shape index: {}]
  %s1 = inlined_call_operand.vmem [shape: f32[8,8], index: 1, kind: input, shape index: {}]
  %s2 = inlined_call_operand.hbm [shape: bf16[256,1024], index: 2, kind: input, shape index: {}]
  %s3 = inlined_call_operand.vmem [shape: f32[1,1024], index: 3, kind: input, shape index: {}]
  %s4 = inlined_call_operand.vmem [shape: f32[1,1024], index: 4, kind: input, shape index: {}]
  %s5 = inlined_call_operand.vmem [shape: f32[4,4], index: 5, kind: input, shape index: {}]
  %s6 = inlined_call_operand.vmem [shape: f32[4,4], index: 6, kind: input, shape index: {}]
  %s7 = inlined_call_operand.vmem [shape: f32[4,4], index: 7, kind: input, shape index: {}]
  %s8 = inlined_call_operand.vmem [shape: f32[1,4], index: 8, kind: input, shape index: {}]
  %s9 = inlined_call_operand.<no memory space> [shape: f32[1,1], index: 9, kind: input, shape index: {}]
  %s10 = inlined_call_operand.vmem [shape: f32[8,128], index: 10, kind: input, shape index: {}]
  %s11 = inlined_call_operand.vmem [shape: f32[1,128], index: 11, kind: input, shape index: {}]
  %s12 = inlined_call_operand.hbm [shape: f32[8,128], index: 12, kind: output, shape index: {}]
  %s13 = sld [smem:[#allocation0]]
  $region66: #{model_forward.1} parent=0
    _
  %s15 = ssub.s32 1, %s13
  %s16 = scalar_select 0, %s15, %s13
  %17 = sst [smem:[#allocation3]] %s9
  $region1: #{model_forward.1} parent=0
    #allocation4 [shape = 'u8[524288]{0}', space=vmem, size = 0x80000, scoped, tag = 'input window, operand 2, single buffered']
    #allocation5 [shape = 's32[1]{0}', space=sflag, size = 0x4, scoped, tag = 'scoped memory for model_forward.1']
    #allocation6 [shape = 's32[1]{0}', space=sflag, size = 0x4, scoped, tag = 'scoped memory for model_forward.1']
    #allocation7 [shape = 's32[1]{0}', space=sflag, size = 0x4, scoped, tag = 'scoped memory for model_forward.1']
    #allocation8 [shape = 'u8[512]{0}', space=smem, size = 0x200, scoped, tag = 'input window, operand 8, single buffered']
    #allocation9 [shape = 'u8[4096]{0}', space=vmem, size = 0x1000, scoped, tag = 'output window, operand 0, single buffered']
    %18 = vsyncpa [#allocation5], 0
    %19 = vsyncpa [#allocation7], 0
    %20 = vsyncpa [#allocation6], 0
    // Predicated region
    $region2: #{model_forward.1} parent=1 // pred_check
      _
    $region3: #{model_forward.1} parent=1 // pred_check_branch
      %22 = sbr.rel (0) target = $region5
    $region4: #{model_forward.1} parent=1 // pred_region
      _
    $region5: #{model_forward.1} parent=1 // pred_fallthru
      _
    // Predicated region
    $region6: #{model_forward.1} parent=1 // pred_check
      _
    $region7: #{model_forward.1} parent=1 // pred_check_branch
      %24 = sbr.rel (0) target = $region9
    $region8: #{model_forward.1} parent=1 // pred_region
      _
    $region9: #{model_forward.1} parent=1 // pred_fallthru
      _
    // Predicated region
    $region10: #{model_forward.1} parent=1 // pred_check
      _
    $region11: #{model_forward.1} parent=1 // pred_check_branch
      %26 = sbr.rel (0) target = $region13
    $region12: #{model_forward.1} parent=1 // pred_region
      %28 = vsyncadd [#allocation5], 0
      %s29 = sshll.u32 %s2, 4
      %s30 = int_to_ptr.hbm [resolvable:$true] %s29
      %s31 = sshll.u32 [#allocation4], 4
      %s32 = int_to_ptr.vmem [resolvable:$true] %s31
      %37 = dma.hbm_to_vmem [thread:$0]  %s30, 16384, %s32, [#allocation5], 512, 512, 32
    $region13: #{model_forward.1} parent=1 // pred_fallthru
      _
    // Predicated region
    $region14: #{model_forward.1} parent=1 // pred_check
      _
    $region15: #{model_forward.1} parent=1 // pred_check_branch
      %39 = sbr.rel (0) target = $region17
    $region16: #{model_forward.1} parent=1 // pred_region
      _
    $region17: #{model_forward.1} parent=1 // pred_fallthru
      _
    // Predicated region
    $region18: #{model_forward.1} parent=1 // pred_check
      _
    $region19: #{model_forward.1} parent=1 // pred_check_branch
      %41 = sbr.rel (0) target = $region21
    $region20: #{model_forward.1} parent=1 // pred_region
      _
    $region21: #{model_forward.1} parent=1 // pred_fallthru
      _
    // Predicated region
    $region22: #{model_forward.1} parent=1 // pred_check
      _
    $region23: #{model_forward.1} parent=1 // pred_check_branch
      %43 = sbr.rel (0) target = $region25
    $region24: #{model_forward.1} parent=1 // pred_region
      _
    $region25: #{model_forward.1} parent=1 // pred_fallthru
      _
    // Predicated region
    $region26: #{model_forward.1} parent=1 // pred_check
      _
    $region27: #{model_forward.1} parent=1 // pred_check_branch
      %45 = sbr.rel (0) target = $region29
    $region28: #{model_forward.1} parent=1 // pred_region
      _
    $region29: #{model_forward.1} parent=1 // pred_fallthru
      _
    // Predicated region
    $region30: #{model_forward.1} parent=1 // pred_check
      _
    $region31: #{model_forward.1} parent=1 // pred_check_branch
      %47 = sbr.rel (0) target = $region33
    $region32: #{model_forward.1} parent=1 // pred_region
      _
    $region33: #{model_forward.1} parent=1 // pred_fallthru
      _
    // Predicated region
    $region34: #{model_forward.1} parent=1 // pred_check
      _
    $region35: #{model_forward.1} parent=1 // pred_check_branch
      %49 = sbr.rel (0) target = $region37
    $region36: #{model_forward.1} parent=1 // pred_region
      %51 = vsyncadd [#allocation7], 0
      %s53 = sshll.u32 %s8, 4
      %s54 = int_to_ptr.vmem [resolvable:$true] %s53
      %56 = dma.vmem_to_smem %s54, 16, [#allocation8], [#allocation7]
    $region37: #{model_forward.1} parent=1 // pred_fallthru
      _
    // Predicated region
    $region38: #{model_forward.1} parent=1 // pred_check
      _
    $region39: #{model_forward.1} parent=1 // pred_check_branch
      %58 = sbr.rel (0) target = $region41
    $region40: #{model_forward.1} parent=1 // pred_region
      _
    $region41: #{model_forward.1} parent=1 // pred_fallthru
      _
    // Predicated region
    $region42: #{model_forward.1} parent=1 // pred_check
      _
    $region43: #{model_forward.1} parent=1 // pred_check_branch
      %60 = sbr.rel (0) target = $region45
    $region44: #{model_forward.1} parent=1 // pred_region
      _
    $region45: #{model_forward.1} parent=1 // pred_fallthru
      _
    // Predicated region
    $region46: #{model_forward.1} parent=1 // pred_check
      _
    $region47: #{model_forward.1} parent=1 // pred_check_branch
      %62 = sbr.rel (0) target = $region49
    $region48: #{model_forward.1} parent=1 // pred_region
      _
    $region49: #{model_forward.1} parent=1 // pred_fallthru
      _
    // Predicated region
    $region50: #{model_forward.1} parent=1 // pred_check
      _
    $region51: #{model_forward.1} parent=1 // pred_check_branch
      %64 = sbr.rel (0) target = $region53
    $region52: #{model_forward.1} parent=1 // pred_region
      %66 = dma.done [#allocation5], 16384
    $region53: #{model_forward.1} parent=1 // pred_fallthru
      _
    // Predicated region
    $region54: #{model_forward.1} parent=1 // pred_check
      _
    $region55: #{model_forward.1} parent=1 // pred_check_branch
      %68 = sbr.rel (0) target = $region57
    $region56: #{model_forward.1} parent=1 // pred_region
      %70 = dma.done [#allocation7], 16
    $region57: #{model_forward.1} parent=1 // pred_fallthru
      _
    %71 = sfence
    %v72 = vld [vmem:[%s0] sm:$0xff]
    %v73 = vld [vmem:[#allocation4] sm:$0xff]
    %v74 = vld [vmem:[#allocation4 + $0x8] sm:$0xff]
    %v75 = vld [vmem:[#allocation4 + $0x10] sm:$0xff]
    %v76 = vld [vmem:[#allocation4 + $0x18] sm:$0xff]
    %v77 = vld [vmem:[#allocation4 + $0x20] sm:$0xff]
    %v78 = vld [vmem:[#allocation4 + $0x28] sm:$0xff]
    %v79 = vld [vmem:[#allocation4 + $0x30] sm:$0xff]
    %v80 = vld [vmem:[#allocation4 + $0x38] sm:$0xff]
    %v81 = vld [vmem:[#allocation4 + $0x40] sm:$0xff]
    %v82 = vld [vmem:[#allocation4 + $0x48] sm:$0xff]
    %v83 = vld [vmem:[#allocation4 + $0x50] sm:$0xff]
    %v84 = vld [vmem:[#allocation4 + $0x58] sm:$0xff]
    %v85 = vld [vmem:[#allocation4 + $0x60] sm:$0xff]
    %v86 = vld [vmem:[#allocation4 + $0x68] sm:$0xff]
    %v87 = vld [vmem:[#allocation4 + $0x70] sm:$0xff]
    %v88 = vld [vmem:[#allocation4 + $0x78] sm:$0xff]
    %v89 = vld [vmem:[#allocation4 + $0x80] sm:$0xff]
    %v90 = vld [vmem:[#allocation4 + $0x88] sm:$0xff]
    %v91 = vld [vmem:[#allocation4 + $0x90] sm:$0xff]
    %v92 = vld [vmem:[#allocation4 + $0x98] sm:$0xff]
    %v93 = vld [vmem:[#allocation4 + $0xa0] sm:$0xff]
    %v94 = vld [vmem:[#allocation4 + $0xa8] sm:$0xff]
    %v95 = vld [vmem:[#allocation4 + $0xb0] sm:$0xff]
    %v96 = vld [vmem:[#allocation4 + $0xb8] sm:$0xff]
    %v97 = vld [vmem:[#allocation4 + $0xc0] sm:$0xff]
    %v98 = vld [vmem:[#allocation4 + $0xc8] sm:$0xff]
    %v99 = vld [vmem:[#allocation4 + $0xd0] sm:$0xff]
    %v100 = vld [vmem:[#allocation4 + $0xd8] sm:$0xff]
    %v101 = vld [vmem:[#allocation4 + $0xe0] sm:$0xff]
    %v102 = vld [vmem:[#allocation4 + $0xe8] sm:$0xff]
    %v103 = vld [vmem:[#allocation4 + $0xf0] sm:$0xff]
    %v104 = vld [vmem:[#allocation4 + $0xf8] sm:$0xff]
    %v105 = vld [vmem:[#allocation4 + $0x100] sm:$0xff]
    %v106 = vld [vmem:[#allocation4 + $0x108] sm:$0xff]
    %v107 = vld [vmem:[#allocation4 + $0x110] sm:$0xff]
    %v108 = vld [vmem:[#allocation4 + $0x118] sm:$0xff]
    %v109 = vld [vmem:[#allocation4 + $0x120] sm:$0xff]
    %v110 = vld [vmem:[#allocation4 + $0x128] sm:$0xff]
    %v111 = vld [vmem:[#allocation4 + $0x130] sm:$0xff]
    %v112 = vld [vmem:[#allocation4 + $0x138] sm:$0xff]
    %v113 = vld [vmem:[#allocation4 + $0x140] sm:$0xff]
    %v114 = vld [vmem:[#allocation4 + $0x148] sm:$0xff]
    %v115 = vld [vmem:[#allocation4 + $0x150] sm:$0xff]
    %v116 = vld [vmem:[#allocation4 + $0x158] sm:$0xff]
    %v117 = vld [vmem:[#allocation4 + $0x160] sm:$0xff]
    %v118 = vld [vmem:[#allocation4 + $0x168] sm:$0xff]
    %v119 = vld [vmem:[#allocation4 + $0x170] sm:$0xff]
    %v120 = vld [vmem:[#allocation4 + $0x178] sm:$0xff]
    %v121 = vld [vmem:[#allocation4 + $0x180] sm:$0xff]
    %v122 = vld [vmem:[#allocation4 + $0x188] sm:$0xff]
    %v123 = vld [vmem:[#allocation4 + $0x190] sm:$0xff]
    %v124 = vld [vmem:[#allocation4 + $0x198] sm:$0xff]
    %v125 = vld [vmem:[#allocation4 + $0x1a0] sm:$0xff]
    %v126 = vld [vmem:[#allocation4 + $0x1a8] sm:$0xff]
    %v127 = vld [vmem:[#allocation4 + $0x1b0] sm:$0xff]
    %v128 = vld [vmem:[#allocation4 + $0x1b8] sm:$0xff]
    %v129 = vld [vmem:[#allocation4 + $0x1c0] sm:$0xff]
    %v130 = vld [vmem:[#allocation4 + $0x1c8] sm:$0xff]
    %v131 = vld [vmem:[#allocation4 + $0x1d0] sm:$0xff]
    %v132 = vld [vmem:[#allocation4 + $0x1d8] sm:$0xff]
    %v133 = vld [vmem:[#allocation4 + $0x1e0] sm:$0xff]
    %v134 = vld [vmem:[#allocation4 + $0x1e8] sm:$0xff]
    %v135 = vld [vmem:[#allocation4 + $0x1f0] sm:$0xff]
    %v136 = vld [vmem:[#allocation4 + $0x1f8] sm:$0xff]
    %v137 = vld [vmem:[#allocation4 + $0x200] sm:$0xff]
    %v138 = vld [vmem:[#allocation4 + $0x208] sm:$0xff]
    %v139 = vld [vmem:[#allocation4 + $0x210] sm:$0xff]
    %v140 = vld [vmem:[#allocation4 + $0x218] sm:$0xff]
    %v141 = vld [vmem:[#allocation4 + $0x220] sm:$0xff]
    %v142 = vld [vmem:[#allocation4 + $0x228] sm:$0xff]
    %v143 = vld [vmem:[#allocation4 + $0x230] sm:$0xff]
    %v144 = vld [vmem:[#allocation4 + $0x238] sm:$0xff]
    %v145 = vld [vmem:[#allocation4 + $0x240] sm:$0xff]
    %v146 = vld [vmem:[#allocation4 + $0x248] sm:$0xff]
    %v147 = vld [vmem:[#allocation4 + $0x250] sm:$0xff]
    %v148 = vld [vmem:[#allocation4 + $0x258] sm:$0xff]
    %v149 = vld [vmem:[#allocation4 + $0x260] sm:$0xff]
    %v150 = vld [vmem:[#allocation4 + $0x268] sm:$0xff]
    %v151 = vld [vmem:[#allocation4 + $0x270] sm:$0xff]
    %v152 = vld [vmem:[#allocation4 + $0x278] sm:$0xff]
    %v153 = vld [vmem:[#allocation4 + $0x280] sm:$0xff]
    %v154 = vld [vmem:[#allocation4 + $0x288] sm:$0xff]
    %v155 = vld [vmem:[#allocation4 + $0x290] sm:$0xff]
    %v156 = vld [vmem:[#allocation4 + $0x298] sm:$0xff]
    %v157 = vld [vmem:[#allocation4 + $0x2a0] sm:$0xff]
    %v158 = vld [vmem:[#allocation4 + $0x2a8] sm:$0xff]
    %v159 = vld [vmem:[#allocation4 + $0x2b0] sm:$0xff]
    %v160 = vld [vmem:[#allocation4 + $0x2b8] sm:$0xff]
    %v161 = vld [vmem:[#allocation4 + $0x2c0] sm:$0xff]
    %v162 = vld [vmem:[#allocation4 + $0x2c8] sm:$0xff]
    %v163 = vld [vmem:[#allocation4 + $0x2d0] sm:$0xff]
    %v164 = vld [vmem:[#allocation4 + $0x2d8] sm:$0xff]
    %v165 = vld [vmem:[#allocation4 + $0x2e0] sm:$0xff]
    %v166 = vld [vmem:[#allocation4 + $0x2e8] sm:$0xff]
    %v167 = vld [vmem:[#allocation4 + $0x2f0] sm:$0xff]
    %v168 = vld [vmem:[#allocation4 + $0x2f8] sm:$0xff]
    %v169 = vld [vmem:[#allocation4 + $0x300] sm:$0xff]
    %v170 = vld [vmem:[#allocation4 + $0x308] sm:$0xff]
    %v171 = vld [vmem:[#allocation4 + $0x310] sm:$0xff]
    %v172 = vld [vmem:[#allocation4 + $0x318] sm:$0xff]
    %v173 = vld [vmem:[#allocation4 + $0x320] sm:$0xff]
    %v174 = vld [vmem:[#allocation4 + $0x328] sm:$0xff]
    %v175 = vld [vmem:[#allocation4 + $0x330] sm:$0xff]
    %v176 = vld [vmem:[#allocation4 + $0x338] sm:$0xff]
    %v177 = vld [vmem:[#allocation4 + $0x340] sm:$0xff]
    %v178 = vld [vmem:[#allocation4 + $0x348] sm:$0xff]
    %v179 = vld [vmem:[#allocation4 + $0x350] sm:$0xff]
    %v180 = vld [vmem:[#allocation4 + $0x358] sm:$0xff]
    %v181 = vld [vmem:[#allocation4 + $0x360] sm:$0xff]
    %v182 = vld [vmem:[#allocation4 + $0x368] sm:$0xff]
    %v183 = vld [vmem:[#allocation4 + $0x370] sm:$0xff]
    %v184 = vld [vmem:[#allocation4 + $0x378] sm:$0xff]
    %v185 = vld [vmem:[#allocation4 + $0x380] sm:$0xff]
    %v186 = vld [vmem:[#allocation4 + $0x388] sm:$0xff]
    %v187 = vld [vmem:[#allocation4 + $0x390] sm:$0xff]
    %v188 = vld [vmem:[#allocation4 + $0x398] sm:$0xff]
    %v189 = vld [vmem:[#allocation4 + $0x3a0] sm:$0xff]
    %v190 = vld [vmem:[#allocation4 + $0x3a8] sm:$0xff]
    %v191 = vld [vmem:[#allocation4 + $0x3b0] sm:$0xff]
    %v192 = vld [vmem:[#allocation4 + $0x3b8] sm:$0xff]
    %v193 = vld [vmem:[#allocation4 + $0x3c0] sm:$0xff]
    %v194 = vld [vmem:[#allocation4 + $0x3c8] sm:$0xff]
    %v195 = vld [vmem:[#allocation4 + $0x3d0] sm:$0xff]
    %v196 = vld [vmem:[#allocation4 + $0x3d8] sm:$0xff]
    %v197 = vld [vmem:[#allocation4 + $0x3e0] sm:$0xff]
    %v198 = vld [vmem:[#allocation4 + $0x3e8] sm:$0xff]
    %v199 = vld [vmem:[#allocation4 + $0x3f0] sm:$0xff]
    %v200 = vld [vmem:[#allocation4 + $0x3f8] sm:$0xff]
    %v201 = vld [vmem:[%s1] sm:$0xff]
    %v202 = vld [vmem:[%s3] sm:$0xff]
    %v204 = vperm.slane %v202, 0
    %v205 = vperm.slane %v202, 1
    %v206 = vperm.slane %v202, 2
    %v207 = vperm.slane %v202, 3
    %v208 = vperm.slane %v202, 4
    %v209 = vperm.slane %v202, 5
    %v210 = vperm.slane %v202, 6
    %v211 = vperm.slane %v202, 7
    %v220 = vld [vmem:[%s4] sm:$0xff]
    %v222 = vperm.slane %v220, 0
    %v223 = vperm.slane %v220, 1
    %v224 = vperm.slane %v220, 2
    %v225 = vperm.slane %v220, 3
    %v226 = vperm.slane %v220, 4
    %v227 = vperm.slane %v220, 5
    %v228 = vperm.slane %v220, 6
    %v229 = vperm.slane %v220, 7
    %v238 = vld [vmem:[%s5] sm:$0xf]
    %v239 = vld [vmem:[%s6] sm:$0xf]
    %v240 = vld [vmem:[%s7] sm:$0xf]
    %v241 = vperm.slane %v238, 0
    %v242 = vperm.slane %v238, 1
    %v243 = vperm.slane %v238, 2
    %v244 = vperm.slane %v238, 3
    %v245 = vperm.slane %v239, 0
    %v246 = vperm.slane %v239, 1
    %v247 = vperm.slane %v239, 2
    %v248 = vperm.slane %v239, 3
    %v249 = vperm.slane %v240, 0
    %v250 = vperm.slane %v240, 1
    %v251 = vperm.slane %v240, 2
    %v252 = vperm.slane %v240, 3
    %254 = vset.pattern.permute.xlu0 0
    %255 = vperm.xlu0 %254, %v72
    %v256 = vpop.permute.xlu0 %255
    %v258 = vmul.f32 %v256, %v204
    %v259 = vmul.f32 %v256, %v205
    %v260 = vmul.f32 %v256, %v206
    %v261 = vmul.f32 %v256, %v207
    %v262 = vmul.f32 %v256, %v208
    %v263 = vmul.f32 %v256, %v209
    %v264 = vmul.f32 %v256, %v210
    %v265 = vmul.f32 %v256, %v211
    %v266 = vadd.f32 %v258, %v222
    %v267 = vadd.f32 %v259, %v223
    %v268 = vadd.f32 %v260, %v224
    %v269 = vadd.f32 %v261, %v225
    %v270 = vadd.f32 %v262, %v226
    %v271 = vadd.f32 %v263, %v227
    %v272 = vadd.f32 %v264, %v228
    %v273 = vadd.f32 %v265, %v229
    %v274 = vxor.u32 %v266, 2147483648
    %v275 = vxor.u32 %v267, 2147483648
    %v276 = vmul.f32 %v274, 1.442695
    %v277 = vpow.pop %v276
    %v278 = vmul.f32 %v275, 1.442695
    %v279 = vpow.pop %v278
    %v280 = vadd.f32 %v277, 1.0
    %v281 = vadd.f32 %v279, 1.0
    %v282 = vrcp.pop %v280
    %v283 = vmul.f32 %v280, %v282
    %v284 = vsub.f32 1.0, %v283
    %v285 = vmul.f32 %v282, %v284
    %v286 = vadd.f32 %v282, %v285
    %vm287 = vweird.f32 %v280
    %vm288 = vweird.f32 %v282
    %vm289 = vmor %vm287, %vm288
    %v290 = vsel %vm289, %v282, %v286
    %v291 = vand.u32 2147483647, %v280
    %vm292 = vcmp.eq.f32.partialorder %v291, 8.507059e+37
    %v293 = vand.u32 %v280, 2147483648
    %v294 = vor.u32 1.1754944e-38, %v293
    %v295 = vsel %vm292, %v294, %v290
    %v296 = vmul.f32 1.0, %v295
    %v297 = vrcp.pop %v281
    %v298 = vmul.f32 %v281, %v297
    %v299 = vsub.f32 1.0, %v298
    %v300 = vmul.f32 %v297, %v299
    %v301 = vadd.f32 %v297, %v300
    %vm302 = vweird.f32 %v281
    %vm303 = vweird.f32 %v297
    %vm304 = vmor %vm302, %vm303
    %v305 = vsel %vm304, %v297, %v301
    %v306 = vand.u32 2147483647, %v281
    %vm307 = vcmp.eq.f32.partialorder %v306, 8.507059e+37
    %v308 = vand.u32 %v281, 2147483648
    %v309 = vor.u32 1.1754944e-38, %v308
    %v310 = vsel %vm307, %v309, %v305
    %v311 = vmul.f32 1.0, %v310
    %v312 = vxor.u32 %v268, 2147483648
    %v313 = vxor.u32 %v269, 2147483648
    %v314 = vmul.f32 %v312, 1.442695
    %v315 = vpow.pop %v314
    %v316 = vmul.f32 %v313, 1.442695
    %v317 = vpow.pop %v316
    %v318 = vadd.f32 %v315, 1.0
    %v319 = vadd.f32 %v317, 1.0
    %v320 = vrcp.pop %v318
    %v321 = vmul.f32 %v318, %v320
    %v322 = vsub.f32 1.0, %v321
    %v323 = vmul.f32 %v320, %v322
    %v324 = vadd.f32 %v320, %v323
    %vm325 = vweird.f32 %v318
    %vm326 = vweird.f32 %v320
    %vm327 = vmor %vm325, %vm326
    %v328 = vsel %vm327, %v320, %v324
    %v329 = vand.u32 2147483647, %v318
    %vm330 = vcmp.eq.f32.partialorder %v329, 8.507059e+37
    %v331 = vand.u32 %v318, 2147483648
    %v332 = vor.u32 1.1754944e-38, %v331
    %v333 = vsel %vm330, %v332, %v328
    %v334 = vmul.f32 1.0, %v333
    %v335 = vrcp.pop %v319
    %v336 = vmul.f32 %v319, %v335
    %v337 = vsub.f32 1.0, %v336
    %v338 = vmul.f32 %v335, %v337
    %v339 = vadd.f32 %v335, %v338
    %vm340 = vweird.f32 %v319
    %vm341 = vweird.f32 %v335
    %vm342 = vmor %vm340, %vm341
    %v343 = vsel %vm342, %v335, %v339
    %v344 = vand.u32 2147483647, %v319
    %vm345 = vcmp.eq.f32.partialorder %v344, 8.507059e+37
    %v346 = vand.u32 %v319, 2147483648
    %v347 = vor.u32 1.1754944e-38, %v346
    %v348 = vsel %vm345, %v347, %v343
    %v349 = vmul.f32 1.0, %v348
    %v350 = vtanh.pop %v270
    %v351 = vtanh.pop %v271
    %v352 = vxor.u32 %v272, 2147483648
    %v353 = vxor.u32 %v273, 2147483648
    %v354 = vmul.f32 %v352, 1.442695
    %v355 = vpow.pop %v354
    %v356 = vmul.f32 %v353, 1.442695
    %v357 = vpow.pop %v356
    %v358 = vadd.f32 %v355, 1.0
    %v359 = vadd.f32 %v357, 1.0
    %v360 = vrcp.pop %v358
    %v361 = vmul.f32 %v358, %v360
    %v362 = vsub.f32 1.0, %v361
    %v363 = vmul.f32 %v360, %v362
    %v364 = vadd.f32 %v360, %v363
    %vm365 = vweird.f32 %v358
    %vm366 = vweird.f32 %v360
    %vm367 = vmor %vm365, %vm366
    %v368 = vsel %vm367, %v360, %v364
    %v369 = vand.u32 2147483647, %v358
    %vm370 = vcmp.eq.f32.partialorder %v369, 8.507059e+37
    %v371 = vand.u32 %v358, 2147483648
    %v372 = vor.u32 1.1754944e-38, %v371
    %v373 = vsel %vm370, %v372, %v368
    %v374 = vmul.f32 1.0, %v373
    %v375 = vrcp.pop %v359
    %v376 = vmul.f32 %v359, %v375
    %v377 = vsub.f32 1.0, %v376
    %v378 = vmul.f32 %v375, %v377
    %v379 = vadd.f32 %v375, %v378
    %vm380 = vweird.f32 %v359
    %vm381 = vweird.f32 %v375
    %vm382 = vmor %vm380, %vm381
    %v383 = vsel %vm382, %v375, %v379
    %v384 = vand.u32 2147483647, %v359
    %vm385 = vcmp.eq.f32.partialorder %v384, 8.507059e+37
    %v386 = vand.u32 %v359, 2147483648
    %v387 = vor.u32 1.1754944e-38, %v386
    %v388 = vsel %vm385, %v387, %v383
    %v389 = vmul.f32 1.0, %v388
    %v390 = vmul.f32 %v334, 0.0
    %v391 = vmul.f32 %v349, 0.0
    %v392 = vmul.f32 %v296, %v350
    %v393 = vmul.f32 %v311, %v351
    %v394 = vadd.f32 %v390, %v392
    %v395 = vadd.f32 %v391, %v393
    %v396 = vtanh.pop %v394
    %v397 = vtanh.pop %v395
    %v398 = vmul.f32 %v374, %v396
    %v399 = vmul.f32 %v389, %v397
    %v400 = vmul.f32 %v256, %v241
    %v401 = vadd.f32 %v400, %v249
    %v402 = vxor.u32 %v401, 2147483648
    %v403 = vmul.f32 %v402, 1.442695
    %v404 = vpow.pop %v403
    %v405 = vadd.f32 %v404, 1.0
    %v406 = vrcp.pop %v405
    %v407 = vmul.f32 %v405, %v406
    %v408 = vsub.f32 1.0, %v407
    %v409 = vmul.f32 %v406, %v408
    %v410 = vadd.f32 %v406, %v409
    %vm411 = vweird.f32 %v405
    %vm412 = vweird.f32 %v406
    %vm413 = vmor %vm411, %vm412
    %v414 = vsel %vm413, %v406, %v410
    %v415 = vand.u32 2147483647, %v405
    %vm416 = vcmp.eq.f32.partialorder %v415, 8.507059e+37
    %v417 = vand.u32 %v405, 2147483648
    %v418 = vor.u32 1.1754944e-38, %v417
    %v419 = vsel %vm416, %v418, %v414
    %v420 = vmul.f32 1.0, %v419
    %v421 = vmul.f32 %v256, %v243
    %v422 = vadd.f32 %v421, %v251
    %v423 = vtanh.pop %v422
    %v424 = vmul.f32 %v256, %v244
    %v425 = vadd.f32 %v424, %v252
    %v426 = vxor.u32 %v425, 2147483648
    %v427 = vmul.f32 %v426, 1.442695
    %v428 = vpow.pop %v427
    %v429 = vadd.f32 %v428, 1.0
    %v430 = vrcp.pop %v429
    %v431 = vmul.f32 %v429, %v430
    %v432 = vsub.f32 1.0, %v431
    %v433 = vmul.f32 %v430, %v432
    %v434 = vadd.f32 %v430, %v433
    %vm435 = vweird.f32 %v429
    %vm436 = vweird.f32 %v430
    %vm437 = vmor %vm435, %vm436
    %v438 = vsel %vm437, %v430, %v434
    %v439 = vand.u32 2147483647, %v429
    %vm440 = vcmp.eq.f32.partialorder %v439, 8.507059e+37
    %v441 = vand.u32 %v429, 2147483648
    %v442 = vor.u32 1.1754944e-38, %v441
    %v443 = vsel %vm440, %v442, %v438
    %v444 = vmul.f32 1.0, %v443
    %v445 = vmul.f32 %v420, %v423
    %v446 = vtanh.pop %v445
    %v447 = vmul.f32 %v444, %v446
    %vm448 = vcmask 7168
    %449 = vst.msk [vmem:[#allocation2] sm:$0xff] %vm448, %v447
    %451 = vrot.lane.b32.xlu0 %v447, 127
    %v452 = vpop.permute.xlu0 %451
    %s454 = scalar_lea.vmem [#allocation2], 8
    %455 = vst.msk [vmem:[%s454] sm:$0xff] %vm448, %v452
    %456 = vrot.lane.b32.xlu0 %v447, 126
    %v457 = vpop.permute.xlu0 %456
    %s459 = scalar_lea.vmem [#allocation2], 16
    %460 = vst.msk [vmem:[%s459] sm:$0xff] %vm448, %v457
    %461 = vrot.lane.b32.xlu0 %v447, 125
    %v462 = vpop.permute.xlu0 %461
    %s464 = scalar_lea.vmem [#allocation2], 24
    %465 = vst.msk [vmem:[%s464] sm:$0xff] %vm448, %v462
    %466 = vset.pattern.permute.xlu0 1
    %467 = vperm.xlu0 %466, %v72
    %v468 = vpop.permute.xlu0 %467
    %v470 = vmul.f32 %v468, %v204
    %v471 = vmul.f32 %v468, %v205
    %v472 = vmul.f32 %v468, %v206
    %v473 = vmul.f32 %v468, %v207
    %v474 = vmul.f32 %v468, %v208
    %v475 = vmul.f32 %v468, %v209
    %v476 = vmul.f32 %v468, %v210
    %v477 = vmul.f32 %v468, %v211
    %v478 = vpack.c.bf16 %v398, %v398
    %v479 = vpack.c.bf16 %v399, %v399
    %v608 = vunpack.c.l.b16 %v73
    %v609 = vunpack.c.h.b16 %v73
    %v610 = vunpack.c.l.b16 %v74
    %v611 = vunpack.c.h.b16 %v74
    %v612 = vunpack.c.l.b16 %v75
    %v613 = vunpack.c.h.b16 %v75
    %v614 = vunpack.c.l.b16 %v76
    %v615 = vunpack.c.h.b16 %v76
    %v616 = vunpack.c.l.b16 %v77
    %v617 = vunpack.c.h.b16 %v77
    %v618 = vunpack.c.l.b16 %v78
    %v619 = vunpack.c.h.b16 %v78
    %v620 = vunpack.c.l.b16 %v79
    %v621 = vunpack.c.h.b16 %v79
    %v622 = vunpack.c.l.b16 %v80
    %v623 = vunpack.c.h.b16 %v80
    %v624 = vunpack.c.l.b16 %v81
    %v625 = vunpack.c.h.b16 %v81
    %v626 = vunpack.c.l.b16 %v82
    %v627 = vunpack.c.h.b16 %v82
    %v628 = vunpack.c.l.b16 %v83
    %v629 = vunpack.c.h.b16 %v83
    %v630 = vunpack.c.l.b16 %v84
    %v631 = vunpack.c.h.b16 %v84
    %v632 = vunpack.c.l.b16 %v85
    %v633 = vunpack.c.h.b16 %v85
    %v634 = vunpack.c.l.b16 %v86
    %v635 = vunpack.c.h.b16 %v86
    %v636 = vunpack.c.l.b16 %v87
    %v637 = vunpack.c.h.b16 %v87
    %v638 = vunpack.c.l.b16 %v88
    %v639 = vunpack.c.h.b16 %v88
    %v640 = vunpack.c.l.b16 %v89
    %v641 = vunpack.c.h.b16 %v89
    %v642 = vunpack.c.l.b16 %v90
    %v643 = vunpack.c.h.b16 %v90
    %v644 = vunpack.c.l.b16 %v91
    %v645 = vunpack.c.h.b16 %v91
    %v646 = vunpack.c.l.b16 %v92
    %v647 = vunpack.c.h.b16 %v92
    %v648 = vunpack.c.l.b16 %v93
    %v649 = vunpack.c.h.b16 %v93
    %v650 = vunpack.c.l.b16 %v94
    %v651 = vunpack.c.h.b16 %v94
    %v652 = vunpack.c.l.b16 %v95
    %v653 = vunpack.c.h.b16 %v95
    %v654 = vunpack.c.l.b16 %v96
    %v655 = vunpack.c.h.b16 %v96
    %v656 = vunpack.c.l.b16 %v97
    %v657 = vunpack.c.h.b16 %v97
    %v658 = vunpack.c.l.b16 %v98
    %v659 = vunpack.c.h.b16 %v98
    %v660 = vunpack.c.l.b16 %v99
    %v661 = vunpack.c.h.b16 %v99
    %v662 = vunpack.c.l.b16 %v100
    %v663 = vunpack.c.h.b16 %v100
    %v664 = vunpack.c.l.b16 %v101
    %v665 = vunpack.c.h.b16 %v101
    %v666 = vunpack.c.l.b16 %v102
    %v667 = vunpack.c.h.b16 %v102
    %v668 = vunpack.c.l.b16 %v103
    %v669 = vunpack.c.h.b16 %v103
    %v670 = vunpack.c.l.b16 %v104
    %v671 = vunpack.c.h.b16 %v104
    %v672 = vunpack.c.l.b16 %v105
    %v673 = vunpack.c.h.b16 %v105
    %v674 = vunpack.c.l.b16 %v106
    %v675 = vunpack.c.h.b16 %v106
    %v676 = vunpack.c.l.b16 %v107
    %v677 = vunpack.c.h.b16 %v107
    %v678 = vunpack.c.l.b16 %v108
    %v679 = vunpack.c.h.b16 %v108
    %v680 = vunpack.c.l.b16 %v109
    %v681 = vunpack.c.h.b16 %v109
    %v682 = vunpack.c.l.b16 %v110
    %v683 = vunpack.c.h.b16 %v110
    %v684 = vunpack.c.l.b16 %v111
    %v685 = vunpack.c.h.b16 %v111
    %v686 = vunpack.c.l.b16 %v112
    %v687 = vunpack.c.h.b16 %v112
    %v688 = vunpack.c.l.b16 %v113
    %v689 = vunpack.c.h.b16 %v113
    %v690 = vunpack.c.l.b16 %v114
    %v691 = vunpack.c.h.b16 %v114
    %v692 = vunpack.c.l.b16 %v115
    %v693 = vunpack.c.h.b16 %v115
    %v694 = vunpack.c.l.b16 %v116
    %v695 = vunpack.c.h.b16 %v116
    %v696 = vunpack.c.l.b16 %v117
    %v697 = vunpack.c.h.b16 %v117
    %v698 = vunpack.c.l.b16 %v118
    %v699 = vunpack.c.h.b16 %v118
    %v700 = vunpack.c.l.b16 %v119
    %v701 = vunpack.c.h.b16 %v119
    %v702 = vunpack.c.l.b16 %v120
    %v703 = vunpack.c.h.b16 %v120
    %v704 = vunpack.c.l.b16 %v121
    %v705 = vunpack.c.h.b16 %v121
    %v706 = vunpack.c.l.b16 %v122
    %v707 = vunpack.c.h.b16 %v122
    %v708 = vunpack.c.l.b16 %v123
    %v709 = vunpack.c.h.b16 %v123
    %v710 = vunpack.c.l.b16 %v124
    %v711 = vunpack.c.h.b16 %v124
    %v712 = vunpack.c.l.b16 %v125
    %v713 = vunpack.c.h.b16 %v125
    %v714 = vunpack.c.l.b16 %v126
    %v715 = vunpack.c.h.b16 %v126
    %v716 = vunpack.c.l.b16 %v127
    %v717 = vunpack.c.h.b16 %v127
    %v718 = vunpack.c.l.b16 %v128
    %v719 = vunpack.c.h.b16 %v128
    %v720 = vunpack.c.l.b16 %v129
    %v721 = vunpack.c.h.b16 %v129
    %v722 = vunpack.c.l.b16 %v130
    %v723 = vunpack.c.h.b16 %v130
    %v724 = vunpack.c.l.b16 %v131
    %v725 = vunpack.c.h.b16 %v131
    %v726 = vunpack.c.l.b16 %v132
    %v727 = vunpack.c.h.b16 %v132
    %v728 = vunpack.c.l.b16 %v133
    %v729 = vunpack.c.h.b16 %v133
    %v730 = vunpack.c.l.b16 %v134
    %v731 = vunpack.c.h.b16 %v134
    %v732 = vunpack.c.l.b16 %v135
    %v733 = vunpack.c.h.b16 %v135
    %v734 = vunpack.c.l.b16 %v136
    %v735 = vunpack.c.h.b16 %v136
    %v736 = vunpack.c.l.b16 %v137
    %v737 = vunpack.c.h.b16 %v137
    %v738 = vunpack.c.l.b16 %v138
    %v739 = vunpack.c.h.b16 %v138
    %v740 = vunpack.c.l.b16 %v139
    %v741 = vunpack.c.h.b16 %v139
    %v742 = vunpack.c.l.b16 %v140
    %v743 = vunpack.c.h.b16 %v140
    %v744 = vunpack.c.l.b16 %v141
    %v745 = vunpack.c.h.b16 %v141
    %v746 = vunpack.c.l.b16 %v142
    %v747 = vunpack.c.h.b16 %v142
    %v748 = vunpack.c.l.b16 %v143
    %v749 = vunpack.c.h.b16 %v143
    %v750 = vunpack.c.l.b16 %v144
    %v751 = vunpack.c.h.b16 %v144
    %v752 = vunpack.c.l.b16 %v145
    %v753 = vunpack.c.h.b16 %v145
    %v754 = vunpack.c.l.b16 %v146
    %v755 = vunpack.c.h.b16 %v146
    %v756 = vunpack.c.l.b16 %v147
    %v757 = vunpack.c.h.b16 %v147
    %v758 = vunpack.c.l.b16 %v148
    %v759 = vunpack.c.h.b16 %v148
    %v760 = vunpack.c.l.b16 %v149
    %v761 = vunpack.c.h.b16 %v149
    %v762 = vunpack.c.l.b16 %v150
    %v763 = vunpack.c.h.b16 %v150
    %v764 = vunpack.c.l.b16 %v151
    %v765 = vunpack.c.h.b16 %v151
    %v766 = vunpack.c.l.b16 %v152
    %v767 = vunpack.c.h.b16 %v152
    %v768 = vunpack.c.l.b16 %v153
    %v769 = vunpack.c.h.b16 %v153
    %v770 = vunpack.c.l.b16 %v154
    %v771 = vunpack.c.h.b16 %v154
    %v772 = vunpack.c.l.b16 %v155
    %v773 = vunpack.c.h.b16 %v155
    %v774 = vunpack.c.l.b16 %v156
    %v775 = vunpack.c.h.b16 %v156
    %v776 = vunpack.c.l.b16 %v157
    %v777 = vunpack.c.h.b16 %v157
    %v778 = vunpack.c.l.b16 %v158
    %v779 = vunpack.c.h.b16 %v158
    %v780 = vunpack.c.l.b16 %v159
    %v781 = vunpack.c.h.b16 %v159
    %v782 = vunpack.c.l.b16 %v160
    %v783 = vunpack.c.h.b16 %v160
    %v784 = vunpack.c.l.b16 %v161
    %v785 = vunpack.c.h.b16 %v161
    %v786 = vunpack.c.l.b16 %v162
    %v787 = vunpack.c.h.b16 %v162
    %v788 = vunpack.c.l.b16 %v163
    %v789 = vunpack.c.h.b16 %v163
    %v790 = vunpack.c.l.b16 %v164
    %v791 = vunpack.c.h.b16 %v164
    %v792 = vunpack.c.l.b16 %v165
    %v793 = vunpack.c.h.b16 %v165
    %v794 = vunpack.c.l.b16 %v166
    %v795 = vunpack.c.h.b16 %v166
    %v796 = vunpack.c.l.b16 %v167
    %v797 = vunpack.c.h.b16 %v167
    %v798 = vunpack.c.l.b16 %v168
    %v799 = vunpack.c.h.b16 %v168
    %v800 = vunpack.c.l.b16 %v169
    %v801 = vunpack.c.h.b16 %v169
    %v802 = vunpack.c.l.b16 %v170
    %v803 = vunpack.c.h.b16 %v170
    %v804 = vunpack.c.l.b16 %v171
    %v805 = vunpack.c.h.b16 %v171
    %v806 = vunpack.c.l.b16 %v172
    %v807 = vunpack.c.h.b16 %v172
    %v808 = vunpack.c.l.b16 %v173
    %v809 = vunpack.c.h.b16 %v173
    %v810 = vunpack.c.l.b16 %v174
    %v811 = vunpack.c.h.b16 %v174
    %v812 = vunpack.c.l.b16 %v175
    %v813 = vunpack.c.h.b16 %v175
    %v814 = vunpack.c.l.b16 %v176
    %v815 = vunpack.c.h.b16 %v176
    %v816 = vunpack.c.l.b16 %v177
    %v817 = vunpack.c.h.b16 %v177
    %v818 = vunpack.c.l.b16 %v178
    %v819 = vunpack.c.h.b16 %v178
    %v820 = vunpack.c.l.b16 %v179
    %v821 = vunpack.c.h.b16 %v179
    %v822 = vunpack.c.l.b16 %v180
    %v823 = vunpack.c.h.b16 %v180
    %v824 = vunpack.c.l.b16 %v181
    %v825 = vunpack.c.h.b16 %v181
    %v826 = vunpack.c.l.b16 %v182
    %v827 = vunpack.c.h.b16 %v182
    %v828 = vunpack.c.l.b16 %v183
    %v829 = vunpack.c.h.b16 %v183
    %v830 = vunpack.c.l.b16 %v184
    %v831 = vunpack.c.h.b16 %v184
    %v832 = vunpack.c.l.b16 %v185
    %v833 = vunpack.c.h.b16 %v185
    %v834 = vunpack.c.l.b16 %v186
    %v835 = vunpack.c.h.b16 %v186
    %v836 = vunpack.c.l.b16 %v187
    %v837 = vunpack.c.h.b16 %v187
    %v838 = vunpack.c.l.b16 %v188
    %v839 = vunpack.c.h.b16 %v188
    %v840 = vunpack.c.l.b16 %v189
    %v841 = vunpack.c.h.b16 %v189
    %v842 = vunpack.c.l.b16 %v190
    %v843 = vunpack.c.h.b16 %v190
    %v844 = vunpack.c.l.b16 %v191
    %v845 = vunpack.c.h.b16 %v191
    %v846 = vunpack.c.l.b16 %v192
    %v847 = vunpack.c.h.b16 %v192
    %v848 = vunpack.c.l.b16 %v193
    %v849 = vunpack.c.h.b16 %v193
    %v850 = vunpack.c.l.b16 %v194
    %v851 = vunpack.c.h.b16 %v194
    %v852 = vunpack.c.l.b16 %v195
    %v853 = vunpack.c.h.b16 %v195
    %v854 = vunpack.c.l.b16 %v196
    %v855 = vunpack.c.h.b16 %v196
    %v856 = vunpack.c.l.b16 %v197
    %v857 = vunpack.c.h.b16 %v197
    %v858 = vunpack.c.l.b16 %v198
    %v859 = vunpack.c.h.b16 %v198
    %v860 = vunpack.c.l.b16 %v199
    %v861 = vunpack.c.h.b16 %v199
    %v862 = vunpack.c.l.b16 %v200
    %v863 = vunpack.c.h.b16 %v200
    %v864 = vpack.c.b16 %v616, %v608
    %v865 = vpack.c.b16 %v617, %v609
    %v866 = vpack.c.b16 %v618, %v610
    %v867 = vpack.c.b16 %v619, %v611
    %v868 = vpack.c.b16 %v620, %v612
    %v869 = vpack.c.b16 %v621, %v613
    %v870 = vpack.c.b16 %v622, %v614
    %v871 = vpack.c.b16 %v623, %v615
    %v872 = vpack.c.b16 %v632, %v624
    %v873 = vpack.c.b16 %v633, %v625
    %v874 = vpack.c.b16 %v634, %v626
    %v875 = vpack.c.b16 %v635, %v627
    %v876 = vpack.c.b16 %v636, %v628
    %v877 = vpack.c.b16 %v637, %v629
    %v878 = vpack.c.b16 %v638, %v630
    %v879 = vpack.c.b16 %v639, %v631
    %v880 = vpack.c.b16 %v648, %v640
    %v881 = vpack.c.b16 %v649, %v641
    %v882 = vpack.c.b16 %v650, %v642
    %v883 = vpack.c.b16 %v651, %v643
    %v884 = vpack.c.b16 %v652, %v644
    %v885 = vpack.c.b16 %v653, %v645
    %v886 = vpack.c.b16 %v654, %v646
    %v887 = vpack.c.b16 %v655, %v647
    %v888 = vpack.c.b16 %v664, %v656
    %v889 = vpack.c.b16 %v665, %v657
    %v890 = vpack.c.b16 %v666, %v658
    %v891 = vpack.c.b16 %v667, %v659
    %v892 = vpack.c.b16 %v668, %v660
    %v893 = vpack.c.b16 %v669, %v661
    %v894 = vpack.c.b16 %v670, %v662
    %v895 = vpack.c.b16 %v671, %v663
    %v896 = vpack.c.b16 %v680, %v672
    %v897 = vpack.c.b16 %v681, %v673
    %v898 = vpack.c.b16 %v682, %v674
    %v899 = vpack.c.b16 %v683, %v675
    %v900 = vpack.c.b16 %v684, %v676
    %v901 = vpack.c.b16 %v685, %v677
    %v902 = vpack.c.b16 %v686, %v678
    %v903 = vpack.c.b16 %v687, %v679
    %v904 = vpack.c.b16 %v696, %v688
    %v905 = vpack.c.b16 %v697, %v689
    %v906 = vpack.c.b16 %v698, %v690
    %v907 = vpack.c.b16 %v699, %v691
    %v908 = vpack.c.b16 %v700, %v692
    %v909 = vpack.c.b16 %v701, %v693
    %v910 = vpack.c.b16 %v702, %v694
    %v911 = vpack.c.b16 %v703, %v695
    %v912 = vpack.c.b16 %v712, %v704
    %v913 = vpack.c.b16 %v713, %v705
    %v914 = vpack.c.b16 %v714, %v706
    %v915 = vpack.c.b16 %v715, %v707
    %v916 = vpack.c.b16 %v716, %v708
    %v917 = vpack.c.b16 %v717, %v709
    %v918 = vpack.c.b16 %v718, %v710
    %v919 = vpack.c.b16 %v719, %v711
    %v920 = vpack.c.b16 %v728, %v720
    %v921 = vpack.c.b16 %v729, %v721
    %v922 = vpack.c.b16 %v730, %v722
    %v923 = vpack.c.b16 %v731, %v723
    %v924 = vpack.c.b16 %v732, %v724
    %v925 = vpack.c.b16 %v733, %v725
    %v926 = vpack.c.b16 %v734, %v726
    %v927 = vpack.c.b16 %v735, %v727
    %v928 = vpack.c.b16 %v744, %v736
    %v929 = vpack.c.b16 %v745, %v737
    %v930 = vpack.c.b16 %v746, %v738
    %v931 = vpack.c.b16 %v747, %v739
    %v932 = vpack.c.b16 %v748, %v740
    %v933 = vpack.c.b16 %v749, %v741
    %v934 = vpack.c.b16 %v750, %v742
    %v935 = vpack.c.b16 %v751, %v743
    %v936 = vpack.c.b16 %v760, %v752
    %v937 = vpack.c.b16 %v761, %v753
    %v938 = vpack.c.b16 %v762, %v754
    %v939 = vpack.c.b16 %v763, %v755
    %v940 = vpack.c.b16 %v764, %v756
    %v941 = vpack.c.b16 %v765, %v757
    %v942 = vpack.c.b16 %v766, %v758
    %v943 = vpack.c.b16 %v767, %v759
    %v944 = vpack.c.b16 %v776, %v768
    %v945 = vpack.c.b16 %v777, %v769
    %v946 = vpack.c.b16 %v778, %v770
    %v947 = vpack.c.b16 %v779, %v771
    %v948 = vpack.c.b16 %v780, %v772
    %v949 = vpack.c.b16 %v781, %v773
    %v950 = vpack.c.b16 %v782, %v774
    %v951 = vpack.c.b16 %v783, %v775
    %v952 = vpack.c.b16 %v792, %v784
    %v953 = vpack.c.b16 %v793, %v785
    %v954 = vpack.c.b16 %v794, %v786
    %v955 = vpack.c.b16 %v795, %v787
    %v956 = vpack.c.b16 %v796, %v788
    %v957 = vpack.c.b16 %v797, %v789
    %v958 = vpack.c.b16 %v798, %v790
    %v959 = vpack.c.b16 %v799, %v791
    %v960 = vpack.c.b16 %v808, %v800
    %v961 = vpack.c.b16 %v809, %v801
    %v962 = vpack.c.b16 %v810, %v802
    %v963 = vpack.c.b16 %v811, %v803
    %v964 = vpack.c.b16 %v812, %v804
    %v965 = vpack.c.b16 %v813, %v805
    %v966 = vpack.c.b16 %v814, %v806
    %v967 = vpack.c.b16 %v815, %v807
    %v968 = vpack.c.b16 %v824, %v816
    %v969 = vpack.c.b16 %v825, %v817
    %v970 = vpack.c.b16 %v826, %v818
    %v971 = vpack.c.b16 %v827, %v819
    %v972 = vpack.c.b16 %v828, %v820
    %v973 = vpack.c.b16 %v829, %v821
    %v974 = vpack.c.b16 %v830, %v822
    %v975 = vpack.c.b16 %v831, %v823
    %v976 = vpack.c.b16 %v840, %v832
    %v977 = vpack.c.b16 %v841, %v833
    %v978 = vpack.c.b16 %v842, %v834
    %v979 = vpack.c.b16 %v843, %v835
    %v980 = vpack.c.b16 %v844, %v836
    %v981 = vpack.c.b16 %v845, %v837
    %v982 = vpack.c.b16 %v846, %v838
    %v983 = vpack.c.b16 %v847, %v839
    %v984 = vpack.c.b16 %v856, %v848
    %v985 = vpack.c.b16 %v857, %v849
    %v986 = vpack.c.b16 %v858, %v850
    %v987 = vpack.c.b16 %v859, %v851
    %v988 = vpack.c.b16 %v860, %v852
    %v989 = vpack.c.b16 %v861, %v853
    %v990 = vpack.c.b16 %v862, %v854
    %v991 = vpack.c.b16 %v863, %v855
    %1120 = vmatpush.bf16.msra.mxu0 %v920
    %1121 = vmatpush.bf16.msra.mxu0 %v912
    %1122 = vmatpush.bf16.msra.mxu0 %v904
    %1123 = vmatpush.bf16.msra.mxu0 %v896
    %1124 = vmatpush.bf16.msra.mxu0 %v888
    %1125 = vmatpush.bf16.msra.mxu0 %v880
    %1126 = vmatpush.bf16.msra.mxu0 %v872
    %1127 = vmatpush.bf16.msra.mxu0 %v864
    %1128 = vmatmul.bf16.gmra.mxu0 %v478
    %v1129 = vpop.f32.mrf.mxu0
    %v1130 = vadd.f32 0.0, %v1129
    %v1131 = vpop.f32.mrf.mxu0
    %1132 = vdwg.mxu0
    %1133 = vmatpush.bf16.msra.mxu0 %v984
    %1134 = vmatpush.bf16.msra.mxu0 %v976
    %1135 = vmatpush.bf16.msra.mxu0 %v968
    %1136 = vmatpush.bf16.msra.mxu0 %v960
    %1137 = vmatpush.bf16.msra.mxu0 %v952
    %1138 = vmatpush.bf16.msra.mxu0 %v944
    %1139 = vmatpush.bf16.msra.mxu0 %v936
    %1140 = vmatpush.bf16.msra.mxu0 %v928
    %1141 = vmatmul.bf16.gmra.mxu0 %v479
    %v1142 = vpop.f32.mrf.mxu0
    %v1143 = vadd.f32 %v1130, %v1142
    %v1144 = vpop.f32.mrf.mxu0
    %1145 = vdwg.mxu0
    %1146 = vmatpush.bf16.msra.mxu0 %v921
    %1147 = vmatpush.bf16.msra.mxu0 %v913
    %1148 = vmatpush.bf16.msra.mxu0 %v905
    %1149 = vmatpush.bf16.msra.mxu0 %v897
    %1150 = vmatpush.bf16.msra.mxu0 %v889
    %1151 = vmatpush.bf16.msra.mxu0 %v881
    %1152 = vmatpush.bf16.msra.mxu0 %v873
    %1153 = vmatpush.bf16.msra.mxu0 %v865
    %1154 = vmatmul.bf16.gmra.mxu0 %v478
    %v1155 = vpop.f32.mrf.mxu0
    %v1156 = vadd.f32 0.0, %v1155
    %v1157 = vpop.f32.mrf.mxu0
    %1158 = vdwg.mxu0
    %1159 = vmatpush.bf16.msra.mxu0 %v985
    %1160 = vmatpush.bf16.msra.mxu0 %v977
    %1161 = vmatpush.bf16.msra.mxu0 %v969
    %1162 = vmatpush.bf16.msra.mxu0 %v961
    %1163 = vmatpush.bf16.msra.mxu0 %v953
    %1164 = vmatpush.bf16.msra.mxu0 %v945
    %1165 = vmatpush.bf16.msra.mxu0 %v937
    %1166 = vmatpush.bf16.msra.mxu0 %v929
    %1167 = vmatmul.bf16.gmra.mxu0 %v479
    %v1168 = vpop.f32.mrf.mxu0
    %v1169 = vadd.f32 %v1156, %v1168
    %v1170 = vpop.f32.mrf.mxu0
    %1171 = vdwg.mxu0
    %1172 = vmatpush.bf16.msra.mxu0 %v922
    %1173 = vmatpush.bf16.msra.mxu0 %v914
    %1174 = vmatpush.bf16.msra.mxu0 %v906
    %1175 = vmatpush.bf16.msra.mxu0 %v898
    %1176 = vmatpush.bf16.msra.mxu0 %v890
    %1177 = vmatpush.bf16.msra.mxu0 %v882
    %1178 = vmatpush.bf16.msra.mxu0 %v874
    %1179 = vmatpush.bf16.msra.mxu0 %v866
    %1180 = vmatmul.bf16.gmra.mxu0 %v478
    %v1181 = vpop.f32.mrf.mxu0
    %v1182 = vadd.f32 0.0, %v1181
    %v1183 = vpop.f32.mrf.mxu0
    %1184 = vdwg.mxu0
    %1185 = vmatpush.bf16.msra.mxu0 %v986
    %1186 = vmatpush.bf16.msra.mxu0 %v978
    %1187 = vmatpush.bf16.msra.mxu0 %v970
    %1188 = vmatpush.bf16.msra.mxu0 %v962
    %1189 = vmatpush.bf16.msra.mxu0 %v954
    %1190 = vmatpush.bf16.msra.mxu0 %v946
    %1191 = vmatpush.bf16.msra.mxu0 %v938
    %1192 = vmatpush.bf16.msra.mxu0 %v930
    %1193 = vmatmul.bf16.gmra.mxu0 %v479
    %v1194 = vpop.f32.mrf.mxu0
    %v1195 = vadd.f32 %v1182, %v1194
    %v1196 = vpop.f32.mrf.mxu0
    %1197 = vdwg.mxu0
    %1198 = vmatpush.bf16.msra.mxu0 %v923
    %1199 = vmatpush.bf16.msra.mxu0 %v915
    %1200 = vmatpush.bf16.msra.mxu0 %v907
    %1201 = vmatpush.bf16.msra.mxu0 %v899
    %1202 = vmatpush.bf16.msra.mxu0 %v891
    %1203 = vmatpush.bf16.msra.mxu0 %v883
    %1204 = vmatpush.bf16.msra.mxu0 %v875
    %1205 = vmatpush.bf16.msra.mxu0 %v867
    %1206 = vmatmul.bf16.gmra.mxu0 %v478
    %v1207 = vpop.f32.mrf.mxu0
    %v1208 = vadd.f32 0.0, %v1207
    %v1209 = vpop.f32.mrf.mxu0
    %1210 = vdwg.mxu0
    %1211 = vmatpush.bf16.msra.mxu0 %v987
    %1212 = vmatpush.bf16.msra.mxu0 %v979
    %1213 = vmatpush.bf16.msra.mxu0 %v971
    %1214 = vmatpush.bf16.msra.mxu0 %v963
    %1215 = vmatpush.bf16.msra.mxu0 %v955
    %1216 = vmatpush.bf16.msra.mxu0 %v947
    %1217 = vmatpush.bf16.msra.mxu0 %v939
    %1218 = vmatpush.bf16.msra.mxu0 %v931
    %1219 = vmatmul.bf16.gmra.mxu0 %v479
    %v1220 = vpop.f32.mrf.mxu0
    %v1221 = vadd.f32 %v1208, %v1220
    %v1222 = vpop.f32.mrf.mxu0
    %1223 = vdwg.mxu0
    %1224 = vmatpush.bf16.msra.mxu0 %v924
    %1225 = vmatpush.bf16.msra.mxu0 %v916
    %1226 = vmatpush.bf16.msra.mxu0 %v908
    %1227 = vmatpush.bf16.msra.mxu0 %v900
    %1228 = vmatpush.bf16.msra.mxu0 %v892
    %1229 = vmatpush.bf16.msra.mxu0 %v884
    %1230 = vmatpush.bf16.msra.mxu0 %v876
    %1231 = vmatpush.bf16.msra.mxu0 %v868
    %1232 = vmatmul.bf16.gmra.mxu0 %v478
    %v1233 = vpop.f32.mrf.mxu0
    %v1234 = vadd.f32 0.0, %v1233
    %v1235 = vpop.f32.mrf.mxu0
    %1236 = vdwg.mxu0
    %1237 = vmatpush.bf16.msra.mxu0 %v988
    %1238 = vmatpush.bf16.msra.mxu0 %v980
    %1239 = vmatpush.bf16.msra.mxu0 %v972
    %1240 = vmatpush.bf16.msra.mxu0 %v964
    %1241 = vmatpush.bf16.msra.mxu0 %v956
    %1242 = vmatpush.bf16.msra.mxu0 %v948
    %1243 = vmatpush.bf16.msra.mxu0 %v940
    %1244 = vmatpush.bf16.msra.mxu0 %v932
    %1245 = vmatmul.bf16.gmra.mxu0 %v479
    %v1246 = vpop.f32.mrf.mxu0
    %v1247 = vadd.f32 %v1234, %v1246
    %v1248 = vpop.f32.mrf.mxu0
    %1249 = vdwg.mxu0
    %1250 = vmatpush.bf16.msra.mxu0 %v925
    %1251 = vmatpush.bf16.msra.mxu0 %v917
    %1252 = vmatpush.bf16.msra.mxu0 %v909
    %1253 = vmatpush.bf16.msra.mxu0 %v901
    %1254 = vmatpush.bf16.msra.mxu0 %v893
    %1255 = vmatpush.bf16.msra.mxu0 %v885
    %1256 = vmatpush.bf16.msra.mxu0 %v877
    %1257 = vmatpush.bf16.msra.mxu0 %v869
    %1258 = vmatmul.bf16.gmra.mxu0 %v478
    %v1259 = vpop.f32.mrf.mxu0
    %v1260 = vadd.f32 0.0, %v1259
    %v1261 = vpop.f32.mrf.mxu0
    %1262 = vdwg.mxu0
    %1263 = vmatpush.bf16.msra.mxu0 %v989
    %1264 = vmatpush.bf16.msra.mxu0 %v981
    %1265 = vmatpush.bf16.msra.mxu0 %v973
    %1266 = vmatpush.bf16.msra.mxu0 %v965
    %1267 = vmatpush.bf16.msra.mxu0 %v957
    %1268 = vmatpush.bf16.msra.mxu0 %v949
    %1269 = vmatpush.bf16.msra.mxu0 %v941
    %1270 = vmatpush.bf16.msra.mxu0 %v933
    %1271 = vmatmul.bf16.gmra.mxu0 %v479
    %v1272 = vpop.f32.mrf.mxu0
    %v1273 = vadd.f32 %v1260, %v1272
    %v1274 = vpop.f32.mrf.mxu0
    %1275 = vdwg.mxu0
    %1276 = vmatpush.bf16.msra.mxu0 %v926
    %1277 = vmatpush.bf16.msra.mxu0 %v918
    %1278 = vmatpush.bf16.msra.mxu0 %v910
    %1279 = vmatpush.bf16.msra.mxu0 %v902
    %1280 = vmatpush.bf16.msra.mxu0 %v894
    %1281 = vmatpush.bf16.msra.mxu0 %v886
    %1282 = vmatpush.bf16.msra.mxu0 %v878
    %1283 = vmatpush.bf16.msra.mxu0 %v870
    %1284 = vmatmul.bf16.gmra.mxu0 %v478
    %v1285 = vpop.f32.mrf.mxu0
    %v1286 = vadd.f32 0.0, %v1285
    %v1287 = vpop.f32.mrf.mxu0
    %1288 = vdwg.mxu0
    %1289 = vmatpush.bf16.msra.mxu0 %v990
    %1290 = vmatpush.bf16.msra.mxu0 %v982
    %1291 = vmatpush.bf16.msra.mxu0 %v974
    %1292 = vmatpush.bf16.msra.mxu0 %v966
    %1293 = vmatpush.bf16.msra.mxu0 %v958
    %1294 = vmatpush.bf16.msra.mxu0 %v950
    %1295 = vmatpush.bf16.msra.mxu0 %v942
    %1296 = vmatpush.bf16.msra.mxu0 %v934
    %1297 = vmatmul.bf16.gmra.mxu0 %v479
    %v1298 = vpop.f32.mrf.mxu0
    %v1299 = vadd.f32 %v1286, %v1298
    %v1300 = vpop.f32.mrf.mxu0
    %1301 = vdwg.mxu0
    %1302 = vmatpush.bf16.msra.mxu0 %v927
    %1303 = vmatpush.bf16.msra.mxu0 %v919
    %1304 = vmatpush.bf16.msra.mxu0 %v911
    %1305 = vmatpush.bf16.msra.mxu0 %v903
    %1306 = vmatpush.bf16.msra.mxu0 %v895
    %1307 = vmatpush.bf16.msra.mxu0 %v887
    %1308 = vmatpush.bf16.msra.mxu0 %v879
    %1309 = vmatpush.bf16.msra.mxu0 %v871
    %1310 = vmatmul.bf16.gmra.mxu0 %v478
    %v1311 = vpop.f32.mrf.mxu0
    %v1312 = vadd.f32 0.0, %v1311
    %v1313 = vpop.f32.mrf.mxu0
    %1314 = vdwg.mxu0
    %1315 = vmatpush.bf16.msra.mxu0 %v991
    %1316 = vmatpush.bf16.msra.mxu0 %v983
    %1317 = vmatpush.bf16.msra.mxu0 %v975
    %1318 = vmatpush.bf16.msra.mxu0 %v967
    %1319 = vmatpush.bf16.msra.mxu0 %v959
    %1320 = vmatpush.bf16.msra.mxu0 %v951
    %1321 = vmatpush.bf16.msra.mxu0 %v943
    %1322 = vmatpush.bf16.msra.mxu0 %v935
    %1323 = vmatmul.bf16.gmra.mxu0 %v479
    %v1324 = vpop.f32.mrf.mxu0
    %v1325 = vadd.f32 %v1312, %v1324
    %v1326 = vpop.f32.mrf.mxu0
    %1327 = vdwg.mxu0
    %v1328 = vadd.f32 %v470, %v1143
    %v1329 = vadd.f32 %v471, %v1169
    %v1330 = vadd.f32 %v472, %v1195
    %v1331 = vadd.f32 %v473, %v1221
    %v1332 = vadd.f32 %v474, %v1247
    %v1333 = vadd.f32 %v475, %v1273
    %v1334 = vadd.f32 %v476, %v1299
    %v1335 = vadd.f32 %v477, %v1325
    %v1336 = vadd.f32 %v1328, %v222
    %v1337 = vadd.f32 %v1329, %v223
    %v1338 = vadd.f32 %v1330, %v224
    %v1339 = vadd.f32 %v1331, %v225
    %v1340 = vadd.f32 %v1332, %v226
    %v1341 = vadd.f32 %v1333, %v227
    %v1342 = vadd.f32 %v1334, %v228
    %v1343 = vadd.f32 %v1335, %v229
    %v1344 = vxor.u32 %v1336, 2147483648
    %v1345 = vxor.u32 %v1337, 2147483648
    %v1346 = vmul.f32 %v1344, 1.442695
    %v1347 = vpow.pop %v1346
    %v1348 = vmul.f32 %v1345, 1.442695
    %v1349 = vpow.pop %v1348
    %v1350 = vadd.f32 %v1347, 1.0
    %v1351 = vadd.f32 %v1349, 1.0
    %v1352 = vrcp.pop %v1350
    %v1353 = vmul.f32 %v1350, %v1352
    %v1354 = vsub.f32 1.0, %v1353
    %v1355 = vmul.f32 %v1352, %v1354
    %v1356 = vadd.f32 %v1352, %v1355
    %vm1357 = vweird.f32 %v1350
    %vm1358 = vweird.f32 %v1352
    %vm1359 = vmor %vm1357, %vm1358
    %v1360 = vsel %vm1359, %v1352, %v1356
    %v1361 = vand.u32 2147483647, %v1350
    %vm1362 = vcmp.eq.f32.partialorder %v1361, 8.507059e+37
    %v1363 = vand.u32 %v1350, 2147483648
    %v1364 = vor.u32 1.1754944e-38, %v1363
    %v1365 = vsel %vm1362, %v1364, %v1360
    %v1366 = vmul.f32 1.0, %v1365
    %v1367 = vrcp.pop %v1351
    %v1368 = vmul.f32 %v1351, %v1367
    %v1369 = vsub.f32 1.0, %v1368
    %v1370 = vmul.f32 %v1367, %v1369
    %v1371 = vadd.f32 %v1367, %v1370
    %vm1372 = vweird.f32 %v1351
    %vm1373 = vweird.f32 %v1367
    %vm1374 = vmor %vm1372, %vm1373
    %v1375 = vsel %vm1374, %v1367, %v1371
    %v1376 = vand.u32 2147483647, %v1351
    %vm1377 = vcmp.eq.f32.partialorder %v1376, 8.507059e+37
    %v1378 = vand.u32 %v1351, 2147483648
    %v1379 = vor.u32 1.1754944e-38, %v1378
    %v1380 = vsel %vm1377, %v1379, %v1375
    %v1381 = vmul.f32 1.0, %v1380
    %v1382 = vxor.u32 %v1338, 2147483648
    %v1383 = vxor.u32 %v1339, 2147483648
    %v1384 = vmul.f32 %v1382, 1.442695
    %v1385 = vpow.pop %v1384
    %v1386 = vmul.f32 %v1383, 1.442695
    %v1387 = vpow.pop %v1386
    %v1388 = vadd.f32 %v1385, 1.0
    %v1389 = vadd.f32 %v1387, 1.0
    %v1390 = vrcp.pop %v1388
    %v1391 = vmul.f32 %v1388, %v1390
    %v1392 = vsub.f32 1.0, %v1391
    %v1393 = vmul.f32 %v1390, %v1392
    %v1394 = vadd.f32 %v1390, %v1393
    %vm1395 = vweird.f32 %v1388
    %vm1396 = vweird.f32 %v1390
    %vm1397 = vmor %vm1395, %vm1396
    %v1398 = vsel %vm1397, %v1390, %v1394
    %v1399 = vand.u32 2147483647, %v1388
    %vm1400 = vcmp.eq.f32.partialorder %v1399, 8.507059e+37
    %v1401 = vand.u32 %v1388, 2147483648
    %v1402 = vor.u32 1.1754944e-38, %v1401
    %v1403 = vsel %vm1400, %v1402, %v1398
    %v1404 = vmul.f32 1.0, %v1403
    %v1405 = vrcp.pop %v1389
    %v1406 = vmul.f32 %v1389, %v1405
    %v1407 = vsub.f32 1.0, %v1406
    %v1408 = vmul.f32 %v1405, %v1407
    %v1409 = vadd.f32 %v1405, %v1408
    %vm1410 = vweird.f32 %v1389
    %vm1411 = vweird.f32 %v1405
    %vm1412 = vmor %vm1410, %vm1411
    %v1413 = vsel %vm1412, %v1405, %v1409
    %v1414 = vand.u32 2147483647, %v1389
    %vm1415 = vcmp.eq.f32.partialorder %v1414, 8.507059e+37
    %v1416 = vand.u32 %v1389, 2147483648
    %v1417 = vor.u32 1.1754944e-38, %v1416
    %v1418 = vsel %vm1415, %v1417, %v1413
    %v1419 = vmul.f32 1.0, %v1418
    %v1420 = vtanh.pop %v1340
    %v1421 = vtanh.pop %v1341
    %v1422 = vxor.u32 %v1342, 2147483648
    %v1423 = vxor.u32 %v1343, 2147483648
    %v1424 = vmul.f32 %v1422, 1.442695
    %v1425 = vpow.pop %v1424
    %v1426 = vmul.f32 %v1423, 1.442695
    %v1427 = vpow.pop %v1426
    %v1428 = vadd.f32 %v1425, 1.0
    %v1429 = vadd.f32 %v1427, 1.0
    %v1430 = vrcp.pop %v1428
    %v1431 = vmul.f32 %v1428, %v1430
    %v1432 = vsub.f32 1.0, %v1431
    %v1433 = vmul.f32 %v1430, %v1432
    %v1434 = vadd.f32 %v1430, %v1433
    %vm1435 = vweird.f32 %v1428
    %vm1436 = vweird.f32 %v1430
    %vm1437 = vmor %vm1435, %vm1436
    %v1438 = vsel %vm1437, %v1430, %v1434
    %v1439 = vand.u32 2147483647, %v1428
    %vm1440 = vcmp.eq.f32.partialorder %v1439, 8.507059e+37
    %v1441 = vand.u32 %v1428, 2147483648
    %v1442 = vor.u32 1.1754944e-38, %v1441
    %v1443 = vsel %vm1440, %v1442, %v1438
    %v1444 = vmul.f32 1.0, %v1443
    %v1445 = vrcp.pop %v1429
    %v1446 = vmul.f32 %v1429, %v1445
    %v1447 = vsub.f32 1.0, %v1446
    %v1448 = vmul.f32 %v1445, %v1447
    %v1449 = vadd.f32 %v1445, %v1448
    %vm1450 = vweird.f32 %v1429
    %vm1451 = vweird.f32 %v1445
    %vm1452 = vmor %vm1450, %vm1451
    %v1453 = vsel %vm1452, %v1445, %v1449
    %v1454 = vand.u32 2147483647, %v1429
    %vm1455 = vcmp.eq.f32.partialorder %v1454, 8.507059e+37
    %v1456 = vand.u32 %v1429, 2147483648
    %v1457 = vor.u32 1.1754944e-38, %v1456
    %v1458 = vsel %vm1455, %v1457, %v1453
    %v1459 = vmul.f32 1.0, %v1458
    %v1460 = vmul.f32 %v1404, %v394
    %v1461 = vmul.f32 %v1419, %v395
    %v1462 = vmul.f32 %v1366, %v1420
    %v1463 = vmul.f32 %v1381, %v1421
    %v1464 = vadd.f32 %v1460, %v1462
    %v1465 = vadd.f32 %v1461, %v1463
    %v1466 = vtanh.pop %v1464
    %v1467 = vtanh.pop %v1465
    %v1468 = vmul.f32 %v1444, %v1466
    %v1469 = vmul.f32 %v1459, %v1467
    %v1470 = vmul.f32 %v468, %v241
    %v1471 = vmul.f32 %v447, %v245
    %v1472 = vadd.f32 %v1470, %v1471
    %v1473 = vadd.f32 %v1472, %v249
    %v1474 = vxor.u32 %v1473, 2147483648
    %v1475 = vmul.f32 %v1474, 1.442695
    %v1476 = vpow.pop %v1475
    %v1477 = vadd.f32 %v1476, 1.0
    %v1478 = vrcp.pop %v1477
    %v1479 = vmul.f32 %v1477, %v1478
    %v1480 = vsub.f32 1.0, %v1479
    %v1481 = vmul.f32 %v1478, %v1480
    %v1482 = vadd.f32 %v1478, %v1481
    %vm1483 = vweird.f32 %v1477
    %vm1484 = vweird.f32 %v1478
    %vm1485 = vmor %vm1483, %vm1484
    %v1486 = vsel %vm1485, %v1478, %v1482
    %v1487 = vand.u32 2147483647, %v1477
    %vm1488 = vcmp.eq.f32.partialorder %v1487, 8.507059e+37
    %v1489 = vand.u32 %v1477, 2147483648
    %v1490 = vor.u32 1.1754944e-38, %v1489
    %v1491 = vsel %vm1488, %v1490, %v1486
    %v1492 = vmul.f32 1.0, %v1491
    %v1493 = vmul.f32 %v468, %v242
    %v1494 = vmul.f32 %v447, %v246
    %v1495 = vadd.f32 %v1493, %v1494
    %v1496 = vadd.f32 %v1495, %v250
    %v1497 = vxor.u32 %v1496, 2147483648
    %v1498 = vmul.f32 %v1497, 1.442695
    %v1499 = vpow.pop %v1498
    %v1500 = vadd.f32 %v1499, 1.0
    %v1501 = vrcp.pop %v1500
    %v1502 = vmul.f32 %v1500, %v1501
    %v1503 = vsub.f32 1.0, %v1502
    %v1504 = vmul.f32 %v1501, %v1503
    %v1505 = vadd.f32 %v1501, %v1504
    %vm1506 = vweird.f32 %v1500
    %vm1507 = vweird.f32 %v1501
    %vm1508 = vmor %vm1506, %vm1507
    %v1509 = vsel %vm1508, %v1501, %v1505
    %v1510 = vand.u32 2147483647, %v1500
    %vm1511 = vcmp.eq.f32.partialorder %v1510, 8.507059e+37
    %v1512 = vand.u32 %v1500, 2147483648
    %v1513 = vor.u32 1.1754944e-38, %v1512
    %v1514 = vsel %vm1511, %v1513, %v1509
    %v1515 = vmul.f32 1.0, %v1514
    %v1516 = vmul.f32 %v468, %v243
    %v1517 = vmul.f32 %v447, %v247
    %v1518 = vadd.f32 %v1516, %v1517
    %v1519 = vadd.f32 %v1518, %v251
    %v1520 = vtanh.pop %v1519
    %v1521 = vmul.f32 %v468, %v244
    %v1522 = vmul.f32 %v447, %v248
    %v1523 = vadd.f32 %v1521, %v1522
    %v1524 = vadd.f32 %v1523, %v252
    %v1525 = vxor.u32 %v1524, 2147483648
    %v1526 = vmul.f32 %v1525, 1.442695
    %v1527 = vpow.pop %v1526
    %v1528 = vadd.f32 %v1527, 1.0
    %v1529 = vrcp.pop %v1528
    %v1530 = vmul.f32 %v1528, %v1529
    %v1531 = vsub.f32 1.0, %v1530
    %v1532 = vmul.f32 %v1529, %v1531
    %v1533 = vadd.f32 %v1529, %v1532
    %vm1534 = vweird.f32 %v1528
    %vm1535 = vweird.f32 %v1529
    %vm1536 = vmor %vm1534, %vm1535
    %v1537 = vsel %vm1536, %v1529, %v1533
    %v1538 = vand.u32 2147483647, %v1528
    %vm1539 = vcmp.eq.f32.partialorder %v1538, 8.507059e+37
    %v1540 = vand.u32 %v1528, 2147483648
    %v1541 = vor.u32 1.1754944e-38, %v1540
    %v1542 = vsel %vm1539, %v1541, %v1537
    %v1543 = vmul.f32 1.0, %v1542
    %v1544 = vmul.f32 %v1515, %v445
    %v1545 = vmul.f32 %v1492, %v1520
    %v1546 = vadd.f32 %v1544, %v1545
    %v1547 = vtanh.pop %v1546
    %v1548 = vmul.f32 %v1543, %v1547
    %1550 = vrot.lane.b32.xlu0 %v1548, 1
    %v1551 = vpop.permute.xlu0 %1550
    %vm1553 = vcmask 15368
    %1554 = vst.msk [vmem:[#allocation2] sm:$0xff] %vm1553, %v1551
    %1555 = vst.msk [vmem:[%s454] sm:$0xff] %vm1553, %v1548
    %1556 = vrot.lane.b32.xlu0 %v1548, 127
    %v1557 = vpop.permute.xlu0 %1556
    %1559 = vst.msk [vmem:[%s459] sm:$0xff] %vm1553, %v1557
    %1560 = vrot.lane.b32.xlu0 %v1548, 126
    %v1561 = vpop.permute.xlu0 %1560
    %1563 = vst.msk [vmem:[%s464] sm:$0xff] %vm1553, %v1561
    %1564 = vset.pattern.permute.xlu0 2
    %1565 = vperm.xlu0 %1564, %v72
    %v1566 = vpop.permute.xlu0 %1565
    %v1568 = vmul.f32 %v1566, %v204
    %v1569 = vmul.f32 %v1566, %v205
    %v1570 = vmul.f32 %v1566, %v206
    %v1571 = vmul.f32 %v1566, %v207
    %v1572 = vmul.f32 %v1566, %v208
    %v1573 = vmul.f32 %v1566, %v209
    %v1574 = vmul.f32 %v1566, %v210
    %v1575 = vmul.f32 %v1566, %v211
    %v1576 = vpack.c.bf16 %v1468, %v1468
    %v1577 = vpack.c.bf16 %v1469, %v1469
    %1578 = vmatpush.bf16.msra.mxu0 %v920
    %1579 = vmatpush.bf16.msra.mxu0 %v912
    %1580 = vmatpush.bf16.msra.mxu0 %v904
    %1581 = vmatpush.bf16.msra.mxu0 %v896
    %1582 = vmatpush.bf16.msra.mxu0 %v888
    %1583 = vmatpush.bf16.msra.mxu0 %v880
    %1584 = vmatpush.bf16.msra.mxu0 %v872
    %1585 = vmatpush.bf16.msra.mxu0 %v864
    %1586 = vmatmul.bf16.gmra.mxu0 %v1576
    %v1587 = vpop.f32.mrf.mxu0
    %v1588 = vadd.f32 0.0, %v1587
    %v1589 = vpop.f32.mrf.mxu0
    %1590 = vdwg.mxu0
    %1591 = vmatpush.bf16.msra.mxu0 %v984
    %1592 = vmatpush.bf16.msra.mxu0 %v976
    %1593 = vmatpush.bf16.msra.mxu0 %v968
    %1594 = vmatpush.bf16.msra.mxu0 %v960
    %1595 = vmatpush.bf16.msra.mxu0 %v952
    %1596 = vmatpush.bf16.msra.mxu0 %v944
    %1597 = vmatpush.bf16.msra.mxu0 %v936
    %1598 = vmatpush.bf16.msra.mxu0 %v928
    %1599 = vmatmul.bf16.gmra.mxu0 %v1577
    %v1600 = vpop.f32.mrf.mxu0
    %v1601 = vadd.f32 %v1588, %v1600
    %v1602 = vpop.f32.mrf.mxu0
    %1603 = vdwg.mxu0
    %1604 = vmatpush.bf16.msra.mxu0 %v921
    %1605 = vmatpush.bf16.msra.mxu0 %v913
    %1606 = vmatpush.bf16.msra.mxu0 %v905
    %1607 = vmatpush.bf16.msra.mxu0 %v897
    %1608 = vmatpush.bf16.msra.mxu0 %v889
    %1609 = vmatpush.bf16.msra.mxu0 %v881
    %1610 = vmatpush.bf16.msra.mxu0 %v873
    %1611 = vmatpush.bf16.msra.mxu0 %v865
    %1612 = vmatmul.bf16.gmra.mxu0 %v1576
    %v1613 = vpop.f32.mrf.mxu0
    %v1614 = vadd.f32 0.0, %v1613
    %v1615 = vpop.f32.mrf.mxu0
    %1616 = vdwg.mxu0
    %1617 = vmatpush.bf16.msra.mxu0 %v985
    %1618 = vmatpush.bf16.msra.mxu0 %v977
    %1619 = vmatpush.bf16.msra.mxu0 %v969
    %1620 = vmatpush.bf16.msra.mxu0 %v961
    %1621 = vmatpush.bf16.msra.mxu0 %v953
    %1622 = vmatpush.bf16.msra.mxu0 %v945
    %1623 = vmatpush.bf16.msra.mxu0 %v937
    %1624 = vmatpush.bf16.msra.mxu0 %v929
    %1625 = vmatmul.bf16.gmra.mxu0 %v1577
    %v1626 = vpop.f32.mrf.mxu0
    %v1627 = vadd.f32 %v1614, %v1626
    %v1628 = vpop.f32.mrf.mxu0
    %1629 = vdwg.mxu0
    %1630 = vmatpush.bf16.msra.mxu0 %v922
    %1631 = vmatpush.bf16.msra.mxu0 %v914
    %1632 = vmatpush.bf16.msra.mxu0 %v906
    %1633 = vmatpush.bf16.msra.mxu0 %v898
    %1634 = vmatpush.bf16.msra.mxu0 %v890
    %1635 = vmatpush.bf16.msra.mxu0 %v882
    %1636 = vmatpush.bf16.msra.mxu0 %v874
    %1637 = vmatpush.bf16.msra.mxu0 %v866
    %1638 = vmatmul.bf16.gmra.mxu0 %v1576
    %v1639 = vpop.f32.mrf.mxu0
    %v1640 = vadd.f32 0.0, %v1639
    %v1641 = vpop.f32.mrf.mxu0
    %1642 = vdwg.mxu0
    %1643 = vmatpush.bf16.msra.mxu0 %v986
    %1644 = vmatpush.bf16.msra.mxu0 %v978
    %1645 = vmatpush.bf16.msra.mxu0 %v970
    %1646 = vmatpush.bf16.msra.mxu0 %v962
    %1647 = vmatpush.bf16.msra.mxu0 %v954
    %1648 = vmatpush.bf16.msra.mxu0 %v946
    %1649 = vmatpush.bf16.msra.mxu0 %v938
    %1650 = vmatpush.bf16.msra.mxu0 %v930
    %1651 = vmatmul.bf16.gmra.mxu0 %v1577
    %v1652 = vpop.f32.mrf.mxu0
    %v1653 = vadd.f32 %v1640, %v1652
    %v1654 = vpop.f32.mrf.mxu0
    %1655 = vdwg.mxu0
    %1656 = vmatpush.bf16.msra.mxu0 %v923
    %1657 = vmatpush.bf16.msra.mxu0 %v915
    %1658 = vmatpush.bf16.msra.mxu0 %v907
    %1659 = vmatpush.bf16.msra.mxu0 %v899
    %1660 = vmatpush.bf16.msra.mxu0 %v891
    %1661 = vmatpush.bf16.msra.mxu0 %v883
    %1662 = vmatpush.bf16.msra.mxu0 %v875
    %1663 = vmatpush.bf16.msra.mxu0 %v867
    %1664 = vmatmul.bf16.gmra.mxu0 %v1576
    %v1665 = vpop.f32.mrf.mxu0
    %v1666 = vadd.f32 0.0, %v1665
    %v1667 = vpop.f32.mrf.mxu0
    %1668 = vdwg.mxu0
    %1669 = vmatpush.bf16.msra.mxu0 %v987
    %1670 = vmatpush.bf16.msra.mxu0 %v979
    %1671 = vmatpush.bf16.msra.mxu0 %v971
    %1672 = vmatpush.bf16.msra.mxu0 %v963
    %1673 = vmatpush.bf16.msra.mxu0 %v955
    %1674 = vmatpush.bf16.msra.mxu0 %v947
    %1675 = vmatpush.bf16.msra.mxu0 %v939
    %1676 = vmatpush.bf16.msra.mxu0 %v931
    %1677 = vmatmul.bf16.gmra.mxu0 %v1577
    %v1678 = vpop.f32.mrf.mxu0
    %v1679 = vadd.f32 %v1666, %v1678
    %v1680 = vpop.f32.mrf.mxu0
    %1681 = vdwg.mxu0
    %1682 = vmatpush.bf16.msra.mxu0 %v924
    %1683 = vmatpush.bf16.msra.mxu0 %v916
    %1684 = vmatpush.bf16.msra.mxu0 %v908
    %1685 = vmatpush.bf16.msra.mxu0 %v900
    %1686 = vmatpush.bf16.msra.mxu0 %v892
    %1687 = vmatpush.bf16.msra.mxu0 %v884
    %1688 = vmatpush.bf16.msra.mxu0 %v876
    %1689 = vmatpush.bf16.msra.mxu0 %v868
    %1690 = vmatmul.bf16.gmra.mxu0 %v1576
    %v1691 = vpop.f32.mrf.mxu0
    %v1692 = vadd.f32 0.0, %v1691
    %v1693 = vpop.f32.mrf.mxu0
    %1694 = vdwg.mxu0
    %1695 = vmatpush.bf16.msra.mxu0 %v988
    %1696 = vmatpush.bf16.msra.mxu0 %v980
    %1697 = vmatpush.bf16.msra.mxu0 %v972
    %1698 = vmatpush.bf16.msra.mxu0 %v964
    %1699 = vmatpush.bf16.msra.mxu0 %v956
    %1700 = vmatpush.bf16.msra.mxu0 %v948
    %1701 = vmatpush.bf16.msra.mxu0 %v940
    %1702 = vmatpush.bf16.msra.mxu0 %v932
    %1703 = vmatmul.bf16.gmra.mxu0 %v1577
    %v1704 = vpop.f32.mrf.mxu0
    %v1705 = vadd.f32 %v1692, %v1704
    %v1706 = vpop.f32.mrf.mxu0
    %1707 = vdwg.mxu0
    %1708 = vmatpush.bf16.msra.mxu0 %v925
    %1709 = vmatpush.bf16.msra.mxu0 %v917
    %1710 = vmatpush.bf16.msra.mxu0 %v909
    %1711 = vmatpush.bf16.msra.mxu0 %v901
    %1712 = vmatpush.bf16.msra.mxu0 %v893
    %1713 = vmatpush.bf16.msra.mxu0 %v885
    %1714 = vmatpush.bf16.msra.mxu0 %v877
    %1715 = vmatpush.bf16.msra.mxu0 %v869
    %1716 = vmatmul.bf16.gmra.mxu0 %v1576
    %v1717 = vpop.f32.mrf.mxu0
    %v1718 = vadd.f32 0.0, %v1717
    %v1719 = vpop.f32.mrf.mxu0
    %1720 = vdwg.mxu0
    %1721 = vmatpush.bf16.msra.mxu0 %v989
    %1722 = vmatpush.bf16.msra.mxu0 %v981
    %1723 = vmatpush.bf16.msra.mxu0 %v973
    %1724 = vmatpush.bf16.msra.mxu0 %v965
    %1725 = vmatpush.bf16.msra.mxu0 %v957
    %1726 = vmatpush.bf16.msra.mxu0 %v949
    %1727 = vmatpush.bf16.msra.mxu0 %v941
    %1728 = vmatpush.bf16.msra.mxu0 %v933
    %1729 = vmatmul.bf16.gmra.mxu0 %v1577
    %v1730 = vpop.f32.mrf.mxu0
    %v1731 = vadd.f32 %v1718, %v1730
    %v1732 = vpop.f32.mrf.mxu0
    %1733 = vdwg.mxu0
    %1734 = vmatpush.bf16.msra.mxu0 %v926
    %1735 = vmatpush.bf16.msra.mxu0 %v918
    %1736 = vmatpush.bf16.msra.mxu0 %v910
    %1737 = vmatpush.bf16.msra.mxu0 %v902
    %1738 = vmatpush.bf16.msra.mxu0 %v894
    %1739 = vmatpush.bf16.msra.mxu0 %v886
    %1740 = vmatpush.bf16.msra.mxu0 %v878
    %1741 = vmatpush.bf16.msra.mxu0 %v870
    %1742 = vmatmul.bf16.gmra.mxu0 %v1576
    %v1743 = vpop.f32.mrf.mxu0
    %v1744 = vadd.f32 0.0, %v1743
    %v1745 = vpop.f32.mrf.mxu0
    %1746 = vdwg.mxu0
    %1747 = vmatpush.bf16.msra.mxu0 %v990
    %1748 = vmatpush.bf16.msra.mxu0 %v982
    %1749 = vmatpush.bf16.msra.mxu0 %v974
    %1750 = vmatpush.bf16.msra.mxu0 %v966
    %1751 = vmatpush.bf16.msra.mxu0 %v958
    %1752 = vmatpush.bf16.msra.mxu0 %v950
    %1753 = vmatpush.bf16.msra.mxu0 %v942
    %1754 = vmatpush.bf16.msra.mxu0 %v934
    %1755 = vmatmul.bf16.gmra.mxu0 %v1577
    %v1756 = vpop.f32.mrf.mxu0
    %v1757 = vadd.f32 %v1744, %v1756
    %v1758 = vpop.f32.mrf.mxu0
    %1759 = vdwg.mxu0
    %1760 = vmatpush.bf16.msra.mxu0 %v927
    %1761 = vmatpush.bf16.msra.mxu0 %v919
    %1762 = vmatpush.bf16.msra.mxu0 %v911
    %1763 = vmatpush.bf16.msra.mxu0 %v903
    %1764 = vmatpush.bf16.msra.mxu0 %v895
    %1765 = vmatpush.bf16.msra.mxu0 %v887
    %1766 = vmatpush.bf16.msra.mxu0 %v879
    %1767 = vmatpush.bf16.msra.mxu0 %v871
    %1768 = vmatmul.bf16.gmra.mxu0 %v1576
    %v1769 = vpop.f32.mrf.mxu0
    %v1770 = vadd.f32 0.0, %v1769
    %v1771 = vpop.f32.mrf.mxu0
    %1772 = vdwg.mxu0
    %1773 = vmatpush.bf16.msra.mxu0 %v991
    %1774 = vmatpush.bf16.msra.mxu0 %v983
    %1775 = vmatpush.bf16.msra.mxu0 %v975
    %1776 = vmatpush.bf16.msra.mxu0 %v967
    %1777 = vmatpush.bf16.msra.mxu0 %v959
    %1778 = vmatpush.bf16.msra.mxu0 %v951
    %1779 = vmatpush.bf16.msra.mxu0 %v943
    %1780 = vmatpush.bf16.msra.mxu0 %v935
    %1781 = vmatmul.bf16.gmra.mxu0 %v1577
    %v1782 = vpop.f32.mrf.mxu0
    %v1783 = vadd.f32 %v1770, %v1782
    %v1784 = vpop.f32.mrf.mxu0
    %1785 = vdwg.mxu0
    %v1786 = vadd.f32 %v1568, %v1601
    %v1787 = vadd.f32 %v1569, %v1627
    %v1788 = vadd.f32 %v1570, %v1653
    %v1789 = vadd.f32 %v1571, %v1679
    %v1790 = vadd.f32 %v1572, %v1705
    %v1791 = vadd.f32 %v1573, %v1731
    %v1792 = vadd.f32 %v1574, %v1757
    %v1793 = vadd.f32 %v1575, %v1783
    %v1794 = vadd.f32 %v1786, %v222
    %v1795 = vadd.f32 %v1787, %v223
    %v1796 = vadd.f32 %v1788, %v224
    %v1797 = vadd.f32 %v1789, %v225
    %v1798 = vadd.f32 %v1790, %v226
    %v1799 = vadd.f32 %v1791, %v227
    %v1800 = vadd.f32 %v1792, %v228
    %v1801 = vadd.f32 %v1793, %v229
    %v1802 = vxor.u32 %v1794, 2147483648
    %v1803 = vxor.u32 %v1795, 2147483648
    %v1804 = vmul.f32 %v1802, 1.442695
    %v1805 = vpow.pop %v1804
    %v1806 = vmul.f32 %v1803, 1.442695
    %v1807 = vpow.pop %v1806
    %v1808 = vadd.f32 %v1805, 1.0
    %v1809 = vadd.f32 %v1807, 1.0
    %v1810 = vrcp.pop %v1808
    %v1811 = vmul.f32 %v1808, %v1810
    %v1812 = vsub.f32 1.0, %v1811
    %v1813 = vmul.f32 %v1810, %v1812
    %v1814 = vadd.f32 %v1810, %v1813
    %vm1815 = vweird.f32 %v1808
    %vm1816 = vweird.f32 %v1810
    %vm1817 = vmor %vm1815, %vm1816
    %v1818 = vsel %vm1817, %v1810, %v1814
    %v1819 = vand.u32 2147483647, %v1808
    %vm1820 = vcmp.eq.f32.partialorder %v1819, 8.507059e+37
    %v1821 = vand.u32 %v1808, 2147483648
    %v1822 = vor.u32 1.1754944e-38, %v1821
    %v1823 = vsel %vm1820, %v1822, %v1818
    %v1824 = vmul.f32 1.0, %v1823
    %v1825 = vrcp.pop %v1809
    %v1826 = vmul.f32 %v1809, %v1825
    %v1827 = vsub.f32 1.0, %v1826
    %v1828 = vmul.f32 %v1825, %v1827
    %v1829 = vadd.f32 %v1825, %v1828
    %vm1830 = vweird.f32 %v1809
    %vm1831 = vweird.f32 %v1825
    %vm1832 = vmor %vm1830, %vm1831
    %v1833 = vsel %vm1832, %v1825, %v1829
    %v1834 = vand.u32 2147483647, %v1809
    %vm1835 = vcmp.eq.f32.partialorder %v1834, 8.507059e+37
    %v1836 = vand.u32 %v1809, 2147483648
    %v1837 = vor.u32 1.1754944e-38, %v1836
    %v1838 = vsel %vm1835, %v1837, %v1833
    %v1839 = vmul.f32 1.0, %v1838
    %v1840 = vxor.u32 %v1796, 2147483648
    %v1841 = vxor.u32 %v1797, 2147483648
    %v1842 = vmul.f32 %v1840, 1.442695
    %v1843 = vpow.pop %v1842
    %v1844 = vmul.f32 %v1841, 1.442695
    %v1845 = vpow.pop %v1844
    %v1846 = vadd.f32 %v1843, 1.0
    %v1847 = vadd.f32 %v1845, 1.0
    %v1848 = vrcp.pop %v1846
    %v1849 = vmul.f32 %v1846, %v1848
    %v1850 = vsub.f32 1.0, %v1849
    %v1851 = vmul.f32 %v1848, %v1850
    %v1852 = vadd.f32 %v1848, %v1851
    %vm1853 = vweird.f32 %v1846
    %vm1854 = vweird.f32 %v1848
    %vm1855 = vmor %vm1853, %vm1854
    %v1856 = vsel %vm1855, %v1848, %v1852
    %v1857 = vand.u32 2147483647, %v1846
    %vm1858 = vcmp.eq.f32.partialorder %v1857, 8.507059e+37
    %v1859 = vand.u32 %v1846, 2147483648
    %v1860 = vor.u32 1.1754944e-38, %v1859
    %v1861 = vsel %vm1858, %v1860, %v1856
    %v1862 = vmul.f32 1.0, %v1861
    %v1863 = vrcp.pop %v1847
    %v1864 = vmul.f32 %v1847, %v1863
    %v1865 = vsub.f32 1.0, %v1864
    %v1866 = vmul.f32 %v1863, %v1865
    %v1867 = vadd.f32 %v1863, %v1866
    %vm1868 = vweird.f32 %v1847
    %vm1869 = vweird.f32 %v1863
    %vm1870 = vmor %vm1868, %vm1869
    %v1871 = vsel %vm1870, %v1863, %v1867
    %v1872 = vand.u32 2147483647, %v1847
    %vm1873 = vcmp.eq.f32.partialorder %v1872, 8.507059e+37
    %v1874 = vand.u32 %v1847, 2147483648
    %v1875 = vor.u32 1.1754944e-38, %v1874
    %v1876 = vsel %vm1873, %v1875, %v1871
    %v1877 = vmul.f32 1.0, %v1876
    %v1878 = vtanh.pop %v1798
    %v1879 = vtanh.pop %v1799
    %v1880 = vxor.u32 %v1800, 2147483648
    %v1881 = vxor.u32 %v1801, 2147483648
    %v1882 = vmul.f32 %v1880, 1.442695
    %v1883 = vpow.pop %v1882
    %v1884 = vmul.f32 %v1881, 1.442695
    %v1885 = vpow.pop %v1884
    %v1886 = vadd.f32 %v1883, 1.0
    %v1887 = vadd.f32 %v1885, 1.0
    %v1888 = vrcp.pop %v1886
    %v1889 = vmul.f32 %v1886, %v1888
    %v1890 = vsub.f32 1.0, %v1889
    %v1891 = vmul.f32 %v1888, %v1890
    %v1892 = vadd.f32 %v1888, %v1891
    %vm1893 = vweird.f32 %v1886
    %vm1894 = vweird.f32 %v1888
    %vm1895 = vmor %vm1893, %vm1894
    %v1896 = vsel %vm1895, %v1888, %v1892
    %v1897 = vand.u32 2147483647, %v1886
    %vm1898 = vcmp.eq.f32.partialorder %v1897, 8.507059e+37
    %v1899 = vand.u32 %v1886, 2147483648
    %v1900 = vor.u32 1.1754944e-38, %v1899
    %v1901 = vsel %vm1898, %v1900, %v1896
    %v1902 = vmul.f32 1.0, %v1901
    %v1903 = vrcp.pop %v1887
    %v1904 = vmul.f32 %v1887, %v1903
    %v1905 = vsub.f32 1.0, %v1904
    %v1906 = vmul.f32 %v1903, %v1905
    %v1907 = vadd.f32 %v1903, %v1906
    %vm1908 = vweird.f32 %v1887
    %vm1909 = vweird.f32 %v1903
    %vm1910 = vmor %vm1908, %vm1909
    %v1911 = vsel %vm1910, %v1903, %v1907
    %v1912 = vand.u32 2147483647, %v1887
    %vm1913 = vcmp.eq.f32.partialorder %v1912, 8.507059e+37
    %v1914 = vand.u32 %v1887, 2147483648
    %v1915 = vor.u32 1.1754944e-38, %v1914
    %v1916 = vsel %vm1913, %v1915, %v1911
    %v1917 = vmul.f32 1.0, %v1916
    %v1918 = vmul.f32 %v1862, %v1464
    %v1919 = vmul.f32 %v1877, %v1465
    %v1920 = vmul.f32 %v1824, %v1878
    %v1921 = vmul.f32 %v1839, %v1879
    %v1922 = vadd.f32 %v1918, %v1920
    %v1923 = vadd.f32 %v1919, %v1921
    %v1924 = vtanh.pop %v1922
    %v1925 = vtanh.pop %v1923
    %v1926 = vmul.f32 %v1902, %v1924
    %v1927 = vmul.f32 %v1917, %v1925
    %v1928 = vmul.f32 %v1566, %v241
    %v1929 = vmul.f32 %v1548, %v245
    %v1930 = vadd.f32 %v1928, %v1929
    %v1931 = vadd.f32 %v1930, %v249
    %v1932 = vxor.u32 %v1931, 2147483648
    %v1933 = vmul.f32 %v1932, 1.442695
    %v1934 = vpow.pop %v1933
    %v1935 = vadd.f32 %v1934, 1.0
    %v1936 = vrcp.pop %v1935
    %v1937 = vmul.f32 %v1935, %v1936
    %v1938 = vsub.f32 1.0, %v1937
    %v1939 = vmul.f32 %v1936, %v1938
    %v1940 = vadd.f32 %v1936, %v1939
    %vm1941 = vweird.f32 %v1935
    %vm1942 = vweird.f32 %v1936
    %vm1943 = vmor %vm1941, %vm1942
    %v1944 = vsel %vm1943, %v1936, %v1940
    %v1945 = vand.u32 2147483647, %v1935
    %vm1946 = vcmp.eq.f32.partialorder %v1945, 8.507059e+37
    %v1947 = vand.u32 %v1935, 2147483648
    %v1948 = vor.u32 1.1754944e-38, %v1947
    %v1949 = vsel %vm1946, %v1948, %v1944
    %v1950 = vmul.f32 1.0, %v1949
    %v1951 = vmul.f32 %v1566, %v242
    %v1952 = vmul.f32 %v1548, %v246
    %v1953 = vadd.f32 %v1951, %v1952
    %v1954 = vadd.f32 %v1953, %v250
    %v1955 = vxor.u32 %v1954, 2147483648
    %v1956 = vmul.f32 %v1955, 1.442695
    %v1957 = vpow.pop %v1956
    %v1958 = vadd.f32 %v1957, 1.0
    %v1959 = vrcp.pop %v1958
    %v1960 = vmul.f32 %v1958, %v1959
    %v1961 = vsub.f32 1.0, %v1960
    %v1962 = vmul.f32 %v1959, %v1961
    %v1963 = vadd.f32 %v1959, %v1962
    %vm1964 = vweird.f32 %v1958
    %vm1965 = vweird.f32 %v1959
    %vm1966 = vmor %vm1964, %vm1965
    %v1967 = vsel %vm1966, %v1959, %v1963
    %v1968 = vand.u32 2147483647, %v1958
    %vm1969 = vcmp.eq.f32.partialorder %v1968, 8.507059e+37
    %v1970 = vand.u32 %v1958, 2147483648
    %v1971 = vor.u32 1.1754944e-38, %v1970
    %v1972 = vsel %vm1969, %v1971, %v1967
    %v1973 = vmul.f32 1.0, %v1972
    %v1974 = vmul.f32 %v1566, %v243
    %v1975 = vmul.f32 %v1548, %v247
    %v1976 = vadd.f32 %v1974, %v1975
    %v1977 = vadd.f32 %v1976, %v251
    %v1978 = vtanh.pop %v1977
    %v1979 = vmul.f32 %v1566, %v244
    %v1980 = vmul.f32 %v1548, %v248
    %v1981 = vadd.f32 %v1979, %v1980
    %v1982 = vadd.f32 %v1981, %v252
    %v1983 = vxor.u32 %v1982, 2147483648
    %v1984 = vmul.f32 %v1983, 1.442695
    %v1985 = vpow.pop %v1984
    %v1986 = vadd.f32 %v1985, 1.0
    %v1987 = vrcp.pop %v1986
    %v1988 = vmul.f32 %v1986, %v1987
    %v1989 = vsub.f32 1.0, %v1988
    %v1990 = vmul.f32 %v1987, %v1989
    %v1991 = vadd.f32 %v1987, %v1990
    %vm1992 = vweird.f32 %v1986
    %vm1993 = vweird.f32 %v1987
    %vm1994 = vmor %vm1992, %vm1993
    %v1995 = vsel %vm1994, %v1987, %v1991
    %v1996 = vand.u32 2147483647, %v1986
    %vm1997 = vcmp.eq.f32.partialorder %v1996, 8.507059e+37
    %v1998 = vand.u32 %v1986, 2147483648
    %v1999 = vor.u32 1.1754944e-38, %v1998
    %v2000 = vsel %vm1997, %v1999, %v1995
    %v2001 = vmul.f32 1.0, %v2000
    %v2002 = vmul.f32 %v1973, %v1546
    %v2003 = vmul.f32 %v1950, %v1978
    %v2004 = vadd.f32 %v2002, %v2003
    %v2005 = vtanh.pop %v2004
    %v2006 = vmul.f32 %v2001, %v2005
    %2008 = vrot.lane.b32.xlu0 %v2006, 2
    %v2009 = vpop.permute.xlu0 %2008
    %vm2011 = vcmask 23568
    %2012 = vst.msk [vmem:[#allocation2] sm:$0xff] %vm2011, %v2009
    %2013 = vrot.lane.b32.xlu0 %v2006, 1
    %v2014 = vpop.permute.xlu0 %2013
    %2016 = vst.msk [vmem:[%s454] sm:$0xff] %vm2011, %v2014
    %2017 = vst.msk [vmem:[%s459] sm:$0xff] %vm2011, %v2006
    %2018 = vrot.lane.b32.xlu0 %v2006, 127
    %v2019 = vpop.permute.xlu0 %2018
    %2021 = vst.msk [vmem:[%s464] sm:$0xff] %vm2011, %v2019
    %2022 = vset.pattern.permute.xlu0 3
    %2023 = vperm.xlu0 %2022, %v72
    %v2024 = vpop.permute.xlu0 %2023
    %v2026 = vmul.f32 %v2024, %v204
    %v2027 = vmul.f32 %v2024, %v205
    %v2028 = vmul.f32 %v2024, %v206
    %v2029 = vmul.f32 %v2024, %v207
    %v2030 = vmul.f32 %v2024, %v208
    %v2031 = vmul.f32 %v2024, %v209
    %v2032 = vmul.f32 %v2024, %v210
    %v2033 = vmul.f32 %v2024, %v211
    %v2034 = vpack.c.bf16 %v1926, %v1926
    %v2035 = vpack.c.bf16 %v1927, %v1927
    %2036 = vmatpush.bf16.msra.mxu0 %v920
    %2037 = vmatpush.bf16.msra.mxu0 %v912
    %2038 = vmatpush.bf16.msra.mxu0 %v904
    %2039 = vmatpush.bf16.msra.mxu0 %v896
    %2040 = vmatpush.bf16.msra.mxu0 %v888
    %2041 = vmatpush.bf16.msra.mxu0 %v880
    %2042 = vmatpush.bf16.msra.mxu0 %v872
    %2043 = vmatpush.bf16.msra.mxu0 %v864
    %2044 = vmatmul.bf16.gmra.mxu0 %v2034
    %v2045 = vpop.f32.mrf.mxu0
    %v2046 = vadd.f32 0.0, %v2045
    %v2047 = vpop.f32.mrf.mxu0
    %2048 = vdwg.mxu0
    %2049 = vmatpush.bf16.msra.mxu0 %v984
    %2050 = vmatpush.bf16.msra.mxu0 %v976
    %2051 = vmatpush.bf16.msra.mxu0 %v968
    %2052 = vmatpush.bf16.msra.mxu0 %v960
    %2053 = vmatpush.bf16.msra.mxu0 %v952
    %2054 = vmatpush.bf16.msra.mxu0 %v944
    %2055 = vmatpush.bf16.msra.mxu0 %v936
    %2056 = vmatpush.bf16.msra.mxu0 %v928
    %2057 = vmatmul.bf16.gmra.mxu0 %v2035
    %v2058 = vpop.f32.mrf.mxu0
    %v2059 = vadd.f32 %v2046, %v2058
    %v2060 = vpop.f32.mrf.mxu0
    %2061 = vdwg.mxu0
    %2062 = vmatpush.bf16.msra.mxu0 %v921
    %2063 = vmatpush.bf16.msra.mxu0 %v913
    %2064 = vmatpush.bf16.msra.mxu0 %v905
    %2065 = vmatpush.bf16.msra.mxu0 %v897
    %2066 = vmatpush.bf16.msra.mxu0 %v889
    %2067 = vmatpush.bf16.msra.mxu0 %v881
    %2068 = vmatpush.bf16.msra.mxu0 %v873
    %2069 = vmatpush.bf16.msra.mxu0 %v865
    %2070 = vmatmul.bf16.gmra.mxu0 %v2034
    %v2071 = vpop.f32.mrf.mxu0
    %v2072 = vadd.f32 0.0, %v2071
    %v2073 = vpop.f32.mrf.mxu0
    %2074 = vdwg.mxu0
    %2075 = vmatpush.bf16.msra.mxu0 %v985
    %2076 = vmatpush.bf16.msra.mxu0 %v977
    %2077 = vmatpush.bf16.msra.mxu0 %v969
    %2078 = vmatpush.bf16.msra.mxu0 %v961
    %2079 = vmatpush.bf16.msra.mxu0 %v953
    %2080 = vmatpush.bf16.msra.mxu0 %v945
    %2081 = vmatpush.bf16.msra.mxu0 %v937
    %2082 = vmatpush.bf16.msra.mxu0 %v929
    %2083 = vmatmul.bf16.gmra.mxu0 %v2035
    %v2084 = vpop.f32.mrf.mxu0
    %v2085 = vadd.f32 %v2072, %v2084
    %v2086 = vpop.f32.mrf.mxu0
    %2087 = vdwg.mxu0
    %2088 = vmatpush.bf16.msra.mxu0 %v922
    %2089 = vmatpush.bf16.msra.mxu0 %v914
    %2090 = vmatpush.bf16.msra.mxu0 %v906
    %2091 = vmatpush.bf16.msra.mxu0 %v898
    %2092 = vmatpush.bf16.msra.mxu0 %v890
    %2093 = vmatpush.bf16.msra.mxu0 %v882
    %2094 = vmatpush.bf16.msra.mxu0 %v874
    %2095 = vmatpush.bf16.msra.mxu0 %v866
    %2096 = vmatmul.bf16.gmra.mxu0 %v2034
    %v2097 = vpop.f32.mrf.mxu0
    %v2098 = vadd.f32 0.0, %v2097
    %v2099 = vpop.f32.mrf.mxu0
    %2100 = vdwg.mxu0
    %2101 = vmatpush.bf16.msra.mxu0 %v986
    %2102 = vmatpush.bf16.msra.mxu0 %v978
    %2103 = vmatpush.bf16.msra.mxu0 %v970
    %2104 = vmatpush.bf16.msra.mxu0 %v962
    %2105 = vmatpush.bf16.msra.mxu0 %v954
    %2106 = vmatpush.bf16.msra.mxu0 %v946
    %2107 = vmatpush.bf16.msra.mxu0 %v938
    %2108 = vmatpush.bf16.msra.mxu0 %v930
    %2109 = vmatmul.bf16.gmra.mxu0 %v2035
    %v2110 = vpop.f32.mrf.mxu0
    %v2111 = vadd.f32 %v2098, %v2110
    %v2112 = vpop.f32.mrf.mxu0
    %2113 = vdwg.mxu0
    %2114 = vmatpush.bf16.msra.mxu0 %v923
    %2115 = vmatpush.bf16.msra.mxu0 %v915
    %2116 = vmatpush.bf16.msra.mxu0 %v907
    %2117 = vmatpush.bf16.msra.mxu0 %v899
    %2118 = vmatpush.bf16.msra.mxu0 %v891
    %2119 = vmatpush.bf16.msra.mxu0 %v883
    %2120 = vmatpush.bf16.msra.mxu0 %v875
    %2121 = vmatpush.bf16.msra.mxu0 %v867
    %2122 = vmatmul.bf16.gmra.mxu0 %v2034
    %v2123 = vpop.f32.mrf.mxu0
    %v2124 = vadd.f32 0.0, %v2123
    %v2125 = vpop.f32.mrf.mxu0
    %2126 = vdwg.mxu0
    %2127 = vmatpush.bf16.msra.mxu0 %v987
    %2128 = vmatpush.bf16.msra.mxu0 %v979
    %2129 = vmatpush.bf16.msra.mxu0 %v971
    %2130 = vmatpush.bf16.msra.mxu0 %v963
    %2131 = vmatpush.bf16.msra.mxu0 %v955
    %2132 = vmatpush.bf16.msra.mxu0 %v947
    %2133 = vmatpush.bf16.msra.mxu0 %v939
    %2134 = vmatpush.bf16.msra.mxu0 %v931
    %2135 = vmatmul.bf16.gmra.mxu0 %v2035
    %v2136 = vpop.f32.mrf.mxu0
    %v2137 = vadd.f32 %v2124, %v2136
    %v2138 = vpop.f32.mrf.mxu0
    %2139 = vdwg.mxu0
    %2140 = vmatpush.bf16.msra.mxu0 %v924
    %2141 = vmatpush.bf16.msra.mxu0 %v916
    %2142 = vmatpush.bf16.msra.mxu0 %v908
    %2143 = vmatpush.bf16.msra.mxu0 %v900
    %2144 = vmatpush.bf16.msra.mxu0 %v892
    %2145 = vmatpush.bf16.msra.mxu0 %v884
    %2146 = vmatpush.bf16.msra.mxu0 %v876
    %2147 = vmatpush.bf16.msra.mxu0 %v868
    %2148 = vmatmul.bf16.gmra.mxu0 %v2034
    %v2149 = vpop.f32.mrf.mxu0
    %v2150 = vadd.f32 0.0, %v2149
    %v2151 = vpop.f32.mrf.mxu0
    %2152 = vdwg.mxu0
    %2153 = vmatpush.bf16.msra.mxu0 %v988
    %2154 = vmatpush.bf16.msra.mxu0 %v980
    %2155 = vmatpush.bf16.msra.mxu0 %v972
    %2156 = vmatpush.bf16.msra.mxu0 %v964
    %2157 = vmatpush.bf16.msra.mxu0 %v956
    %2158 = vmatpush.bf16.msra.mxu0 %v948
    %2159 = vmatpush.bf16.msra.mxu0 %v940
    %2160 = vmatpush.bf16.msra.mxu0 %v932
    %2161 = vmatmul.bf16.gmra.mxu0 %v2035
    %v2162 = vpop.f32.mrf.mxu0
    %v2163 = vadd.f32 %v2150, %v2162
    %v2164 = vpop.f32.mrf.mxu0
    %2165 = vdwg.mxu0
    %2166 = vmatpush.bf16.msra.mxu0 %v925
    %2167 = vmatpush.bf16.msra.mxu0 %v917
    %2168 = vmatpush.bf16.msra.mxu0 %v909
    %2169 = vmatpush.bf16.msra.mxu0 %v901
    %2170 = vmatpush.bf16.msra.mxu0 %v893
    %2171 = vmatpush.bf16.msra.mxu0 %v885
    %2172 = vmatpush.bf16.msra.mxu0 %v877
    %2173 = vmatpush.bf16.msra.mxu0 %v869
    %2174 = vmatmul.bf16.gmra.mxu0 %v2034
    %v2175 = vpop.f32.mrf.mxu0
    %v2176 = vadd.f32 0.0, %v2175
    %v2177 = vpop.f32.mrf.mxu0
    %2178 = vdwg.mxu0
    %2179 = vmatpush.bf16.msra.mxu0 %v989
    %2180 = vmatpush.bf16.msra.mxu0 %v981
    %2181 = vmatpush.bf16.msra.mxu0 %v973
    %2182 = vmatpush.bf16.msra.mxu0 %v965
    %2183 = vmatpush.bf16.msra.mxu0 %v957
    %2184 = vmatpush.bf16.msra.mxu0 %v949
    %2185 = vmatpush.bf16.msra.mxu0 %v941
    %2186 = vmatpush.bf16.msra.mxu0 %v933
    %2187 = vmatmul.bf16.gmra.mxu0 %v2035
    %v2188 = vpop.f32.mrf.mxu0
    %v2189 = vadd.f32 %v2176, %v2188
    %v2190 = vpop.f32.mrf.mxu0
    %2191 = vdwg.mxu0
    %2192 = vmatpush.bf16.msra.mxu0 %v926
    %2193 = vmatpush.bf16.msra.mxu0 %v918
    %2194 = vmatpush.bf16.msra.mxu0 %v910
    %2195 = vmatpush.bf16.msra.mxu0 %v902
    %2196 = vmatpush.bf16.msra.mxu0 %v894
    %2197 = vmatpush.bf16.msra.mxu0 %v886
    %2198 = vmatpush.bf16.msra.mxu0 %v878
    %2199 = vmatpush.bf16.msra.mxu0 %v870
    %2200 = vmatmul.bf16.gmra.mxu0 %v2034
    %v2201 = vpop.f32.mrf.mxu0
    %v2202 = vadd.f32 0.0, %v2201
    %v2203 = vpop.f32.mrf.mxu0
    %2204 = vdwg.mxu0
    %2205 = vmatpush.bf16.msra.mxu0 %v990
    %2206 = vmatpush.bf16.msra.mxu0 %v982
    %2207 = vmatpush.bf16.msra.mxu0 %v974
    %2208 = vmatpush.bf16.msra.mxu0 %v966
    %2209 = vmatpush.bf16.msra.mxu0 %v958
    %2210 = vmatpush.bf16.msra.mxu0 %v950
    %2211 = vmatpush.bf16.msra.mxu0 %v942
    %2212 = vmatpush.bf16.msra.mxu0 %v934
    %2213 = vmatmul.bf16.gmra.mxu0 %v2035
    %v2214 = vpop.f32.mrf.mxu0
    %v2215 = vadd.f32 %v2202, %v2214
    %v2216 = vpop.f32.mrf.mxu0
    %2217 = vdwg.mxu0
    %2218 = vmatpush.bf16.msra.mxu0 %v927
    %2219 = vmatpush.bf16.msra.mxu0 %v919
    %2220 = vmatpush.bf16.msra.mxu0 %v911
    %2221 = vmatpush.bf16.msra.mxu0 %v903
    %2222 = vmatpush.bf16.msra.mxu0 %v895
    %2223 = vmatpush.bf16.msra.mxu0 %v887
    %2224 = vmatpush.bf16.msra.mxu0 %v879
    %2225 = vmatpush.bf16.msra.mxu0 %v871
    %2226 = vmatmul.bf16.gmra.mxu0 %v2034
    %v2227 = vpop.f32.mrf.mxu0
    %v2228 = vadd.f32 0.0, %v2227
    %v2229 = vpop.f32.mrf.mxu0
    %2230 = vdwg.mxu0
    %2231 = vmatpush.bf16.msra.mxu0 %v991
    %2232 = vmatpush.bf16.msra.mxu0 %v983
    %2233 = vmatpush.bf16.msra.mxu0 %v975
    %2234 = vmatpush.bf16.msra.mxu0 %v967
    %2235 = vmatpush.bf16.msra.mxu0 %v959
    %2236 = vmatpush.bf16.msra.mxu0 %v951
    %2237 = vmatpush.bf16.msra.mxu0 %v943
    %2238 = vmatpush.bf16.msra.mxu0 %v935
    %2239 = vmatmul.bf16.gmra.mxu0 %v2035
    %v2240 = vpop.f32.mrf.mxu0
    %v2241 = vadd.f32 %v2228, %v2240
    %v2242 = vpop.f32.mrf.mxu0
    %2243 = vdwg.mxu0
    %v2244 = vadd.f32 %v2026, %v2059
    %v2245 = vadd.f32 %v2027, %v2085
    %v2246 = vadd.f32 %v2028, %v2111
    %v2247 = vadd.f32 %v2029, %v2137
    %v2248 = vadd.f32 %v2030, %v2163
    %v2249 = vadd.f32 %v2031, %v2189
    %v2250 = vadd.f32 %v2032, %v2215
    %v2251 = vadd.f32 %v2033, %v2241
    %v2252 = vadd.f32 %v2244, %v222
    %v2253 = vadd.f32 %v2245, %v223
    %v2254 = vadd.f32 %v2246, %v224
    %v2255 = vadd.f32 %v2247, %v225
    %v2256 = vadd.f32 %v2248, %v226
    %v2257 = vadd.f32 %v2249, %v227
    %v2258 = vadd.f32 %v2250, %v228
    %v2259 = vadd.f32 %v2251, %v229
    %v2260 = vxor.u32 %v2252, 2147483648
    %v2261 = vxor.u32 %v2253, 2147483648
    %v2262 = vmul.f32 %v2260, 1.442695
    %v2263 = vpow.pop %v2262
    %v2264 = vmul.f32 %v2261, 1.442695
    %v2265 = vpow.pop %v2264
    %v2266 = vadd.f32 %v2263, 1.0
    %v2267 = vadd.f32 %v2265, 1.0
    %v2268 = vrcp.pop %v2266
    %v2269 = vmul.f32 %v2266, %v2268
    %v2270 = vsub.f32 1.0, %v2269
    %v2271 = vmul.f32 %v2268, %v2270
    %v2272 = vadd.f32 %v2268, %v2271
    %vm2273 = vweird.f32 %v2266
    %vm2274 = vweird.f32 %v2268
    %vm2275 = vmor %vm2273, %vm2274
    %v2276 = vsel %vm2275, %v2268, %v2272
    %v2277 = vand.u32 2147483647, %v2266
    %vm2278 = vcmp.eq.f32.partialorder %v2277, 8.507059e+37
    %v2279 = vand.u32 %v2266, 2147483648
    %v2280 = vor.u32 1.1754944e-38, %v2279
    %v2281 = vsel %vm2278, %v2280, %v2276
    %v2282 = vmul.f32 1.0, %v2281
    %v2283 = vrcp.pop %v2267
    %v2284 = vmul.f32 %v2267, %v2283
    %v2285 = vsub.f32 1.0, %v2284
    %v2286 = vmul.f32 %v2283, %v2285
    %v2287 = vadd.f32 %v2283, %v2286
    %vm2288 = vweird.f32 %v2267
    %vm2289 = vweird.f32 %v2283
    %vm2290 = vmor %vm2288, %vm2289
    %v2291 = vsel %vm2290, %v2283, %v2287
    %v2292 = vand.u32 2147483647, %v2267
    %vm2293 = vcmp.eq.f32.partialorder %v2292, 8.507059e+37
    %v2294 = vand.u32 %v2267, 2147483648
    %v2295 = vor.u32 1.1754944e-38, %v2294
    %v2296 = vsel %vm2293, %v2295, %v2291
    %v2297 = vmul.f32 1.0, %v2296
    %v2298 = vxor.u32 %v2254, 2147483648
    %v2299 = vxor.u32 %v2255, 2147483648
    %v2300 = vmul.f32 %v2298, 1.442695
    %v2301 = vpow.pop %v2300
    %v2302 = vmul.f32 %v2299, 1.442695
    %v2303 = vpow.pop %v2302
    %v2304 = vadd.f32 %v2301, 1.0
    %v2305 = vadd.f32 %v2303, 1.0
    %v2306 = vrcp.pop %v2304
    %v2307 = vmul.f32 %v2304, %v2306
    %v2308 = vsub.f32 1.0, %v2307
    %v2309 = vmul.f32 %v2306, %v2308
    %v2310 = vadd.f32 %v2306, %v2309
    %vm2311 = vweird.f32 %v2304
    %vm2312 = vweird.f32 %v2306
    %vm2313 = vmor %vm2311, %vm2312
    %v2314 = vsel %vm2313, %v2306, %v2310
    %v2315 = vand.u32 2147483647, %v2304
    %vm2316 = vcmp.eq.f32.partialorder %v2315, 8.507059e+37
    %v2317 = vand.u32 %v2304, 2147483648
    %v2318 = vor.u32 1.1754944e-38, %v2317
    %v2319 = vsel %vm2316, %v2318, %v2314
    %v2320 = vmul.f32 1.0, %v2319
    %v2321 = vrcp.pop %v2305
    %v2322 = vmul.f32 %v2305, %v2321
    %v2323 = vsub.f32 1.0, %v2322
    %v2324 = vmul.f32 %v2321, %v2323
    %v2325 = vadd.f32 %v2321, %v2324
    %vm2326 = vweird.f32 %v2305
    %vm2327 = vweird.f32 %v2321
    %vm2328 = vmor %vm2326, %vm2327
    %v2329 = vsel %vm2328, %v2321, %v2325
    %v2330 = vand.u32 2147483647, %v2305
    %vm2331 = vcmp.eq.f32.partialorder %v2330, 8.507059e+37
    %v2332 = vand.u32 %v2305, 2147483648
    %v2333 = vor.u32 1.1754944e-38, %v2332
    %v2334 = vsel %vm2331, %v2333, %v2329
    %v2335 = vmul.f32 1.0, %v2334
    %v2336 = vtanh.pop %v2256
    %v2337 = vtanh.pop %v2257
    %v2338 = vxor.u32 %v2258, 2147483648
    %v2339 = vxor.u32 %v2259, 2147483648
    %v2340 = vmul.f32 %v2338, 1.442695
    %v2341 = vpow.pop %v2340
    %v2342 = vmul.f32 %v2339, 1.442695
    %v2343 = vpow.pop %v2342
    %v2344 = vadd.f32 %v2341, 1.0
    %v2345 = vadd.f32 %v2343, 1.0
    %v2346 = vrcp.pop %v2344
    %v2347 = vmul.f32 %v2344, %v2346
    %v2348 = vsub.f32 1.0, %v2347
    %v2349 = vmul.f32 %v2346, %v2348
    %v2350 = vadd.f32 %v2346, %v2349
    %vm2351 = vweird.f32 %v2344
    %vm2352 = vweird.f32 %v2346
    %vm2353 = vmor %vm2351, %vm2352
    %v2354 = vsel %vm2353, %v2346, %v2350
    %v2355 = vand.u32 2147483647, %v2344
    %vm2356 = vcmp.eq.f32.partialorder %v2355, 8.507059e+37
    %v2357 = vand.u32 %v2344, 2147483648
    %v2358 = vor.u32 1.1754944e-38, %v2357
    %v2359 = vsel %vm2356, %v2358, %v2354
    %v2360 = vmul.f32 1.0, %v2359
    %v2361 = vrcp.pop %v2345
    %v2362 = vmul.f32 %v2345, %v2361
    %v2363 = vsub.f32 1.0, %v2362
    %v2364 = vmul.f32 %v2361, %v2363
    %v2365 = vadd.f32 %v2361, %v2364
    %vm2366 = vweird.f32 %v2345
    %vm2367 = vweird.f32 %v2361
    %vm2368 = vmor %vm2366, %vm2367
    %v2369 = vsel %vm2368, %v2361, %v2365
    %v2370 = vand.u32 2147483647, %v2345
    %vm2371 = vcmp.eq.f32.partialorder %v2370, 8.507059e+37
    %v2372 = vand.u32 %v2345, 2147483648
    %v2373 = vor.u32 1.1754944e-38, %v2372
    %v2374 = vsel %vm2371, %v2373, %v2369
    %v2375 = vmul.f32 1.0, %v2374
    %v2376 = vmul.f32 %v2320, %v1922
    %v2377 = vmul.f32 %v2335, %v1923
    %v2378 = vmul.f32 %v2282, %v2336
    %v2379 = vmul.f32 %v2297, %v2337
    %v2380 = vadd.f32 %v2376, %v2378
    %v2381 = vadd.f32 %v2377, %v2379
    %v2382 = vtanh.pop %v2380
    %v2383 = vtanh.pop %v2381
    %v2384 = vmul.f32 %v2360, %v2382
    %v2385 = vmul.f32 %v2375, %v2383
    %v2386 = vmul.f32 %v2024, %v241
    %v2387 = vmul.f32 %v2006, %v245
    %v2388 = vadd.f32 %v2386, %v2387
    %v2389 = vadd.f32 %v2388, %v249
    %v2390 = vxor.u32 %v2389, 2147483648
    %v2391 = vmul.f32 %v2390, 1.442695
    %v2392 = vpow.pop %v2391
    %v2393 = vadd.f32 %v2392, 1.0
    %v2394 = vrcp.pop %v2393
    %v2395 = vmul.f32 %v2393, %v2394
    %v2396 = vsub.f32 1.0, %v2395
    %v2397 = vmul.f32 %v2394, %v2396
    %v2398 = vadd.f32 %v2394, %v2397
    %vm2399 = vweird.f32 %v2393
    %vm2400 = vweird.f32 %v2394
    %vm2401 = vmor %vm2399, %vm2400
    %v2402 = vsel %vm2401, %v2394, %v2398
    %v2403 = vand.u32 2147483647, %v2393
    %vm2404 = vcmp.eq.f32.partialorder %v2403, 8.507059e+37
    %v2405 = vand.u32 %v2393, 2147483648
    %v2406 = vor.u32 1.1754944e-38, %v2405
    %v2407 = vsel %vm2404, %v2406, %v2402
    %v2408 = vmul.f32 1.0, %v2407
    %v2409 = vmul.f32 %v2024, %v242
    %v2410 = vmul.f32 %v2006, %v246
    %v2411 = vadd.f32 %v2409, %v2410
    %v2412 = vadd.f32 %v2411, %v250
    %v2413 = vxor.u32 %v2412, 2147483648
    %v2414 = vmul.f32 %v2413, 1.442695
    %v2415 = vpow.pop %v2414
    %v2416 = vadd.f32 %v2415, 1.0
    %v2417 = vrcp.pop %v2416
    %v2418 = vmul.f32 %v2416, %v2417
    %v2419 = vsub.f32 1.0, %v2418
    %v2420 = vmul.f32 %v2417, %v2419
    %v2421 = vadd.f32 %v2417, %v2420
    %vm2422 = vweird.f32 %v2416
    %vm2423 = vweird.f32 %v2417
    %vm2424 = vmor %vm2422, %vm2423
    %v2425 = vsel %vm2424, %v2417, %v2421
    %v2426 = vand.u32 2147483647, %v2416
    %vm2427 = vcmp.eq.f32.partialorder %v2426, 8.507059e+37
    %v2428 = vand.u32 %v2416, 2147483648
    %v2429 = vor.u32 1.1754944e-38, %v2428
    %v2430 = vsel %vm2427, %v2429, %v2425
    %v2431 = vmul.f32 1.0, %v2430
    %v2432 = vmul.f32 %v2024, %v243
    %v2433 = vmul.f32 %v2006, %v247
    %v2434 = vadd.f32 %v2432, %v2433
    %v2435 = vadd.f32 %v2434, %v251
    %v2436 = vtanh.pop %v2435
    %v2437 = vmul.f32 %v2024, %v244
    %v2438 = vmul.f32 %v2006, %v248
    %v2439 = vadd.f32 %v2437, %v2438
    %v2440 = vadd.f32 %v2439, %v252
    %v2441 = vxor.u32 %v2440, 2147483648
    %v2442 = vmul.f32 %v2441, 1.442695
    %v2443 = vpow.pop %v2442
    %v2444 = vadd.f32 %v2443, 1.0
    %v2445 = vrcp.pop %v2444
    %v2446 = vmul.f32 %v2444, %v2445
    %v2447 = vsub.f32 1.0, %v2446
    %v2448 = vmul.f32 %v2445, %v2447
    %v2449 = vadd.f32 %v2445, %v2448
    %vm2450 = vweird.f32 %v2444
    %vm2451 = vweird.f32 %v2445
    %vm2452 = vmor %vm2450, %vm2451
    %v2453 = vsel %vm2452, %v2445, %v2449
    %v2454 = vand.u32 2147483647, %v2444
    %vm2455 = vcmp.eq.f32.partialorder %v2454, 8.507059e+37
    %v2456 = vand.u32 %v2444, 2147483648
    %v2457 = vor.u32 1.1754944e-38, %v2456
    %v2458 = vsel %vm2455, %v2457, %v2453
    %v2459 = vmul.f32 1.0, %v2458
    %v2460 = vmul.f32 %v2431, %v2004
    %v2461 = vmul.f32 %v2408, %v2436
    %v2462 = vadd.f32 %v2460, %v2461
    %v2463 = vtanh.pop %v2462
    %v2464 = vmul.f32 %v2459, %v2463
    %2466 = vrot.lane.b32.xlu0 %v2464, 3
    %v2467 = vpop.permute.xlu0 %2466
    %vm2469 = vcmask 31768
    %2470 = vst.msk [vmem:[#allocation2] sm:$0xff] %vm2469, %v2467
    %2471 = vrot.lane.b32.xlu0 %v2464, 2
    %v2472 = vpop.permute.xlu0 %2471
    %2474 = vst.msk [vmem:[%s454] sm:$0xff] %vm2469, %v2472
    %2475 = vrot.lane.b32.xlu0 %v2464, 1
    %v2476 = vpop.permute.xlu0 %2475
    %2478 = vst.msk [vmem:[%s459] sm:$0xff] %vm2469, %v2476
    %2479 = vst.msk [vmem:[%s464] sm:$0xff] %vm2469, %v2464
    %2480 = vset.pattern.permute.xlu0 4
    %2481 = vperm.xlu0 %2480, %v72
    %v2482 = vpop.permute.xlu0 %2481
    %v2484 = vmul.f32 %v2482, %v204
    %v2485 = vmul.f32 %v2482, %v205
    %v2486 = vmul.f32 %v2482, %v206
    %v2487 = vmul.f32 %v2482, %v207
    %v2488 = vmul.f32 %v2482, %v208
    %v2489 = vmul.f32 %v2482, %v209
    %v2490 = vmul.f32 %v2482, %v210
    %v2491 = vmul.f32 %v2482, %v211
    %v2492 = vpack.c.bf16 %v2384, %v2384
    %v2493 = vpack.c.bf16 %v2385, %v2385
    %2494 = vmatpush.bf16.msra.mxu0 %v920
    %2495 = vmatpush.bf16.msra.mxu0 %v912
    %2496 = vmatpush.bf16.msra.mxu0 %v904
    %2497 = vmatpush.bf16.msra.mxu0 %v896
    %2498 = vmatpush.bf16.msra.mxu0 %v888
    %2499 = vmatpush.bf16.msra.mxu0 %v880
    %2500 = vmatpush.bf16.msra.mxu0 %v872
    %2501 = vmatpush.bf16.msra.mxu0 %v864
    %2502 = vmatmul.bf16.gmra.mxu0 %v2492
    %v2503 = vpop.f32.mrf.mxu0
    %v2504 = vadd.f32 0.0, %v2503
    %v2505 = vpop.f32.mrf.mxu0
    %2506 = vdwg.mxu0
    %2507 = vmatpush.bf16.msra.mxu0 %v984
    %2508 = vmatpush.bf16.msra.mxu0 %v976
    %2509 = vmatpush.bf16.msra.mxu0 %v968
    %2510 = vmatpush.bf16.msra.mxu0 %v960
    %2511 = vmatpush.bf16.msra.mxu0 %v952
    %2512 = vmatpush.bf16.msra.mxu0 %v944
    %2513 = vmatpush.bf16.msra.mxu0 %v936
    %2514 = vmatpush.bf16.msra.mxu0 %v928
    %2515 = vmatmul.bf16.gmra.mxu0 %v2493
    %v2516 = vpop.f32.mrf.mxu0
    %v2517 = vadd.f32 %v2504, %v2516
    %v2518 = vpop.f32.mrf.mxu0
    %2519 = vdwg.mxu0
    %2520 = vmatpush.bf16.msra.mxu0 %v921
    %2521 = vmatpush.bf16.msra.mxu0 %v913
    %2522 = vmatpush.bf16.msra.mxu0 %v905
    %2523 = vmatpush.bf16.msra.mxu0 %v897
    %2524 = vmatpush.bf16.msra.mxu0 %v889
    %2525 = vmatpush.bf16.msra.mxu0 %v881
    %2526 = vmatpush.bf16.msra.mxu0 %v873
    %2527 = vmatpush.bf16.msra.mxu0 %v865
    %2528 = vmatmul.bf16.gmra.mxu0 %v2492
    %v2529 = vpop.f32.mrf.mxu0
    %v2530 = vadd.f32 0.0, %v2529
    %v2531 = vpop.f32.mrf.mxu0
    %2532 = vdwg.mxu0
    %2533 = vmatpush.bf16.msra.mxu0 %v985
    %2534 = vmatpush.bf16.msra.mxu0 %v977
    %2535 = vmatpush.bf16.msra.mxu0 %v969
    %2536 = vmatpush.bf16.msra.mxu0 %v961
    %2537 = vmatpush.bf16.msra.mxu0 %v953
    %2538 = vmatpush.bf16.msra.mxu0 %v945
    %2539 = vmatpush.bf16.msra.mxu0 %v937
    %2540 = vmatpush.bf16.msra.mxu0 %v929
    %2541 = vmatmul.bf16.gmra.mxu0 %v2493
    %v2542 = vpop.f32.mrf.mxu0
    %v2543 = vadd.f32 %v2530, %v2542
    %v2544 = vpop.f32.mrf.mxu0
    %2545 = vdwg.mxu0
    %2546 = vmatpush.bf16.msra.mxu0 %v922
    %2547 = vmatpush.bf16.msra.mxu0 %v914
    %2548 = vmatpush.bf16.msra.mxu0 %v906
    %2549 = vmatpush.bf16.msra.mxu0 %v898
    %2550 = vmatpush.bf16.msra.mxu0 %v890
    %2551 = vmatpush.bf16.msra.mxu0 %v882
    %2552 = vmatpush.bf16.msra.mxu0 %v874
    %2553 = vmatpush.bf16.msra.mxu0 %v866
    %2554 = vmatmul.bf16.gmra.mxu0 %v2492
    %v2555 = vpop.f32.mrf.mxu0
    %v2556 = vadd.f32 0.0, %v2555
    %v2557 = vpop.f32.mrf.mxu0
    %2558 = vdwg.mxu0
    %2559 = vmatpush.bf16.msra.mxu0 %v986
    %2560 = vmatpush.bf16.msra.mxu0 %v978
    %2561 = vmatpush.bf16.msra.mxu0 %v970
    %2562 = vmatpush.bf16.msra.mxu0 %v962
    %2563 = vmatpush.bf16.msra.mxu0 %v954
    %2564 = vmatpush.bf16.msra.mxu0 %v946
    %2565 = vmatpush.bf16.msra.mxu0 %v938
    %2566 = vmatpush.bf16.msra.mxu0 %v930
    %2567 = vmatmul.bf16.gmra.mxu0 %v2493
    %v2568 = vpop.f32.mrf.mxu0
    %v2569 = vadd.f32 %v2556, %v2568
    %v2570 = vpop.f32.mrf.mxu0
    %2571 = vdwg.mxu0
    %2572 = vmatpush.bf16.msra.mxu0 %v923
    %2573 = vmatpush.bf16.msra.mxu0 %v915
    %2574 = vmatpush.bf16.msra.mxu0 %v907
    %2575 = vmatpush.bf16.msra.mxu0 %v899
    %2576 = vmatpush.bf16.msra.mxu0 %v891
    %2577 = vmatpush.bf16.msra.mxu0 %v883
    %2578 = vmatpush.bf16.msra.mxu0 %v875
    %2579 = vmatpush.bf16.msra.mxu0 %v867
    %2580 = vmatmul.bf16.gmra.mxu0 %v2492
    %v2581 = vpop.f32.mrf.mxu0
    %v2582 = vadd.f32 0.0, %v2581
    %v2583 = vpop.f32.mrf.mxu0
    %2584 = vdwg.mxu0
    %2585 = vmatpush.bf16.msra.mxu0 %v987
    %2586 = vmatpush.bf16.msra.mxu0 %v979
    %2587 = vmatpush.bf16.msra.mxu0 %v971
    %2588 = vmatpush.bf16.msra.mxu0 %v963
    %2589 = vmatpush.bf16.msra.mxu0 %v955
    %2590 = vmatpush.bf16.msra.mxu0 %v947
    %2591 = vmatpush.bf16.msra.mxu0 %v939
    %2592 = vmatpush.bf16.msra.mxu0 %v931
    %2593 = vmatmul.bf16.gmra.mxu0 %v2493
    %v2594 = vpop.f32.mrf.mxu0
    %v2595 = vadd.f32 %v2582, %v2594
    %v2596 = vpop.f32.mrf.mxu0
    %2597 = vdwg.mxu0
    %2598 = vmatpush.bf16.msra.mxu0 %v924
    %2599 = vmatpush.bf16.msra.mxu0 %v916
    %2600 = vmatpush.bf16.msra.mxu0 %v908
    %2601 = vmatpush.bf16.msra.mxu0 %v900
    %2602 = vmatpush.bf16.msra.mxu0 %v892
    %2603 = vmatpush.bf16.msra.mxu0 %v884
    %2604 = vmatpush.bf16.msra.mxu0 %v876
    %2605 = vmatpush.bf16.msra.mxu0 %v868
    %2606 = vmatmul.bf16.gmra.mxu0 %v2492
    %v2607 = vpop.f32.mrf.mxu0
    %v2608 = vadd.f32 0.0, %v2607
    %v2609 = vpop.f32.mrf.mxu0
    %2610 = vdwg.mxu0
    %2611 = vmatpush.bf16.msra.mxu0 %v988
    %2612 = vmatpush.bf16.msra.mxu0 %v980
    %2613 = vmatpush.bf16.msra.mxu0 %v972
    %2614 = vmatpush.bf16.msra.mxu0 %v964
    %2615 = vmatpush.bf16.msra.mxu0 %v956
    %2616 = vmatpush.bf16.msra.mxu0 %v948
    %2617 = vmatpush.bf16.msra.mxu0 %v940
    %2618 = vmatpush.bf16.msra.mxu0 %v932
    %2619 = vmatmul.bf16.gmra.mxu0 %v2493
    %v2620 = vpop.f32.mrf.mxu0
    %v2621 = vadd.f32 %v2608, %v2620
    %v2622 = vpop.f32.mrf.mxu0
    %2623 = vdwg.mxu0
    %2624 = vmatpush.bf16.msra.mxu0 %v925
    %2625 = vmatpush.bf16.msra.mxu0 %v917
    %2626 = vmatpush.bf16.msra.mxu0 %v909
    %2627 = vmatpush.bf16.msra.mxu0 %v901
    %2628 = vmatpush.bf16.msra.mxu0 %v893
    %2629 = vmatpush.bf16.msra.mxu0 %v885
    %2630 = vmatpush.bf16.msra.mxu0 %v877
    %2631 = vmatpush.bf16.msra.mxu0 %v869
    %2632 = vmatmul.bf16.gmra.mxu0 %v2492
    %v2633 = vpop.f32.mrf.mxu0
    %v2634 = vadd.f32 0.0, %v2633
    %v2635 = vpop.f32.mrf.mxu0
    %2636 = vdwg.mxu0
    %2637 = vmatpush.bf16.msra.mxu0 %v989
    %2638 = vmatpush.bf16.msra.mxu0 %v981
    %2639 = vmatpush.bf16.msra.mxu0 %v973
    %2640 = vmatpush.bf16.msra.mxu0 %v965
    %2641 = vmatpush.bf16.msra.mxu0 %v957
    %2642 = vmatpush.bf16.msra.mxu0 %v949
    %2643 = vmatpush.bf16.msra.mxu0 %v941
    %2644 = vmatpush.bf16.msra.mxu0 %v933
    %2645 = vmatmul.bf16.gmra.mxu0 %v2493
    %v2646 = vpop.f32.mrf.mxu0
    %v2647 = vadd.f32 %v2634, %v2646
    %v2648 = vpop.f32.mrf.mxu0
    %2649 = vdwg.mxu0
    %2650 = vmatpush.bf16.msra.mxu0 %v926
    %2651 = vmatpush.bf16.msra.mxu0 %v918
    %2652 = vmatpush.bf16.msra.mxu0 %v910
    %2653 = vmatpush.bf16.msra.mxu0 %v902
    %2654 = vmatpush.bf16.msra.mxu0 %v894
    %2655 = vmatpush.bf16.msra.mxu0 %v886
    %2656 = vmatpush.bf16.msra.mxu0 %v878
    %2657 = vmatpush.bf16.msra.mxu0 %v870
    %2658 = vmatmul.bf16.gmra.mxu0 %v2492
    %v2659 = vpop.f32.mrf.mxu0
    %v2660 = vadd.f32 0.0, %v2659
    %v2661 = vpop.f32.mrf.mxu0
    %2662 = vdwg.mxu0
    %2663 = vmatpush.bf16.msra.mxu0 %v990
    %2664 = vmatpush.bf16.msra.mxu0 %v982
    %2665 = vmatpush.bf16.msra.mxu0 %v974
    %2666 = vmatpush.bf16.msra.mxu0 %v966
    %2667 = vmatpush.bf16.msra.mxu0 %v958
    %2668 = vmatpush.bf16.msra.mxu0 %v950
    %2669 = vmatpush.bf16.msra.mxu0 %v942
    %2670 = vmatpush.bf16.msra.mxu0 %v934
    %2671 = vmatmul.bf16.gmra.mxu0 %v2493
    %v2672 = vpop.f32.mrf.mxu0
    %v2673 = vadd.f32 %v2660, %v2672
    %v2674 = vpop.f32.mrf.mxu0
    %2675 = vdwg.mxu0
    %2676 = vmatpush.bf16.msra.mxu0 %v927
    %2677 = vmatpush.bf16.msra.mxu0 %v919
    %2678 = vmatpush.bf16.msra.mxu0 %v911
    %2679 = vmatpush.bf16.msra.mxu0 %v903
    %2680 = vmatpush.bf16.msra.mxu0 %v895
    %2681 = vmatpush.bf16.msra.mxu0 %v887
    %2682 = vmatpush.bf16.msra.mxu0 %v879
    %2683 = vmatpush.bf16.msra.mxu0 %v871
    %2684 = vmatmul.bf16.gmra.mxu0 %v2492
    %v2685 = vpop.f32.mrf.mxu0
    %v2686 = vadd.f32 0.0, %v2685
    %v2687 = vpop.f32.mrf.mxu0
    %2688 = vdwg.mxu0
    %2689 = vmatpush.bf16.msra.mxu0 %v991
    %2690 = vmatpush.bf16.msra.mxu0 %v983
    %2691 = vmatpush.bf16.msra.mxu0 %v975
    %2692 = vmatpush.bf16.msra.mxu0 %v967
    %2693 = vmatpush.bf16.msra.mxu0 %v959
    %2694 = vmatpush.bf16.msra.mxu0 %v951
    %2695 = vmatpush.bf16.msra.mxu0 %v943
    %2696 = vmatpush.bf16.msra.mxu0 %v935
    %2697 = vmatmul.bf16.gmra.mxu0 %v2493
    %v2698 = vpop.f32.mrf.mxu0
    %v2699 = vadd.f32 %v2686, %v2698
    %v2700 = vpop.f32.mrf.mxu0
    %2701 = vdwg.mxu0
    %v2702 = vadd.f32 %v2484, %v2517
    %v2703 = vadd.f32 %v2485, %v2543
    %v2704 = vadd.f32 %v2486, %v2569
    %v2705 = vadd.f32 %v2487, %v2595
    %v2706 = vadd.f32 %v2488, %v2621
    %v2707 = vadd.f32 %v2489, %v2647
    %v2708 = vadd.f32 %v2490, %v2673
    %v2709 = vadd.f32 %v2491, %v2699
    %v2710 = vadd.f32 %v2702, %v222
    %v2711 = vadd.f32 %v2703, %v223
    %v2712 = vadd.f32 %v2704, %v224
    %v2713 = vadd.f32 %v2705, %v225
    %v2714 = vadd.f32 %v2706, %v226
    %v2715 = vadd.f32 %v2707, %v227
    %v2716 = vadd.f32 %v2708, %v228
    %v2717 = vadd.f32 %v2709, %v229
    %v2718 = vxor.u32 %v2710, 2147483648
    %v2719 = vxor.u32 %v2711, 2147483648
    %v2720 = vmul.f32 %v2718, 1.442695
    %v2721 = vpow.pop %v2720
    %v2722 = vmul.f32 %v2719, 1.442695
    %v2723 = vpow.pop %v2722
    %v2724 = vadd.f32 %v2721, 1.0
    %v2725 = vadd.f32 %v2723, 1.0
    %v2726 = vrcp.pop %v2724
    %v2727 = vmul.f32 %v2724, %v2726
    %v2728 = vsub.f32 1.0, %v2727
    %v2729 = vmul.f32 %v2726, %v2728
    %v2730 = vadd.f32 %v2726, %v2729
    %vm2731 = vweird.f32 %v2724
    %vm2732 = vweird.f32 %v2726
    %vm2733 = vmor %vm2731, %vm2732
    %v2734 = vsel %vm2733, %v2726, %v2730
    %v2735 = vand.u32 2147483647, %v2724
    %vm2736 = vcmp.eq.f32.partialorder %v2735, 8.507059e+37
    %v2737 = vand.u32 %v2724, 2147483648
    %v2738 = vor.u32 1.1754944e-38, %v2737
    %v2739 = vsel %vm2736, %v2738, %v2734
    %v2740 = vmul.f32 1.0, %v2739
    %v2741 = vrcp.pop %v2725
    %v2742 = vmul.f32 %v2725, %v2741
    %v2743 = vsub.f32 1.0, %v2742
    %v2744 = vmul.f32 %v2741, %v2743
    %v2745 = vadd.f32 %v2741, %v2744
    %vm2746 = vweird.f32 %v2725
    %vm2747 = vweird.f32 %v2741
    %vm2748 = vmor %vm2746, %vm2747
    %v2749 = vsel %vm2748, %v2741, %v2745
    %v2750 = vand.u32 2147483647, %v2725
    %vm2751 = vcmp.eq.f32.partialorder %v2750, 8.507059e+37
    %v2752 = vand.u32 %v2725, 2147483648
    %v2753 = vor.u32 1.1754944e-38, %v2752
    %v2754 = vsel %vm2751, %v2753, %v2749
    %v2755 = vmul.f32 1.0, %v2754
    %v2756 = vxor.u32 %v2712, 2147483648
    %v2757 = vxor.u32 %v2713, 2147483648
    %v2758 = vmul.f32 %v2756, 1.442695
    %v2759 = vpow.pop %v2758
    %v2760 = vmul.f32 %v2757, 1.442695
    %v2761 = vpow.pop %v2760
    %v2762 = vadd.f32 %v2759, 1.0
    %v2763 = vadd.f32 %v2761, 1.0
    %v2764 = vrcp.pop %v2762
    %v2765 = vmul.f32 %v2762, %v2764
    %v2766 = vsub.f32 1.0, %v2765
    %v2767 = vmul.f32 %v2764, %v2766
    %v2768 = vadd.f32 %v2764, %v2767
    %vm2769 = vweird.f32 %v2762
    %vm2770 = vweird.f32 %v2764
    %vm2771 = vmor %vm2769, %vm2770
    %v2772 = vsel %vm2771, %v2764, %v2768
    %v2773 = vand.u32 2147483647, %v2762
    %vm2774 = vcmp.eq.f32.partialorder %v2773, 8.507059e+37
    %v2775 = vand.u32 %v2762, 2147483648
    %v2776 = vor.u32 1.1754944e-38, %v2775
    %v2777 = vsel %vm2774, %v2776, %v2772
    %v2778 = vmul.f32 1.0, %v2777
    %v2779 = vrcp.pop %v2763
    %v2780 = vmul.f32 %v2763, %v2779
    %v2781 = vsub.f32 1.0, %v2780
    %v2782 = vmul.f32 %v2779, %v2781
    %v2783 = vadd.f32 %v2779, %v2782
    %vm2784 = vweird.f32 %v2763
    %vm2785 = vweird.f32 %v2779
    %vm2786 = vmor %vm2784, %vm2785
    %v2787 = vsel %vm2786, %v2779, %v2783
    %v2788 = vand.u32 2147483647, %v2763
    %vm2789 = vcmp.eq.f32.partialorder %v2788, 8.507059e+37
    %v2790 = vand.u32 %v2763, 2147483648
    %v2791 = vor.u32 1.1754944e-38, %v2790
    %v2792 = vsel %vm2789, %v2791, %v2787
    %v2793 = vmul.f32 1.0, %v2792
    %v2794 = vtanh.pop %v2714
    %v2795 = vtanh.pop %v2715
    %v2796 = vxor.u32 %v2716, 2147483648
    %v2797 = vxor.u32 %v2717, 2147483648
    %v2798 = vmul.f32 %v2796, 1.442695
    %v2799 = vpow.pop %v2798
    %v2800 = vmul.f32 %v2797, 1.442695
    %v2801 = vpow.pop %v2800
    %v2802 = vadd.f32 %v2799, 1.0
    %v2803 = vadd.f32 %v2801, 1.0
    %v2804 = vrcp.pop %v2802
    %v2805 = vmul.f32 %v2802, %v2804
    %v2806 = vsub.f32 1.0, %v2805
    %v2807 = vmul.f32 %v2804, %v2806
    %v2808 = vadd.f32 %v2804, %v2807
    %vm2809 = vweird.f32 %v2802
    %vm2810 = vweird.f32 %v2804
    %vm2811 = vmor %vm2809, %vm2810
    %v2812 = vsel %vm2811, %v2804, %v2808
    %v2813 = vand.u32 2147483647, %v2802
    %vm2814 = vcmp.eq.f32.partialorder %v2813, 8.507059e+37
    %v2815 = vand.u32 %v2802, 2147483648
    %v2816 = vor.u32 1.1754944e-38, %v2815
    %v2817 = vsel %vm2814, %v2816, %v2812
    %v2818 = vmul.f32 1.0, %v2817
    %v2819 = vrcp.pop %v2803
    %v2820 = vmul.f32 %v2803, %v2819
    %v2821 = vsub.f32 1.0, %v2820
    %v2822 = vmul.f32 %v2819, %v2821
    %v2823 = vadd.f32 %v2819, %v2822
    %vm2824 = vweird.f32 %v2803
    %vm2825 = vweird.f32 %v2819
    %vm2826 = vmor %vm2824, %vm2825
    %v2827 = vsel %vm2826, %v2819, %v2823
    %v2828 = vand.u32 2147483647, %v2803
    %vm2829 = vcmp.eq.f32.partialorder %v2828, 8.507059e+37
    %v2830 = vand.u32 %v2803, 2147483648
    %v2831 = vor.u32 1.1754944e-38, %v2830
    %v2832 = vsel %vm2829, %v2831, %v2827
    %v2833 = vmul.f32 1.0, %v2832
    %v2834 = vmul.f32 %v2778, %v2380
    %v2835 = vmul.f32 %v2793, %v2381
    %v2836 = vmul.f32 %v2740, %v2794
    %v2837 = vmul.f32 %v2755, %v2795
    %v2838 = vadd.f32 %v2834, %v2836
    %v2839 = vadd.f32 %v2835, %v2837
    %v2840 = vtanh.pop %v2838
    %v2841 = vtanh.pop %v2839
    %v2842 = vmul.f32 %v2818, %v2840
    %v2843 = vmul.f32 %v2833, %v2841
    %v2844 = vmul.f32 %v2482, %v241
    %v2845 = vmul.f32 %v2464, %v245
    %v2846 = vadd.f32 %v2844, %v2845
    %v2847 = vadd.f32 %v2846, %v249
    %v2848 = vxor.u32 %v2847, 2147483648
    %v2849 = vmul.f32 %v2848, 1.442695
    %v2850 = vpow.pop %v2849
    %v2851 = vadd.f32 %v2850, 1.0
    %v2852 = vrcp.pop %v2851
    %v2853 = vmul.f32 %v2851, %v2852
    %v2854 = vsub.f32 1.0, %v2853
    %v2855 = vmul.f32 %v2852, %v2854
    %v2856 = vadd.f32 %v2852, %v2855
    %vm2857 = vweird.f32 %v2851
    %vm2858 = vweird.f32 %v2852
    %vm2859 = vmor %vm2857, %vm2858
    %v2860 = vsel %vm2859, %v2852, %v2856
    %v2861 = vand.u32 2147483647, %v2851
    %vm2862 = vcmp.eq.f32.partialorder %v2861, 8.507059e+37
    %v2863 = vand.u32 %v2851, 2147483648
    %v2864 = vor.u32 1.1754944e-38, %v2863
    %v2865 = vsel %vm2862, %v2864, %v2860
    %v2866 = vmul.f32 1.0, %v2865
    %v2867 = vmul.f32 %v2482, %v242
    %v2868 = vmul.f32 %v2464, %v246
    %v2869 = vadd.f32 %v2867, %v2868
    %v2870 = vadd.f32 %v2869, %v250
    %v2871 = vxor.u32 %v2870, 2147483648
    %v2872 = vmul.f32 %v2871, 1.442695
    %v2873 = vpow.pop %v2872
    %v2874 = vadd.f32 %v2873, 1.0
    %v2875 = vrcp.pop %v2874
    %v2876 = vmul.f32 %v2874, %v2875
    %v2877 = vsub.f32 1.0, %v2876
    %v2878 = vmul.f32 %v2875, %v2877
    %v2879 = vadd.f32 %v2875, %v2878
    %vm2880 = vweird.f32 %v2874
    %vm2881 = vweird.f32 %v2875
    %vm2882 = vmor %vm2880, %vm2881
    %v2883 = vsel %vm2882, %v2875, %v2879
    %v2884 = vand.u32 2147483647, %v2874
    %vm2885 = vcmp.eq.f32.partialorder %v2884, 8.507059e+37
    %v2886 = vand.u32 %v2874, 2147483648
    %v2887 = vor.u32 1.1754944e-38, %v2886
    %v2888 = vsel %vm2885, %v2887, %v2883
    %v2889 = vmul.f32 1.0, %v2888
    %v2890 = vmul.f32 %v2482, %v243
    %v2891 = vmul.f32 %v2464, %v247
    %v2892 = vadd.f32 %v2890, %v2891
    %v2893 = vadd.f32 %v2892, %v251
    %v2894 = vtanh.pop %v2893
    %v2895 = vmul.f32 %v2482, %v244
    %v2896 = vmul.f32 %v2464, %v248
    %v2897 = vadd.f32 %v2895, %v2896
    %v2898 = vadd.f32 %v2897, %v252
    %v2899 = vxor.u32 %v2898, 2147483648
    %v2900 = vmul.f32 %v2899, 1.442695
    %v2901 = vpow.pop %v2900
    %v2902 = vadd.f32 %v2901, 1.0
    %v2903 = vrcp.pop %v2902
    %v2904 = vmul.f32 %v2902, %v2903
    %v2905 = vsub.f32 1.0, %v2904
    %v2906 = vmul.f32 %v2903, %v2905
    %v2907 = vadd.f32 %v2903, %v2906
    %vm2908 = vweird.f32 %v2902
    %vm2909 = vweird.f32 %v2903
    %vm2910 = vmor %vm2908, %vm2909
    %v2911 = vsel %vm2910, %v2903, %v2907
    %v2912 = vand.u32 2147483647, %v2902
    %vm2913 = vcmp.eq.f32.partialorder %v2912, 8.507059e+37
    %v2914 = vand.u32 %v2902, 2147483648
    %v2915 = vor.u32 1.1754944e-38, %v2914
    %v2916 = vsel %vm2913, %v2915, %v2911
    %v2917 = vmul.f32 1.0, %v2916
    %v2918 = vmul.f32 %v2889, %v2462
    %v2919 = vmul.f32 %v2866, %v2894
    %v2920 = vadd.f32 %v2918, %v2919
    %v2921 = vtanh.pop %v2920
    %v2922 = vmul.f32 %v2917, %v2921
    %2924 = vrot.lane.b32.xlu0 %v2922, 4
    %v2925 = vpop.permute.xlu0 %2924
    %vm2927 = vcmask 39968
    %2928 = vst.msk [vmem:[#allocation2] sm:$0xff] %vm2927, %v2925
    %2929 = vrot.lane.b32.xlu0 %v2922, 3
    %v2930 = vpop.permute.xlu0 %2929
    %2932 = vst.msk [vmem:[%s454] sm:$0xff] %vm2927, %v2930
    %2933 = vrot.lane.b32.xlu0 %v2922, 2
    %v2934 = vpop.permute.xlu0 %2933
    %2936 = vst.msk [vmem:[%s459] sm:$0xff] %vm2927, %v2934
    %2937 = vrot.lane.b32.xlu0 %v2922, 1
    %v2938 = vpop.permute.xlu0 %2937
    %2940 = vst.msk [vmem:[%s464] sm:$0xff] %vm2927, %v2938
    %2941 = vset.pattern.permute.xlu0 5
    %2942 = vperm.xlu0 %2941, %v72
    %v2943 = vpop.permute.xlu0 %2942
    %v2945 = vmul.f32 %v2943, %v204
    %v2946 = vmul.f32 %v2943, %v205
    %v2947 = vmul.f32 %v2943, %v206
    %v2948 = vmul.f32 %v2943, %v207
    %v2949 = vmul.f32 %v2943, %v208
    %v2950 = vmul.f32 %v2943, %v209
    %v2951 = vmul.f32 %v2943, %v210
    %v2952 = vmul.f32 %v2943, %v211
    %v2953 = vpack.c.bf16 %v2842, %v2842
    %v2954 = vpack.c.bf16 %v2843, %v2843
    %2955 = vmatpush.bf16.msra.mxu0 %v920
    %2956 = vmatpush.bf16.msra.mxu0 %v912
    %2957 = vmatpush.bf16.msra.mxu0 %v904
    %2958 = vmatpush.bf16.msra.mxu0 %v896
    %2959 = vmatpush.bf16.msra.mxu0 %v888
    %2960 = vmatpush.bf16.msra.mxu0 %v880
    %2961 = vmatpush.bf16.msra.mxu0 %v872
    %2962 = vmatpush.bf16.msra.mxu0 %v864
    %2963 = vmatmul.bf16.gmra.mxu0 %v2953
    %v2964 = vpop.f32.mrf.mxu0
    %v2965 = vadd.f32 0.0, %v2964
    %v2966 = vpop.f32.mrf.mxu0
    %2967 = vdwg.mxu0
    %2968 = vmatpush.bf16.msra.mxu0 %v984
    %2969 = vmatpush.bf16.msra.mxu0 %v976
    %2970 = vmatpush.bf16.msra.mxu0 %v968
    %2971 = vmatpush.bf16.msra.mxu0 %v960
    %2972 = vmatpush.bf16.msra.mxu0 %v952
    %2973 = vmatpush.bf16.msra.mxu0 %v944
    %2974 = vmatpush.bf16.msra.mxu0 %v936
    %2975 = vmatpush.bf16.msra.mxu0 %v928
    %2976 = vmatmul.bf16.gmra.mxu0 %v2954
    %v2977 = vpop.f32.mrf.mxu0
    %v2978 = vadd.f32 %v2965, %v2977
    %v2979 = vpop.f32.mrf.mxu0
    %2980 = vdwg.mxu0
    %2981 = vmatpush.bf16.msra.mxu0 %v921
    %2982 = vmatpush.bf16.msra.mxu0 %v913
    %2983 = vmatpush.bf16.msra.mxu0 %v905
    %2984 = vmatpush.bf16.msra.mxu0 %v897
    %2985 = vmatpush.bf16.msra.mxu0 %v889
    %2986 = vmatpush.bf16.msra.mxu0 %v881
    %2987 = vmatpush.bf16.msra.mxu0 %v873
    %2988 = vmatpush.bf16.msra.mxu0 %v865
    %2989 = vmatmul.bf16.gmra.mxu0 %v2953
    %v2990 = vpop.f32.mrf.mxu0
    %v2991 = vadd.f32 0.0, %v2990
    %v2992 = vpop.f32.mrf.mxu0
    %2993 = vdwg.mxu0
    %2994 = vmatpush.bf16.msra.mxu0 %v985
    %2995 = vmatpush.bf16.msra.mxu0 %v977
    %2996 = vmatpush.bf16.msra.mxu0 %v969
    %2997 = vmatpush.bf16.msra.mxu0 %v961
    %2998 = vmatpush.bf16.msra.mxu0 %v953
    %2999 = vmatpush.bf16.msra.mxu0 %v945
    %3000 = vmatpush.bf16.msra.mxu0 %v937
    %3001 = vmatpush.bf16.msra.mxu0 %v929
    %3002 = vmatmul.bf16.gmra.mxu0 %v2954
    %v3003 = vpop.f32.mrf.mxu0
    %v3004 = vadd.f32 %v2991, %v3003
    %v3005 = vpop.f32.mrf.mxu0
    %3006 = vdwg.mxu0
    %3007 = vmatpush.bf16.msra.mxu0 %v922
    %3008 = vmatpush.bf16.msra.mxu0 %v914
    %3009 = vmatpush.bf16.msra.mxu0 %v906
    %3010 = vmatpush.bf16.msra.mxu0 %v898
    %3011 = vmatpush.bf16.msra.mxu0 %v890
    %3012 = vmatpush.bf16.msra.mxu0 %v882
    %3013 = vmatpush.bf16.msra.mxu0 %v874
    %3014 = vmatpush.bf16.msra.mxu0 %v866
    %3015 = vmatmul.bf16.gmra.mxu0 %v2953
    %v3016 = vpop.f32.mrf.mxu0
    %v3017 = vadd.f32 0.0, %v3016
    %v3018 = vpop.f32.mrf.mxu0
    %3019 = vdwg.mxu0
    %3020 = vmatpush.bf16.msra.mxu0 %v986
    %3021 = vmatpush.bf16.msra.mxu0 %v978
    %3022 = vmatpush.bf16.msra.mxu0 %v970
    %3023 = vmatpush.bf16.msra.mxu0 %v962
    %3024 = vmatpush.bf16.msra.mxu0 %v954
    %3025 = vmatpush.bf16.msra.mxu0 %v946
    %3026 = vmatpush.bf16.msra.mxu0 %v938
    %3027 = vmatpush.bf16.msra.mxu0 %v930
    %3028 = vmatmul.bf16.gmra.mxu0 %v2954
    %v3029 = vpop.f32.mrf.mxu0
    %v3030 = vadd.f32 %v3017, %v3029
    %v3031 = vpop.f32.mrf.mxu0
    %3032 = vdwg.mxu0
    %3033 = vmatpush.bf16.msra.mxu0 %v923
    %3034 = vmatpush.bf16.msra.mxu0 %v915
    %3035 = vmatpush.bf16.msra.mxu0 %v907
    %3036 = vmatpush.bf16.msra.mxu0 %v899
    %3037 = vmatpush.bf16.msra.mxu0 %v891
    %3038 = vmatpush.bf16.msra.mxu0 %v883
    %3039 = vmatpush.bf16.msra.mxu0 %v875
    %3040 = vmatpush.bf16.msra.mxu0 %v867
    %3041 = vmatmul.bf16.gmra.mxu0 %v2953
    %v3042 = vpop.f32.mrf.mxu0
    %v3043 = vadd.f32 0.0, %v3042
    %v3044 = vpop.f32.mrf.mxu0
    %3045 = vdwg.mxu0
    %3046 = vmatpush.bf16.msra.mxu0 %v987
    %3047 = vmatpush.bf16.msra.mxu0 %v979
    %3048 = vmatpush.bf16.msra.mxu0 %v971
    %3049 = vmatpush.bf16.msra.mxu0 %v963
    %3050 = vmatpush.bf16.msra.mxu0 %v955
    %3051 = vmatpush.bf16.msra.mxu0 %v947
    %3052 = vmatpush.bf16.msra.mxu0 %v939
    %3053 = vmatpush.bf16.msra.mxu0 %v931
    %3054 = vmatmul.bf16.gmra.mxu0 %v2954
    %v3055 = vpop.f32.mrf.mxu0
    %v3056 = vadd.f32 %v3043, %v3055
    %v3057 = vpop.f32.mrf.mxu0
    %3058 = vdwg.mxu0
    %3059 = vmatpush.bf16.msra.mxu0 %v924
    %3060 = vmatpush.bf16.msra.mxu0 %v916
    %3061 = vmatpush.bf16.msra.mxu0 %v908
    %3062 = vmatpush.bf16.msra.mxu0 %v900
    %3063 = vmatpush.bf16.msra.mxu0 %v892
    %3064 = vmatpush.bf16.msra.mxu0 %v884
    %3065 = vmatpush.bf16.msra.mxu0 %v876
    %3066 = vmatpush.bf16.msra.mxu0 %v868
    %3067 = vmatmul.bf16.gmra.mxu0 %v2953
    %v3068 = vpop.f32.mrf.mxu0
    %v3069 = vadd.f32 0.0, %v3068
    %v3070 = vpop.f32.mrf.mxu0
    %3071 = vdwg.mxu0
    %3072 = vmatpush.bf16.msra.mxu0 %v988
    %3073 = vmatpush.bf16.msra.mxu0 %v980
    %3074 = vmatpush.bf16.msra.mxu0 %v972
    %3075 = vmatpush.bf16.msra.mxu0 %v964
    %3076 = vmatpush.bf16.msra.mxu0 %v956
    %3077 = vmatpush.bf16.msra.mxu0 %v948
    %3078 = vmatpush.bf16.msra.mxu0 %v940
    %3079 = vmatpush.bf16.msra.mxu0 %v932
    %3080 = vmatmul.bf16.gmra.mxu0 %v2954
    %v3081 = vpop.f32.mrf.mxu0
    %v3082 = vadd.f32 %v3069, %v3081
    %v3083 = vpop.f32.mrf.mxu0
    %3084 = vdwg.mxu0
    %3085 = vmatpush.bf16.msra.mxu0 %v925
    %3086 = vmatpush.bf16.msra.mxu0 %v917
    %3087 = vmatpush.bf16.msra.mxu0 %v909
    %3088 = vmatpush.bf16.msra.mxu0 %v901
    %3089 = vmatpush.bf16.msra.mxu0 %v893
    %3090 = vmatpush.bf16.msra.mxu0 %v885
    %3091 = vmatpush.bf16.msra.mxu0 %v877
    %3092 = vmatpush.bf16.msra.mxu0 %v869
    %3093 = vmatmul.bf16.gmra.mxu0 %v2953
    %v3094 = vpop.f32.mrf.mxu0
    %v3095 = vadd.f32 0.0, %v3094
    %v3096 = vpop.f32.mrf.mxu0
    %3097 = vdwg.mxu0
    %3098 = vmatpush.bf16.msra.mxu0 %v989
    %3099 = vmatpush.bf16.msra.mxu0 %v981
    %3100 = vmatpush.bf16.msra.mxu0 %v973
    %3101 = vmatpush.bf16.msra.mxu0 %v965
    %3102 = vmatpush.bf16.msra.mxu0 %v957
    %3103 = vmatpush.bf16.msra.mxu0 %v949
    %3104 = vmatpush.bf16.msra.mxu0 %v941
    %3105 = vmatpush.bf16.msra.mxu0 %v933
    %3106 = vmatmul.bf16.gmra.mxu0 %v2954
    %v3107 = vpop.f32.mrf.mxu0
    %v3108 = vadd.f32 %v3095, %v3107
    %v3109 = vpop.f32.mrf.mxu0
    %3110 = vdwg.mxu0
    %3111 = vmatpush.bf16.msra.mxu0 %v926
    %3112 = vmatpush.bf16.msra.mxu0 %v918
    %3113 = vmatpush.bf16.msra.mxu0 %v910
    %3114 = vmatpush.bf16.msra.mxu0 %v902
    %3115 = vmatpush.bf16.msra.mxu0 %v894
    %3116 = vmatpush.bf16.msra.mxu0 %v886
    %3117 = vmatpush.bf16.msra.mxu0 %v878
    %3118 = vmatpush.bf16.msra.mxu0 %v870
    %3119 = vmatmul.bf16.gmra.mxu0 %v2953
    %v3120 = vpop.f32.mrf.mxu0
    %v3121 = vadd.f32 0.0, %v3120
    %v3122 = vpop.f32.mrf.mxu0
    %3123 = vdwg.mxu0
    %3124 = vmatpush.bf16.msra.mxu0 %v990
    %3125 = vmatpush.bf16.msra.mxu0 %v982
    %3126 = vmatpush.bf16.msra.mxu0 %v974
    %3127 = vmatpush.bf16.msra.mxu0 %v966
    %3128 = vmatpush.bf16.msra.mxu0 %v958
    %3129 = vmatpush.bf16.msra.mxu0 %v950
    %3130 = vmatpush.bf16.msra.mxu0 %v942
    %3131 = vmatpush.bf16.msra.mxu0 %v934
    %3132 = vmatmul.bf16.gmra.mxu0 %v2954
    %v3133 = vpop.f32.mrf.mxu0
    %v3134 = vadd.f32 %v3121, %v3133
    %v3135 = vpop.f32.mrf.mxu0
    %3136 = vdwg.mxu0
    %3137 = vmatpush.bf16.msra.mxu0 %v927
    %3138 = vmatpush.bf16.msra.mxu0 %v919
    %3139 = vmatpush.bf16.msra.mxu0 %v911
    %3140 = vmatpush.bf16.msra.mxu0 %v903
    %3141 = vmatpush.bf16.msra.mxu0 %v895
    %3142 = vmatpush.bf16.msra.mxu0 %v887
    %3143 = vmatpush.bf16.msra.mxu0 %v879
    %3144 = vmatpush.bf16.msra.mxu0 %v871
    %3145 = vmatmul.bf16.gmra.mxu0 %v2953
    %v3146 = vpop.f32.mrf.mxu0
    %v3147 = vadd.f32 0.0, %v3146
    %v3148 = vpop.f32.mrf.mxu0
    %3149 = vdwg.mxu0
    %3150 = vmatpush.bf16.msra.mxu0 %v991
    %3151 = vmatpush.bf16.msra.mxu0 %v983
    %3152 = vmatpush.bf16.msra.mxu0 %v975
    %3153 = vmatpush.bf16.msra.mxu0 %v967
    %3154 = vmatpush.bf16.msra.mxu0 %v959
    %3155 = vmatpush.bf16.msra.mxu0 %v951
    %3156 = vmatpush.bf16.msra.mxu0 %v943
    %3157 = vmatpush.bf16.msra.mxu0 %v935
    %3158 = vmatmul.bf16.gmra.mxu0 %v2954
    %v3159 = vpop.f32.mrf.mxu0
    %v3160 = vadd.f32 %v3147, %v3159
    %v3161 = vpop.f32.mrf.mxu0
    %3162 = vdwg.mxu0
    %v3163 = vadd.f32 %v2945, %v2978
    %v3164 = vadd.f32 %v2946, %v3004
    %v3165 = vadd.f32 %v2947, %v3030
    %v3166 = vadd.f32 %v2948, %v3056
    %v3167 = vadd.f32 %v2949, %v3082
    %v3168 = vadd.f32 %v2950, %v3108
    %v3169 = vadd.f32 %v2951, %v3134
    %v3170 = vadd.f32 %v2952, %v3160
    %v3171 = vadd.f32 %v3163, %v222
    %v3172 = vadd.f32 %v3164, %v223
    %v3173 = vadd.f32 %v3165, %v224
    %v3174 = vadd.f32 %v3166, %v225
    %v3175 = vadd.f32 %v3167, %v226
    %v3176 = vadd.f32 %v3168, %v227
    %v3177 = vadd.f32 %v3169, %v228
    %v3178 = vadd.f32 %v3170, %v229
    %v3179 = vxor.u32 %v3171, 2147483648
    %v3180 = vxor.u32 %v3172, 2147483648
    %v3181 = vmul.f32 %v3179, 1.442695
    %v3182 = vpow.pop %v3181
    %v3183 = vmul.f32 %v3180, 1.442695
    %v3184 = vpow.pop %v3183
    %v3185 = vadd.f32 %v3182, 1.0
    %v3186 = vadd.f32 %v3184, 1.0
    %v3187 = vrcp.pop %v3185
    %v3188 = vmul.f32 %v3185, %v3187
    %v3189 = vsub.f32 1.0, %v3188
    %v3190 = vmul.f32 %v3187, %v3189
    %v3191 = vadd.f32 %v3187, %v3190
    %vm3192 = vweird.f32 %v3185
    %vm3193 = vweird.f32 %v3187
    %vm3194 = vmor %vm3192, %vm3193
    %v3195 = vsel %vm3194, %v3187, %v3191
    %v3196 = vand.u32 2147483647, %v3185
    %vm3197 = vcmp.eq.f32.partialorder %v3196, 8.507059e+37
    %v3198 = vand.u32 %v3185, 2147483648
    %v3199 = vor.u32 1.1754944e-38, %v3198
    %v3200 = vsel %vm3197, %v3199, %v3195
    %v3201 = vmul.f32 1.0, %v3200
    %v3202 = vrcp.pop %v3186
    %v3203 = vmul.f32 %v3186, %v3202
    %v3204 = vsub.f32 1.0, %v3203
    %v3205 = vmul.f32 %v3202, %v3204
    %v3206 = vadd.f32 %v3202, %v3205
    %vm3207 = vweird.f32 %v3186
    %vm3208 = vweird.f32 %v3202
    %vm3209 = vmor %vm3207, %vm3208
    %v3210 = vsel %vm3209, %v3202, %v3206
    %v3211 = vand.u32 2147483647, %v3186
    %vm3212 = vcmp.eq.f32.partialorder %v3211, 8.507059e+37
    %v3213 = vand.u32 %v3186, 2147483648
    %v3214 = vor.u32 1.1754944e-38, %v3213
    %v3215 = vsel %vm3212, %v3214, %v3210
    %v3216 = vmul.f32 1.0, %v3215
    %v3217 = vxor.u32 %v3173, 2147483648
    %v3218 = vxor.u32 %v3174, 2147483648
    %v3219 = vmul.f32 %v3217, 1.442695
    %v3220 = vpow.pop %v3219
    %v3221 = vmul.f32 %v3218, 1.442695
    %v3222 = vpow.pop %v3221
    %v3223 = vadd.f32 %v3220, 1.0
    %v3224 = vadd.f32 %v3222, 1.0
    %v3225 = vrcp.pop %v3223
    %v3226 = vmul.f32 %v3223, %v3225
    %v3227 = vsub.f32 1.0, %v3226
    %v3228 = vmul.f32 %v3225, %v3227
    %v3229 = vadd.f32 %v3225, %v3228
    %vm3230 = vweird.f32 %v3223
    %vm3231 = vweird.f32 %v3225
    %vm3232 = vmor %vm3230, %vm3231
    %v3233 = vsel %vm3232, %v3225, %v3229
    %v3234 = vand.u32 2147483647, %v3223
    %vm3235 = vcmp.eq.f32.partialorder %v3234, 8.507059e+37
    %v3236 = vand.u32 %v3223, 2147483648
    %v3237 = vor.u32 1.1754944e-38, %v3236
    %v3238 = vsel %vm3235, %v3237, %v3233
    %v3239 = vmul.f32 1.0, %v3238
    %v3240 = vrcp.pop %v3224
    %v3241 = vmul.f32 %v3224, %v3240
    %v3242 = vsub.f32 1.0, %v3241
    %v3243 = vmul.f32 %v3240, %v3242
    %v3244 = vadd.f32 %v3240, %v3243
    %vm3245 = vweird.f32 %v3224
    %vm3246 = vweird.f32 %v3240
    %vm3247 = vmor %vm3245, %vm3246
    %v3248 = vsel %vm3247, %v3240, %v3244
    %v3249 = vand.u32 2147483647, %v3224
    %vm3250 = vcmp.eq.f32.partialorder %v3249, 8.507059e+37
    %v3251 = vand.u32 %v3224, 2147483648
    %v3252 = vor.u32 1.1754944e-38, %v3251
    %v3253 = vsel %vm3250, %v3252, %v3248
    %v3254 = vmul.f32 1.0, %v3253
    %v3255 = vtanh.pop %v3175
    %v3256 = vtanh.pop %v3176
    %v3257 = vxor.u32 %v3177, 2147483648
    %v3258 = vxor.u32 %v3178, 2147483648
    %v3259 = vmul.f32 %v3257, 1.442695
    %v3260 = vpow.pop %v3259
    %v3261 = vmul.f32 %v3258, 1.442695
    %v3262 = vpow.pop %v3261
    %v3263 = vadd.f32 %v3260, 1.0
    %v3264 = vadd.f32 %v3262, 1.0
    %v3265 = vrcp.pop %v3263
    %v3266 = vmul.f32 %v3263, %v3265
    %v3267 = vsub.f32 1.0, %v3266
    %v3268 = vmul.f32 %v3265, %v3267
    %v3269 = vadd.f32 %v3265, %v3268
    %vm3270 = vweird.f32 %v3263
    %vm3271 = vweird.f32 %v3265
    %vm3272 = vmor %vm3270, %vm3271
    %v3273 = vsel %vm3272, %v3265, %v3269
    %v3274 = vand.u32 2147483647, %v3263
    %vm3275 = vcmp.eq.f32.partialorder %v3274, 8.507059e+37
    %v3276 = vand.u32 %v3263, 2147483648
    %v3277 = vor.u32 1.1754944e-38, %v3276
    %v3278 = vsel %vm3275, %v3277, %v3273
    %v3279 = vmul.f32 1.0, %v3278
    %v3280 = vrcp.pop %v3264
    %v3281 = vmul.f32 %v3264, %v3280
    %v3282 = vsub.f32 1.0, %v3281
    %v3283 = vmul.f32 %v3280, %v3282
    %v3284 = vadd.f32 %v3280, %v3283
    %vm3285 = vweird.f32 %v3264
    %vm3286 = vweird.f32 %v3280
    %vm3287 = vmor %vm3285, %vm3286
    %v3288 = vsel %vm3287, %v3280, %v3284
    %v3289 = vand.u32 2147483647, %v3264
    %vm3290 = vcmp.eq.f32.partialorder %v3289, 8.507059e+37
    %v3291 = vand.u32 %v3264, 2147483648
    %v3292 = vor.u32 1.1754944e-38, %v3291
    %v3293 = vsel %vm3290, %v3292, %v3288
    %v3294 = vmul.f32 1.0, %v3293
    %v3295 = vmul.f32 %v3239, %v2838
    %v3296 = vmul.f32 %v3254, %v2839
    %v3297 = vmul.f32 %v3201, %v3255
    %v3298 = vmul.f32 %v3216, %v3256
    %v3299 = vadd.f32 %v3295, %v3297
    %v3300 = vadd.f32 %v3296, %v3298
    %v3301 = vtanh.pop %v3299
    %v3302 = vtanh.pop %v3300
    %v3303 = vmul.f32 %v3279, %v3301
    %v3304 = vmul.f32 %v3294, %v3302
    %v3305 = vmul.f32 %v2943, %v241
    %v3306 = vmul.f32 %v2922, %v245
    %v3307 = vadd.f32 %v3305, %v3306
    %v3308 = vadd.f32 %v3307, %v249
    %v3309 = vxor.u32 %v3308, 2147483648
    %v3310 = vmul.f32 %v3309, 1.442695
    %v3311 = vpow.pop %v3310
    %v3312 = vadd.f32 %v3311, 1.0
    %v3313 = vrcp.pop %v3312
    %v3314 = vmul.f32 %v3312, %v3313
    %v3315 = vsub.f32 1.0, %v3314
    %v3316 = vmul.f32 %v3313, %v3315
    %v3317 = vadd.f32 %v3313, %v3316
    %vm3318 = vweird.f32 %v3312
    %vm3319 = vweird.f32 %v3313
    %vm3320 = vmor %vm3318, %vm3319
    %v3321 = vsel %vm3320, %v3313, %v3317
    %v3322 = vand.u32 2147483647, %v3312
    %vm3323 = vcmp.eq.f32.partialorder %v3322, 8.507059e+37
    %v3324 = vand.u32 %v3312, 2147483648
    %v3325 = vor.u32 1.1754944e-38, %v3324
    %v3326 = vsel %vm3323, %v3325, %v3321
    %v3327 = vmul.f32 1.0, %v3326
    %v3328 = vmul.f32 %v2943, %v242
    %v3329 = vmul.f32 %v2922, %v246
    %v3330 = vadd.f32 %v3328, %v3329
    %v3331 = vadd.f32 %v3330, %v250
    %v3332 = vxor.u32 %v3331, 2147483648
    %v3333 = vmul.f32 %v3332, 1.442695
    %v3334 = vpow.pop %v3333
    %v3335 = vadd.f32 %v3334, 1.0
    %v3336 = vrcp.pop %v3335
    %v3337 = vmul.f32 %v3335, %v3336
    %v3338 = vsub.f32 1.0, %v3337
    %v3339 = vmul.f32 %v3336, %v3338
    %v3340 = vadd.f32 %v3336, %v3339
    %vm3341 = vweird.f32 %v3335
    %vm3342 = vweird.f32 %v3336
    %vm3343 = vmor %vm3341, %vm3342
    %v3344 = vsel %vm3343, %v3336, %v3340
    %v3345 = vand.u32 2147483647, %v3335
    %vm3346 = vcmp.eq.f32.partialorder %v3345, 8.507059e+37
    %v3347 = vand.u32 %v3335, 2147483648
    %v3348 = vor.u32 1.1754944e-38, %v3347
    %v3349 = vsel %vm3346, %v3348, %v3344
    %v3350 = vmul.f32 1.0, %v3349
    %v3351 = vmul.f32 %v2943, %v243
    %v3352 = vmul.f32 %v2922, %v247
    %v3353 = vadd.f32 %v3351, %v3352
    %v3354 = vadd.f32 %v3353, %v251
    %v3355 = vtanh.pop %v3354
    %v3356 = vmul.f32 %v2943, %v244
    %v3357 = vmul.f32 %v2922, %v248
    %v3358 = vadd.f32 %v3356, %v3357
    %v3359 = vadd.f32 %v3358, %v252
    %v3360 = vxor.u32 %v3359, 2147483648
    %v3361 = vmul.f32 %v3360, 1.442695
    %v3362 = vpow.pop %v3361
    %v3363 = vadd.f32 %v3362, 1.0
    %v3364 = vrcp.pop %v3363
    %v3365 = vmul.f32 %v3363, %v3364
    %v3366 = vsub.f32 1.0, %v3365
    %v3367 = vmul.f32 %v3364, %v3366
    %v3368 = vadd.f32 %v3364, %v3367
    %vm3369 = vweird.f32 %v3363
    %vm3370 = vweird.f32 %v3364
    %vm3371 = vmor %vm3369, %vm3370
    %v3372 = vsel %vm3371, %v3364, %v3368
    %v3373 = vand.u32 2147483647, %v3363
    %vm3374 = vcmp.eq.f32.partialorder %v3373, 8.507059e+37
    %v3375 = vand.u32 %v3363, 2147483648
    %v3376 = vor.u32 1.1754944e-38, %v3375
    %v3377 = vsel %vm3374, %v3376, %v3372
    %v3378 = vmul.f32 1.0, %v3377
    %v3379 = vmul.f32 %v3350, %v2920
    %v3380 = vmul.f32 %v3327, %v3355
    %v3381 = vadd.f32 %v3379, %v3380
    %v3382 = vtanh.pop %v3381
    %v3383 = vmul.f32 %v3378, %v3382
    %3385 = vrot.lane.b32.xlu0 %v3383, 5
    %v3386 = vpop.permute.xlu0 %3385
    %vm3388 = vcmask 48168
    %3389 = vst.msk [vmem:[#allocation2] sm:$0xff] %vm3388, %v3386
    %3390 = vrot.lane.b32.xlu0 %v3383, 4
    %v3391 = vpop.permute.xlu0 %3390
    %3393 = vst.msk [vmem:[%s454] sm:$0xff] %vm3388, %v3391
    %3394 = vrot.lane.b32.xlu0 %v3383, 3
    %v3395 = vpop.permute.xlu0 %3394
    %3397 = vst.msk [vmem:[%s459] sm:$0xff] %vm3388, %v3395
    %3398 = vrot.lane.b32.xlu0 %v3383, 2
    %v3399 = vpop.permute.xlu0 %3398
    %3401 = vst.msk [vmem:[%s464] sm:$0xff] %vm3388, %v3399
    %3402 = vset.pattern.permute.xlu0 6
    %3403 = vperm.xlu0 %3402, %v72
    %v3404 = vpop.permute.xlu0 %3403
    %v3406 = vmul.f32 %v3404, %v204
    %v3407 = vmul.f32 %v3404, %v205
    %v3408 = vmul.f32 %v3404, %v206
    %v3409 = vmul.f32 %v3404, %v207
    %v3410 = vmul.f32 %v3404, %v208
    %v3411 = vmul.f32 %v3404, %v209
    %v3412 = vmul.f32 %v3404, %v210
    %v3413 = vmul.f32 %v3404, %v211
    %v3414 = vpack.c.bf16 %v3303, %v3303
    %v3415 = vpack.c.bf16 %v3304, %v3304
    %3416 = vmatpush.bf16.msra.mxu0 %v920
    %3417 = vmatpush.bf16.msra.mxu0 %v912
    %3418 = vmatpush.bf16.msra.mxu0 %v904
    %3419 = vmatpush.bf16.msra.mxu0 %v896
    %3420 = vmatpush.bf16.msra.mxu0 %v888
    %3421 = vmatpush.bf16.msra.mxu0 %v880
    %3422 = vmatpush.bf16.msra.mxu0 %v872
    %3423 = vmatpush.bf16.msra.mxu0 %v864
    %3424 = vmatmul.bf16.gmra.mxu0 %v3414
    %v3425 = vpop.f32.mrf.mxu0
    %v3426 = vadd.f32 0.0, %v3425
    %v3427 = vpop.f32.mrf.mxu0
    %3428 = vdwg.mxu0
    %3429 = vmatpush.bf16.msra.mxu0 %v984
    %3430 = vmatpush.bf16.msra.mxu0 %v976
    %3431 = vmatpush.bf16.msra.mxu0 %v968
    %3432 = vmatpush.bf16.msra.mxu0 %v960
    %3433 = vmatpush.bf16.msra.mxu0 %v952
    %3434 = vmatpush.bf16.msra.mxu0 %v944
    %3435 = vmatpush.bf16.msra.mxu0 %v936
    %3436 = vmatpush.bf16.msra.mxu0 %v928
    %3437 = vmatmul.bf16.gmra.mxu0 %v3415
    %v3438 = vpop.f32.mrf.mxu0
    %v3439 = vadd.f32 %v3426, %v3438
    %v3440 = vpop.f32.mrf.mxu0
    %3441 = vdwg.mxu0
    %3442 = vmatpush.bf16.msra.mxu0 %v921
    %3443 = vmatpush.bf16.msra.mxu0 %v913
    %3444 = vmatpush.bf16.msra.mxu0 %v905
    %3445 = vmatpush.bf16.msra.mxu0 %v897
    %3446 = vmatpush.bf16.msra.mxu0 %v889
    %3447 = vmatpush.bf16.msra.mxu0 %v881
    %3448 = vmatpush.bf16.msra.mxu0 %v873
    %3449 = vmatpush.bf16.msra.mxu0 %v865
    %3450 = vmatmul.bf16.gmra.mxu0 %v3414
    %v3451 = vpop.f32.mrf.mxu0
    %v3452 = vadd.f32 0.0, %v3451
    %v3453 = vpop.f32.mrf.mxu0
    %3454 = vdwg.mxu0
    %3455 = vmatpush.bf16.msra.mxu0 %v985
    %3456 = vmatpush.bf16.msra.mxu0 %v977
    %3457 = vmatpush.bf16.msra.mxu0 %v969
    %3458 = vmatpush.bf16.msra.mxu0 %v961
    %3459 = vmatpush.bf16.msra.mxu0 %v953
    %3460 = vmatpush.bf16.msra.mxu0 %v945
    %3461 = vmatpush.bf16.msra.mxu0 %v937
    %3462 = vmatpush.bf16.msra.mxu0 %v929
    %3463 = vmatmul.bf16.gmra.mxu0 %v3415
    %v3464 = vpop.f32.mrf.mxu0
    %v3465 = vadd.f32 %v3452, %v3464
    %v3466 = vpop.f32.mrf.mxu0
    %3467 = vdwg.mxu0
    %3468 = vmatpush.bf16.msra.mxu0 %v922
    %3469 = vmatpush.bf16.msra.mxu0 %v914
    %3470 = vmatpush.bf16.msra.mxu0 %v906
    %3471 = vmatpush.bf16.msra.mxu0 %v898
    %3472 = vmatpush.bf16.msra.mxu0 %v890
    %3473 = vmatpush.bf16.msra.mxu0 %v882
    %3474 = vmatpush.bf16.msra.mxu0 %v874
    %3475 = vmatpush.bf16.msra.mxu0 %v866
    %3476 = vmatmul.bf16.gmra.mxu0 %v3414
    %v3477 = vpop.f32.mrf.mxu0
    %v3478 = vadd.f32 0.0, %v3477
    %v3479 = vpop.f32.mrf.mxu0
    %3480 = vdwg.mxu0
    %3481 = vmatpush.bf16.msra.mxu0 %v986
    %3482 = vmatpush.bf16.msra.mxu0 %v978
    %3483 = vmatpush.bf16.msra.mxu0 %v970
    %3484 = vmatpush.bf16.msra.mxu0 %v962
    %3485 = vmatpush.bf16.msra.mxu0 %v954
    %3486 = vmatpush.bf16.msra.mxu0 %v946
    %3487 = vmatpush.bf16.msra.mxu0 %v938
    %3488 = vmatpush.bf16.msra.mxu0 %v930
    %3489 = vmatmul.bf16.gmra.mxu0 %v3415
    %v3490 = vpop.f32.mrf.mxu0
    %v3491 = vadd.f32 %v3478, %v3490
    %v3492 = vpop.f32.mrf.mxu0
    %3493 = vdwg.mxu0
    %3494 = vmatpush.bf16.msra.mxu0 %v923
    %3495 = vmatpush.bf16.msra.mxu0 %v915
    %3496 = vmatpush.bf16.msra.mxu0 %v907
    %3497 = vmatpush.bf16.msra.mxu0 %v899
    %3498 = vmatpush.bf16.msra.mxu0 %v891
    %3499 = vmatpush.bf16.msra.mxu0 %v883
    %3500 = vmatpush.bf16.msra.mxu0 %v875
    %3501 = vmatpush.bf16.msra.mxu0 %v867
    %3502 = vmatmul.bf16.gmra.mxu0 %v3414
    %v3503 = vpop.f32.mrf.mxu0
    %v3504 = vadd.f32 0.0, %v3503
    %v3505 = vpop.f32.mrf.mxu0
    %3506 = vdwg.mxu0
    %3507 = vmatpush.bf16.msra.mxu0 %v987
    %3508 = vmatpush.bf16.msra.mxu0 %v979
    %3509 = vmatpush.bf16.msra.mxu0 %v971
    %3510 = vmatpush.bf16.msra.mxu0 %v963
    %3511 = vmatpush.bf16.msra.mxu0 %v955
    %3512 = vmatpush.bf16.msra.mxu0 %v947
    %3513 = vmatpush.bf16.msra.mxu0 %v939
    %3514 = vmatpush.bf16.msra.mxu0 %v931
    %3515 = vmatmul.bf16.gmra.mxu0 %v3415
    %v3516 = vpop.f32.mrf.mxu0
    %v3517 = vadd.f32 %v3504, %v3516
    %v3518 = vpop.f32.mrf.mxu0
    %3519 = vdwg.mxu0
    %3520 = vmatpush.bf16.msra.mxu0 %v924
    %3521 = vmatpush.bf16.msra.mxu0 %v916
    %3522 = vmatpush.bf16.msra.mxu0 %v908
    %3523 = vmatpush.bf16.msra.mxu0 %v900
    %3524 = vmatpush.bf16.msra.mxu0 %v892
    %3525 = vmatpush.bf16.msra.mxu0 %v884
    %3526 = vmatpush.bf16.msra.mxu0 %v876
    %3527 = vmatpush.bf16.msra.mxu0 %v868
    %3528 = vmatmul.bf16.gmra.mxu0 %v3414
    %v3529 = vpop.f32.mrf.mxu0
    %v3530 = vadd.f32 0.0, %v3529
    %v3531 = vpop.f32.mrf.mxu0
    %3532 = vdwg.mxu0
    %3533 = vmatpush.bf16.msra.mxu0 %v988
    %3534 = vmatpush.bf16.msra.mxu0 %v980
    %3535 = vmatpush.bf16.msra.mxu0 %v972
    %3536 = vmatpush.bf16.msra.mxu0 %v964
    %3537 = vmatpush.bf16.msra.mxu0 %v956
    %3538 = vmatpush.bf16.msra.mxu0 %v948
    %3539 = vmatpush.bf16.msra.mxu0 %v940
    %3540 = vmatpush.bf16.msra.mxu0 %v932
    %3541 = vmatmul.bf16.gmra.mxu0 %v3415
    %v3542 = vpop.f32.mrf.mxu0
    %v3543 = vadd.f32 %v3530, %v3542
    %v3544 = vpop.f32.mrf.mxu0
    %3545 = vdwg.mxu0
    %3546 = vmatpush.bf16.msra.mxu0 %v925
    %3547 = vmatpush.bf16.msra.mxu0 %v917
    %3548 = vmatpush.bf16.msra.mxu0 %v909
    %3549 = vmatpush.bf16.msra.mxu0 %v901
    %3550 = vmatpush.bf16.msra.mxu0 %v893
    %3551 = vmatpush.bf16.msra.mxu0 %v885
    %3552 = vmatpush.bf16.msra.mxu0 %v877
    %3553 = vmatpush.bf16.msra.mxu0 %v869
    %3554 = vmatmul.bf16.gmra.mxu0 %v3414
    %v3555 = vpop.f32.mrf.mxu0
    %v3556 = vadd.f32 0.0, %v3555
    %v3557 = vpop.f32.mrf.mxu0
    %3558 = vdwg.mxu0
    %3559 = vmatpush.bf16.msra.mxu0 %v989
    %3560 = vmatpush.bf16.msra.mxu0 %v981
    %3561 = vmatpush.bf16.msra.mxu0 %v973
    %3562 = vmatpush.bf16.msra.mxu0 %v965
    %3563 = vmatpush.bf16.msra.mxu0 %v957
    %3564 = vmatpush.bf16.msra.mxu0 %v949
    %3565 = vmatpush.bf16.msra.mxu0 %v941
    %3566 = vmatpush.bf16.msra.mxu0 %v933
    %3567 = vmatmul.bf16.gmra.mxu0 %v3415
    %v3568 = vpop.f32.mrf.mxu0
    %v3569 = vadd.f32 %v3556, %v3568
    %v3570 = vpop.f32.mrf.mxu0
    %3571 = vdwg.mxu0
    %3572 = vmatpush.bf16.msra.mxu0 %v926
    %3573 = vmatpush.bf16.msra.mxu0 %v918
    %3574 = vmatpush.bf16.msra.mxu0 %v910
    %3575 = vmatpush.bf16.msra.mxu0 %v902
    %3576 = vmatpush.bf16.msra.mxu0 %v894
    %3577 = vmatpush.bf16.msra.mxu0 %v886
    %3578 = vmatpush.bf16.msra.mxu0 %v878
    %3579 = vmatpush.bf16.msra.mxu0 %v870
    %3580 = vmatmul.bf16.gmra.mxu0 %v3414
    %v3581 = vpop.f32.mrf.mxu0
    %v3582 = vadd.f32 0.0, %v3581
    %v3583 = vpop.f32.mrf.mxu0
    %3584 = vdwg.mxu0
    %3585 = vmatpush.bf16.msra.mxu0 %v990
    %3586 = vmatpush.bf16.msra.mxu0 %v982
    %3587 = vmatpush.bf16.msra.mxu0 %v974
    %3588 = vmatpush.bf16.msra.mxu0 %v966
    %3589 = vmatpush.bf16.msra.mxu0 %v958
    %3590 = vmatpush.bf16.msra.mxu0 %v950
    %3591 = vmatpush.bf16.msra.mxu0 %v942
    %3592 = vmatpush.bf16.msra.mxu0 %v934
    %3593 = vmatmul.bf16.gmra.mxu0 %v3415
    %v3594 = vpop.f32.mrf.mxu0
    %v3595 = vadd.f32 %v3582, %v3594
    %v3596 = vpop.f32.mrf.mxu0
    %3597 = vdwg.mxu0
    %3598 = vmatpush.bf16.msra.mxu0 %v927
    %3599 = vmatpush.bf16.msra.mxu0 %v919
    %3600 = vmatpush.bf16.msra.mxu0 %v911
    %3601 = vmatpush.bf16.msra.mxu0 %v903
    %3602 = vmatpush.bf16.msra.mxu0 %v895
    %3603 = vmatpush.bf16.msra.mxu0 %v887
    %3604 = vmatpush.bf16.msra.mxu0 %v879
    %3605 = vmatpush.bf16.msra.mxu0 %v871
    %3606 = vmatmul.bf16.gmra.mxu0 %v3414
    %v3607 = vpop.f32.mrf.mxu0
    %v3608 = vadd.f32 0.0, %v3607
    %v3609 = vpop.f32.mrf.mxu0
    %3610 = vdwg.mxu0
    %3611 = vmatpush.bf16.msra.mxu0 %v991
    %3612 = vmatpush.bf16.msra.mxu0 %v983
    %3613 = vmatpush.bf16.msra.mxu0 %v975
    %3614 = vmatpush.bf16.msra.mxu0 %v967
    %3615 = vmatpush.bf16.msra.mxu0 %v959
    %3616 = vmatpush.bf16.msra.mxu0 %v951
    %3617 = vmatpush.bf16.msra.mxu0 %v943
    %3618 = vmatpush.bf16.msra.mxu0 %v935
    %3619 = vmatmul.bf16.gmra.mxu0 %v3415
    %v3620 = vpop.f32.mrf.mxu0
    %v3621 = vadd.f32 %v3608, %v3620
    %v3622 = vpop.f32.mrf.mxu0
    %3623 = vdwg.mxu0
    %v3624 = vadd.f32 %v3406, %v3439
    %v3625 = vadd.f32 %v3407, %v3465
    %v3626 = vadd.f32 %v3408, %v3491
    %v3627 = vadd.f32 %v3409, %v3517
    %v3628 = vadd.f32 %v3410, %v3543
    %v3629 = vadd.f32 %v3411, %v3569
    %v3630 = vadd.f32 %v3412, %v3595
    %v3631 = vadd.f32 %v3413, %v3621
    %v3632 = vadd.f32 %v3624, %v222
    %v3633 = vadd.f32 %v3625, %v223
    %v3634 = vadd.f32 %v3626, %v224
    %v3635 = vadd.f32 %v3627, %v225
    %v3636 = vadd.f32 %v3628, %v226
    %v3637 = vadd.f32 %v3629, %v227
    %v3638 = vadd.f32 %v3630, %v228
    %v3639 = vadd.f32 %v3631, %v229
    %v3640 = vxor.u32 %v3632, 2147483648
    %v3641 = vxor.u32 %v3633, 2147483648
    %v3642 = vmul.f32 %v3640, 1.442695
    %v3643 = vpow.pop %v3642
    %v3644 = vmul.f32 %v3641, 1.442695
    %v3645 = vpow.pop %v3644
    %v3646 = vadd.f32 %v3643, 1.0
    %v3647 = vadd.f32 %v3645, 1.0
    %v3648 = vrcp.pop %v3646
    %v3649 = vmul.f32 %v3646, %v3648
    %v3650 = vsub.f32 1.0, %v3649
    %v3651 = vmul.f32 %v3648, %v3650
    %v3652 = vadd.f32 %v3648, %v3651
    %vm3653 = vweird.f32 %v3646
    %vm3654 = vweird.f32 %v3648
    %vm3655 = vmor %vm3653, %vm3654
    %v3656 = vsel %vm3655, %v3648, %v3652
    %v3657 = vand.u32 2147483647, %v3646
    %vm3658 = vcmp.eq.f32.partialorder %v3657, 8.507059e+37
    %v3659 = vand.u32 %v3646, 2147483648
    %v3660 = vor.u32 1.1754944e-38, %v3659
    %v3661 = vsel %vm3658, %v3660, %v3656
    %v3662 = vmul.f32 1.0, %v3661
    %v3663 = vrcp.pop %v3647
    %v3664 = vmul.f32 %v3647, %v3663
    %v3665 = vsub.f32 1.0, %v3664
    %v3666 = vmul.f32 %v3663, %v3665
    %v3667 = vadd.f32 %v3663, %v3666
    %vm3668 = vweird.f32 %v3647
    %vm3669 = vweird.f32 %v3663
    %vm3670 = vmor %vm3668, %vm3669
    %v3671 = vsel %vm3670, %v3663, %v3667
    %v3672 = vand.u32 2147483647, %v3647
    %vm3673 = vcmp.eq.f32.partialorder %v3672, 8.507059e+37
    %v3674 = vand.u32 %v3647, 2147483648
    %v3675 = vor.u32 1.1754944e-38, %v3674
    %v3676 = vsel %vm3673, %v3675, %v3671
    %v3677 = vmul.f32 1.0, %v3676
    %v3678 = vxor.u32 %v3634, 2147483648
    %v3679 = vxor.u32 %v3635, 2147483648
    %v3680 = vmul.f32 %v3678, 1.442695
    %v3681 = vpow.pop %v3680
    %v3682 = vmul.f32 %v3679, 1.442695
    %v3683 = vpow.pop %v3682
    %v3684 = vadd.f32 %v3681, 1.0
    %v3685 = vadd.f32 %v3683, 1.0
    %v3686 = vrcp.pop %v3684
    %v3687 = vmul.f32 %v3684, %v3686
    %v3688 = vsub.f32 1.0, %v3687
    %v3689 = vmul.f32 %v3686, %v3688
    %v3690 = vadd.f32 %v3686, %v3689
    %vm3691 = vweird.f32 %v3684
    %vm3692 = vweird.f32 %v3686
    %vm3693 = vmor %vm3691, %vm3692
    %v3694 = vsel %vm3693, %v3686, %v3690
    %v3695 = vand.u32 2147483647, %v3684
    %vm3696 = vcmp.eq.f32.partialorder %v3695, 8.507059e+37
    %v3697 = vand.u32 %v3684, 2147483648
    %v3698 = vor.u32 1.1754944e-38, %v3697
    %v3699 = vsel %vm3696, %v3698, %v3694
    %v3700 = vmul.f32 1.0, %v3699
    %v3701 = vrcp.pop %v3685
    %v3702 = vmul.f32 %v3685, %v3701
    %v3703 = vsub.f32 1.0, %v3702
    %v3704 = vmul.f32 %v3701, %v3703
    %v3705 = vadd.f32 %v3701, %v3704
    %vm3706 = vweird.f32 %v3685
    %vm3707 = vweird.f32 %v3701
    %vm3708 = vmor %vm3706, %vm3707
    %v3709 = vsel %vm3708, %v3701, %v3705
    %v3710 = vand.u32 2147483647, %v3685
    %vm3711 = vcmp.eq.f32.partialorder %v3710, 8.507059e+37
    %v3712 = vand.u32 %v3685, 2147483648
    %v3713 = vor.u32 1.1754944e-38, %v3712
    %v3714 = vsel %vm3711, %v3713, %v3709
    %v3715 = vmul.f32 1.0, %v3714
    %v3716 = vtanh.pop %v3636
    %v3717 = vtanh.pop %v3637
    %v3718 = vxor.u32 %v3638, 2147483648
    %v3719 = vxor.u32 %v3639, 2147483648
    %v3720 = vmul.f32 %v3718, 1.442695
    %v3721 = vpow.pop %v3720
    %v3722 = vmul.f32 %v3719, 1.442695
    %v3723 = vpow.pop %v3722
    %v3724 = vadd.f32 %v3721, 1.0
    %v3725 = vadd.f32 %v3723, 1.0
    %v3726 = vrcp.pop %v3724
    %v3727 = vmul.f32 %v3724, %v3726
    %v3728 = vsub.f32 1.0, %v3727
    %v3729 = vmul.f32 %v3726, %v3728
    %v3730 = vadd.f32 %v3726, %v3729
    %vm3731 = vweird.f32 %v3724
    %vm3732 = vweird.f32 %v3726
    %vm3733 = vmor %vm3731, %vm3732
    %v3734 = vsel %vm3733, %v3726, %v3730
    %v3735 = vand.u32 2147483647, %v3724
    %vm3736 = vcmp.eq.f32.partialorder %v3735, 8.507059e+37
    %v3737 = vand.u32 %v3724, 2147483648
    %v3738 = vor.u32 1.1754944e-38, %v3737
    %v3739 = vsel %vm3736, %v3738, %v3734
    %v3740 = vmul.f32 1.0, %v3739
    %v3741 = vrcp.pop %v3725
    %v3742 = vmul.f32 %v3725, %v3741
    %v3743 = vsub.f32 1.0, %v3742
    %v3744 = vmul.f32 %v3741, %v3743
    %v3745 = vadd.f32 %v3741, %v3744
    %vm3746 = vweird.f32 %v3725
    %vm3747 = vweird.f32 %v3741
    %vm3748 = vmor %vm3746, %vm3747
    %v3749 = vsel %vm3748, %v3741, %v3745
    %v3750 = vand.u32 2147483647, %v3725
    %vm3751 = vcmp.eq.f32.partialorder %v3750, 8.507059e+37
    %v3752 = vand.u32 %v3725, 2147483648
    %v3753 = vor.u32 1.1754944e-38, %v3752
    %v3754 = vsel %vm3751, %v3753, %v3749
    %v3755 = vmul.f32 1.0, %v3754
    %v3756 = vmul.f32 %v3700, %v3299
    %v3757 = vmul.f32 %v3715, %v3300
    %v3758 = vmul.f32 %v3662, %v3716
    %v3759 = vmul.f32 %v3677, %v3717
    %v3760 = vadd.f32 %v3756, %v3758
    %v3761 = vadd.f32 %v3757, %v3759
    %v3762 = vtanh.pop %v3760
    %v3763 = vtanh.pop %v3761
    %v3764 = vmul.f32 %v3740, %v3762
    %v3765 = vmul.f32 %v3755, %v3763
    %v3766 = vmul.f32 %v3404, %v241
    %v3767 = vmul.f32 %v3383, %v245
    %v3768 = vadd.f32 %v3766, %v3767
    %v3769 = vadd.f32 %v3768, %v249
    %v3770 = vxor.u32 %v3769, 2147483648
    %v3771 = vmul.f32 %v3770, 1.442695
    %v3772 = vpow.pop %v3771
    %v3773 = vadd.f32 %v3772, 1.0
    %v3774 = vrcp.pop %v3773
    %v3775 = vmul.f32 %v3773, %v3774
    %v3776 = vsub.f32 1.0, %v3775
    %v3777 = vmul.f32 %v3774, %v3776
    %v3778 = vadd.f32 %v3774, %v3777
    %vm3779 = vweird.f32 %v3773
    %vm3780 = vweird.f32 %v3774
    %vm3781 = vmor %vm3779, %vm3780
    %v3782 = vsel %vm3781, %v3774, %v3778
    %v3783 = vand.u32 2147483647, %v3773
    %vm3784 = vcmp.eq.f32.partialorder %v3783, 8.507059e+37
    %v3785 = vand.u32 %v3773, 2147483648
    %v3786 = vor.u32 1.1754944e-38, %v3785
    %v3787 = vsel %vm3784, %v3786, %v3782
    %v3788 = vmul.f32 1.0, %v3787
    %v3789 = vmul.f32 %v3404, %v242
    %v3790 = vmul.f32 %v3383, %v246
    %v3791 = vadd.f32 %v3789, %v3790
    %v3792 = vadd.f32 %v3791, %v250
    %v3793 = vxor.u32 %v3792, 2147483648
    %v3794 = vmul.f32 %v3793, 1.442695
    %v3795 = vpow.pop %v3794
    %v3796 = vadd.f32 %v3795, 1.0
    %v3797 = vrcp.pop %v3796
    %v3798 = vmul.f32 %v3796, %v3797
    %v3799 = vsub.f32 1.0, %v3798
    %v3800 = vmul.f32 %v3797, %v3799
    %v3801 = vadd.f32 %v3797, %v3800
    %vm3802 = vweird.f32 %v3796
    %vm3803 = vweird.f32 %v3797
    %vm3804 = vmor %vm3802, %vm3803
    %v3805 = vsel %vm3804, %v3797, %v3801
    %v3806 = vand.u32 2147483647, %v3796
    %vm3807 = vcmp.eq.f32.partialorder %v3806, 8.507059e+37
    %v3808 = vand.u32 %v3796, 2147483648
    %v3809 = vor.u32 1.1754944e-38, %v3808
    %v3810 = vsel %vm3807, %v3809, %v3805
    %v3811 = vmul.f32 1.0, %v3810
    %v3812 = vmul.f32 %v3404, %v243
    %v3813 = vmul.f32 %v3383, %v247
    %v3814 = vadd.f32 %v3812, %v3813
    %v3815 = vadd.f32 %v3814, %v251
    %v3816 = vtanh.pop %v3815
    %v3817 = vmul.f32 %v3404, %v244
    %v3818 = vmul.f32 %v3383, %v248
    %v3819 = vadd.f32 %v3817, %v3818
    %v3820 = vadd.f32 %v3819, %v252
    %v3821 = vxor.u32 %v3820, 2147483648
    %v3822 = vmul.f32 %v3821, 1.442695
    %v3823 = vpow.pop %v3822
    %v3824 = vadd.f32 %v3823, 1.0
    %v3825 = vrcp.pop %v3824
    %v3826 = vmul.f32 %v3824, %v3825
    %v3827 = vsub.f32 1.0, %v3826
    %v3828 = vmul.f32 %v3825, %v3827
    %v3829 = vadd.f32 %v3825, %v3828
    %vm3830 = vweird.f32 %v3824
    %vm3831 = vweird.f32 %v3825
    %vm3832 = vmor %vm3830, %vm3831
    %v3833 = vsel %vm3832, %v3825, %v3829
    %v3834 = vand.u32 2147483647, %v3824
    %vm3835 = vcmp.eq.f32.partialorder %v3834, 8.507059e+37
    %v3836 = vand.u32 %v3824, 2147483648
    %v3837 = vor.u32 1.1754944e-38, %v3836
    %v3838 = vsel %vm3835, %v3837, %v3833
    %v3839 = vmul.f32 1.0, %v3838
    %v3840 = vmul.f32 %v3811, %v3381
    %v3841 = vmul.f32 %v3788, %v3816
    %v3842 = vadd.f32 %v3840, %v3841
    %v3843 = vtanh.pop %v3842
    %v3844 = vmul.f32 %v3839, %v3843
    %3846 = vrot.lane.b32.xlu0 %v3844, 6
    %v3847 = vpop.permute.xlu0 %3846
    %vm3849 = vcmask 56368
    %3850 = vst.msk [vmem:[#allocation2] sm:$0xff] %vm3849, %v3847
    %3851 = vrot.lane.b32.xlu0 %v3844, 5
    %v3852 = vpop.permute.xlu0 %3851
    %3854 = vst.msk [vmem:[%s454] sm:$0xff] %vm3849, %v3852
    %3855 = vrot.lane.b32.xlu0 %v3844, 4
    %v3856 = vpop.permute.xlu0 %3855
    %3858 = vst.msk [vmem:[%s459] sm:$0xff] %vm3849, %v3856
    %3859 = vrot.lane.b32.xlu0 %v3844, 3
    %v3860 = vpop.permute.xlu0 %3859
    %3862 = vst.msk [vmem:[%s464] sm:$0xff] %vm3849, %v3860
    %3863 = vset.pattern.permute.xlu0 7
    %3864 = vperm.xlu0 %3863, %v72
    %v3865 = vpop.permute.xlu0 %3864
    %v3867 = vmul.f32 %v3865, %v204
    %v3868 = vmul.f32 %v3865, %v205
    %v3869 = vmul.f32 %v3865, %v206
    %v3870 = vmul.f32 %v3865, %v207
    %v3871 = vmul.f32 %v3865, %v208
    %v3872 = vmul.f32 %v3865, %v209
    %v3873 = vmul.f32 %v3865, %v210
    %v3874 = vmul.f32 %v3865, %v211
    %v3875 = vpack.c.bf16 %v3764, %v3764
    %v3876 = vpack.c.bf16 %v3765, %v3765
    %3877 = vmatpush.bf16.msra.mxu0 %v920
    %3878 = vmatpush.bf16.msra.mxu0 %v912
    %3879 = vmatpush.bf16.msra.mxu0 %v904
    %3880 = vmatpush.bf16.msra.mxu0 %v896
    %3881 = vmatpush.bf16.msra.mxu0 %v888
    %3882 = vmatpush.bf16.msra.mxu0 %v880
    %3883 = vmatpush.bf16.msra.mxu0 %v872
    %3884 = vmatpush.bf16.msra.mxu0 %v864
    %3885 = vmatmul.bf16.gmra.mxu0 %v3875
    %v3886 = vpop.f32.mrf.mxu0
    %v3887 = vadd.f32 0.0, %v3886
    %v3888 = vpop.f32.mrf.mxu0
    %3889 = vdwg.mxu0
    %3890 = vmatpush.bf16.msra.mxu0 %v984
    %3891 = vmatpush.bf16.msra.mxu0 %v976
    %3892 = vmatpush.bf16.msra.mxu0 %v968
    %3893 = vmatpush.bf16.msra.mxu0 %v960
    %3894 = vmatpush.bf16.msra.mxu0 %v952
    %3895 = vmatpush.bf16.msra.mxu0 %v944
    %3896 = vmatpush.bf16.msra.mxu0 %v936
    %3897 = vmatpush.bf16.msra.mxu0 %v928
    %3898 = vmatmul.bf16.gmra.mxu0 %v3876
    %v3899 = vpop.f32.mrf.mxu0
    %v3900 = vadd.f32 %v3887, %v3899
    %v3901 = vpop.f32.mrf.mxu0
    %3902 = vdwg.mxu0
    %3903 = vmatpush.bf16.msra.mxu0 %v921
    %3904 = vmatpush.bf16.msra.mxu0 %v913
    %3905 = vmatpush.bf16.msra.mxu0 %v905
    %3906 = vmatpush.bf16.msra.mxu0 %v897
    %3907 = vmatpush.bf16.msra.mxu0 %v889
    %3908 = vmatpush.bf16.msra.mxu0 %v881
    %3909 = vmatpush.bf16.msra.mxu0 %v873
    %3910 = vmatpush.bf16.msra.mxu0 %v865
    %3911 = vmatmul.bf16.gmra.mxu0 %v3875
    %v3912 = vpop.f32.mrf.mxu0
    %v3913 = vadd.f32 0.0, %v3912
    %v3914 = vpop.f32.mrf.mxu0
    %3915 = vdwg.mxu0
    %3916 = vmatpush.bf16.msra.mxu0 %v985
    %3917 = vmatpush.bf16.msra.mxu0 %v977
    %3918 = vmatpush.bf16.msra.mxu0 %v969
    %3919 = vmatpush.bf16.msra.mxu0 %v961
    %3920 = vmatpush.bf16.msra.mxu0 %v953
    %3921 = vmatpush.bf16.msra.mxu0 %v945
    %3922 = vmatpush.bf16.msra.mxu0 %v937
    %3923 = vmatpush.bf16.msra.mxu0 %v929
    %3924 = vmatmul.bf16.gmra.mxu0 %v3876
    %v3925 = vpop.f32.mrf.mxu0
    %v3926 = vadd.f32 %v3913, %v3925
    %v3927 = vpop.f32.mrf.mxu0
    %3928 = vdwg.mxu0
    %3929 = vmatpush.bf16.msra.mxu0 %v922
    %3930 = vmatpush.bf16.msra.mxu0 %v914
    %3931 = vmatpush.bf16.msra.mxu0 %v906
    %3932 = vmatpush.bf16.msra.mxu0 %v898
    %3933 = vmatpush.bf16.msra.mxu0 %v890
    %3934 = vmatpush.bf16.msra.mxu0 %v882
    %3935 = vmatpush.bf16.msra.mxu0 %v874
    %3936 = vmatpush.bf16.msra.mxu0 %v866
    %3937 = vmatmul.bf16.gmra.mxu0 %v3875
    %v3938 = vpop.f32.mrf.mxu0
    %v3939 = vadd.f32 0.0, %v3938
    %v3940 = vpop.f32.mrf.mxu0
    %3941 = vdwg.mxu0
    %3942 = vmatpush.bf16.msra.mxu0 %v986
    %3943 = vmatpush.bf16.msra.mxu0 %v978
    %3944 = vmatpush.bf16.msra.mxu0 %v970
    %3945 = vmatpush.bf16.msra.mxu0 %v962
    %3946 = vmatpush.bf16.msra.mxu0 %v954
    %3947 = vmatpush.bf16.msra.mxu0 %v946
    %3948 = vmatpush.bf16.msra.mxu0 %v938
    %3949 = vmatpush.bf16.msra.mxu0 %v930
    %3950 = vmatmul.bf16.gmra.mxu0 %v3876
    %v3951 = vpop.f32.mrf.mxu0
    %v3952 = vadd.f32 %v3939, %v3951
    %v3953 = vpop.f32.mrf.mxu0
    %3954 = vdwg.mxu0
    %3955 = vmatpush.bf16.msra.mxu0 %v923
    %3956 = vmatpush.bf16.msra.mxu0 %v915
    %3957 = vmatpush.bf16.msra.mxu0 %v907
    %3958 = vmatpush.bf16.msra.mxu0 %v899
    %3959 = vmatpush.bf16.msra.mxu0 %v891
    %3960 = vmatpush.bf16.msra.mxu0 %v883
    %3961 = vmatpush.bf16.msra.mxu0 %v875
    %3962 = vmatpush.bf16.msra.mxu0 %v867
    %3963 = vmatmul.bf16.gmra.mxu0 %v3875
    %v3964 = vpop.f32.mrf.mxu0
    %v3965 = vadd.f32 0.0, %v3964
    %v3966 = vpop.f32.mrf.mxu0
    %3967 = vdwg.mxu0
    %3968 = vmatpush.bf16.msra.mxu0 %v987
    %3969 = vmatpush.bf16.msra.mxu0 %v979
    %3970 = vmatpush.bf16.msra.mxu0 %v971
    %3971 = vmatpush.bf16.msra.mxu0 %v963
    %3972 = vmatpush.bf16.msra.mxu0 %v955
    %3973 = vmatpush.bf16.msra.mxu0 %v947
    %3974 = vmatpush.bf16.msra.mxu0 %v939
    %3975 = vmatpush.bf16.msra.mxu0 %v931
    %3976 = vmatmul.bf16.gmra.mxu0 %v3876
    %v3977 = vpop.f32.mrf.mxu0
    %v3978 = vadd.f32 %v3965, %v3977
    %v3979 = vpop.f32.mrf.mxu0
    %3980 = vdwg.mxu0
    %3981 = vmatpush.bf16.msra.mxu0 %v924
    %3982 = vmatpush.bf16.msra.mxu0 %v916
    %3983 = vmatpush.bf16.msra.mxu0 %v908
    %3984 = vmatpush.bf16.msra.mxu0 %v900
    %3985 = vmatpush.bf16.msra.mxu0 %v892
    %3986 = vmatpush.bf16.msra.mxu0 %v884
    %3987 = vmatpush.bf16.msra.mxu0 %v876
    %3988 = vmatpush.bf16.msra.mxu0 %v868
    %3989 = vmatmul.bf16.gmra.mxu0 %v3875
    %v3990 = vpop.f32.mrf.mxu0
    %v3991 = vadd.f32 0.0, %v3990
    %v3992 = vpop.f32.mrf.mxu0
    %3993 = vdwg.mxu0
    %3994 = vmatpush.bf16.msra.mxu0 %v988
    %3995 = vmatpush.bf16.msra.mxu0 %v980
    %3996 = vmatpush.bf16.msra.mxu0 %v972
    %3997 = vmatpush.bf16.msra.mxu0 %v964
    %3998 = vmatpush.bf16.msra.mxu0 %v956
    %3999 = vmatpush.bf16.msra.mxu0 %v948
    %4000 = vmatpush.bf16.msra.mxu0 %v940
    %4001 = vmatpush.bf16.msra.mxu0 %v932
    %4002 = vmatmul.bf16.gmra.mxu0 %v3876
    %v4003 = vpop.f32.mrf.mxu0
    %v4004 = vadd.f32 %v3991, %v4003
    %v4005 = vpop.f32.mrf.mxu0
    %4006 = vdwg.mxu0
    %4007 = vmatpush.bf16.msra.mxu0 %v925
    %4008 = vmatpush.bf16.msra.mxu0 %v917
    %4009 = vmatpush.bf16.msra.mxu0 %v909
    %4010 = vmatpush.bf16.msra.mxu0 %v901
    %4011 = vmatpush.bf16.msra.mxu0 %v893
    %4012 = vmatpush.bf16.msra.mxu0 %v885
    %4013 = vmatpush.bf16.msra.mxu0 %v877
    %4014 = vmatpush.bf16.msra.mxu0 %v869
    %4015 = vmatmul.bf16.gmra.mxu0 %v3875
    %v4016 = vpop.f32.mrf.mxu0
    %v4017 = vadd.f32 0.0, %v4016
    %v4018 = vpop.f32.mrf.mxu0
    %4019 = vdwg.mxu0
    %4020 = vmatpush.bf16.msra.mxu0 %v989
    %4021 = vmatpush.bf16.msra.mxu0 %v981
    %4022 = vmatpush.bf16.msra.mxu0 %v973
    %4023 = vmatpush.bf16.msra.mxu0 %v965
    %4024 = vmatpush.bf16.msra.mxu0 %v957
    %4025 = vmatpush.bf16.msra.mxu0 %v949
    %4026 = vmatpush.bf16.msra.mxu0 %v941
    %4027 = vmatpush.bf16.msra.mxu0 %v933
    %4028 = vmatmul.bf16.gmra.mxu0 %v3876
    %v4029 = vpop.f32.mrf.mxu0
    %v4030 = vadd.f32 %v4017, %v4029
    %v4031 = vpop.f32.mrf.mxu0
    %4032 = vdwg.mxu0
    %4033 = vmatpush.bf16.msra.mxu0 %v926
    %4034 = vmatpush.bf16.msra.mxu0 %v918
    %4035 = vmatpush.bf16.msra.mxu0 %v910
    %4036 = vmatpush.bf16.msra.mxu0 %v902
    %4037 = vmatpush.bf16.msra.mxu0 %v894
    %4038 = vmatpush.bf16.msra.mxu0 %v886
    %4039 = vmatpush.bf16.msra.mxu0 %v878
    %4040 = vmatpush.bf16.msra.mxu0 %v870
    %4041 = vmatmul.bf16.gmra.mxu0 %v3875
    %v4042 = vpop.f32.mrf.mxu0
    %v4043 = vadd.f32 0.0, %v4042
    %v4044 = vpop.f32.mrf.mxu0
    %4045 = vdwg.mxu0
    %4046 = vmatpush.bf16.msra.mxu0 %v990
    %4047 = vmatpush.bf16.msra.mxu0 %v982
    %4048 = vmatpush.bf16.msra.mxu0 %v974
    %4049 = vmatpush.bf16.msra.mxu0 %v966
    %4050 = vmatpush.bf16.msra.mxu0 %v958
    %4051 = vmatpush.bf16.msra.mxu0 %v950
    %4052 = vmatpush.bf16.msra.mxu0 %v942
    %4053 = vmatpush.bf16.msra.mxu0 %v934
    %4054 = vmatmul.bf16.gmra.mxu0 %v3876
    %v4055 = vpop.f32.mrf.mxu0
    %v4056 = vadd.f32 %v4043, %v4055
    %v4057 = vpop.f32.mrf.mxu0
    %4058 = vdwg.mxu0
    %4059 = vmatpush.bf16.msra.mxu0 %v927
    %4060 = vmatpush.bf16.msra.mxu0 %v919
    %4061 = vmatpush.bf16.msra.mxu0 %v911
    %4062 = vmatpush.bf16.msra.mxu0 %v903
    %4063 = vmatpush.bf16.msra.mxu0 %v895
    %4064 = vmatpush.bf16.msra.mxu0 %v887
    %4065 = vmatpush.bf16.msra.mxu0 %v879
    %4066 = vmatpush.bf16.msra.mxu0 %v871
    %4067 = vmatmul.bf16.gmra.mxu0 %v3875
    %v4068 = vpop.f32.mrf.mxu0
    %v4069 = vadd.f32 0.0, %v4068
    %v4070 = vpop.f32.mrf.mxu0
    %4071 = vdwg.mxu0
    %4072 = vmatpush.bf16.msra.mxu0 %v991
    %4073 = vmatpush.bf16.msra.mxu0 %v983
    %4074 = vmatpush.bf16.msra.mxu0 %v975
    %4075 = vmatpush.bf16.msra.mxu0 %v967
    %4076 = vmatpush.bf16.msra.mxu0 %v959
    %4077 = vmatpush.bf16.msra.mxu0 %v951
    %4078 = vmatpush.bf16.msra.mxu0 %v943
    %4079 = vmatpush.bf16.msra.mxu0 %v935
    %4080 = vmatmul.bf16.gmra.mxu0 %v3876
    %v4081 = vpop.f32.mrf.mxu0
    %v4082 = vadd.f32 %v4069, %v4081
    %v4083 = vpop.f32.mrf.mxu0
    %4084 = vdwg.mxu0
    %v4085 = vadd.f32 %v3867, %v3900
    %v4086 = vadd.f32 %v3868, %v3926
    %v4087 = vadd.f32 %v3869, %v3952
    %v4088 = vadd.f32 %v3870, %v3978
    %v4089 = vadd.f32 %v3871, %v4004
    %v4090 = vadd.f32 %v3872, %v4030
    %v4091 = vadd.f32 %v3873, %v4056
    %v4092 = vadd.f32 %v3874, %v4082
    %v4093 = vadd.f32 %v4085, %v222
    %v4094 = vadd.f32 %v4086, %v223
    %v4095 = vadd.f32 %v4087, %v224
    %v4096 = vadd.f32 %v4088, %v225
    %v4097 = vadd.f32 %v4089, %v226
    %v4098 = vadd.f32 %v4090, %v227
    %v4099 = vadd.f32 %v4091, %v228
    %v4100 = vadd.f32 %v4092, %v229
    %v4101 = vxor.u32 %v4093, 2147483648
    %v4102 = vxor.u32 %v4094, 2147483648
    %v4103 = vmul.f32 %v4101, 1.442695
    %v4104 = vpow.pop %v4103
    %v4105 = vmul.f32 %v4102, 1.442695
    %v4106 = vpow.pop %v4105
    %v4107 = vadd.f32 %v4104, 1.0
    %v4108 = vadd.f32 %v4106, 1.0
    %v4109 = vrcp.pop %v4107
    %v4110 = vmul.f32 %v4107, %v4109
    %v4111 = vsub.f32 1.0, %v4110
    %v4112 = vmul.f32 %v4109, %v4111
    %v4113 = vadd.f32 %v4109, %v4112
    %vm4114 = vweird.f32 %v4107
    %vm4115 = vweird.f32 %v4109
    %vm4116 = vmor %vm4114, %vm4115
    %v4117 = vsel %vm4116, %v4109, %v4113
    %v4118 = vand.u32 2147483647, %v4107
    %vm4119 = vcmp.eq.f32.partialorder %v4118, 8.507059e+37
    %v4120 = vand.u32 %v4107, 2147483648
    %v4121 = vor.u32 1.1754944e-38, %v4120
    %v4122 = vsel %vm4119, %v4121, %v4117
    %v4123 = vmul.f32 1.0, %v4122
    %v4124 = vrcp.pop %v4108
    %v4125 = vmul.f32 %v4108, %v4124
    %v4126 = vsub.f32 1.0, %v4125
    %v4127 = vmul.f32 %v4124, %v4126
    %v4128 = vadd.f32 %v4124, %v4127
    %vm4129 = vweird.f32 %v4108
    %vm4130 = vweird.f32 %v4124
    %vm4131 = vmor %vm4129, %vm4130
    %v4132 = vsel %vm4131, %v4124, %v4128
    %v4133 = vand.u32 2147483647, %v4108
    %vm4134 = vcmp.eq.f32.partialorder %v4133, 8.507059e+37
    %v4135 = vand.u32 %v4108, 2147483648
    %v4136 = vor.u32 1.1754944e-38, %v4135
    %v4137 = vsel %vm4134, %v4136, %v4132
    %v4138 = vmul.f32 1.0, %v4137
    %v4139 = vxor.u32 %v4095, 2147483648
    %v4140 = vxor.u32 %v4096, 2147483648
    %v4141 = vmul.f32 %v4139, 1.442695
    %v4142 = vpow.pop %v4141
    %v4143 = vmul.f32 %v4140, 1.442695
    %v4144 = vpow.pop %v4143
    %v4145 = vadd.f32 %v4142, 1.0
    %v4146 = vadd.f32 %v4144, 1.0
    %v4147 = vrcp.pop %v4145
    %v4148 = vmul.f32 %v4145, %v4147
    %v4149 = vsub.f32 1.0, %v4148
    %v4150 = vmul.f32 %v4147, %v4149
    %v4151 = vadd.f32 %v4147, %v4150
    %vm4152 = vweird.f32 %v4145
    %vm4153 = vweird.f32 %v4147
    %vm4154 = vmor %vm4152, %vm4153
    %v4155 = vsel %vm4154, %v4147, %v4151
    %v4156 = vand.u32 2147483647, %v4145
    %vm4157 = vcmp.eq.f32.partialorder %v4156, 8.507059e+37
    %v4158 = vand.u32 %v4145, 2147483648
    %v4159 = vor.u32 1.1754944e-38, %v4158
    %v4160 = vsel %vm4157, %v4159, %v4155
    %v4161 = vmul.f32 1.0, %v4160
    %v4162 = vrcp.pop %v4146
    %v4163 = vmul.f32 %v4146, %v4162
    %v4164 = vsub.f32 1.0, %v4163
    %v4165 = vmul.f32 %v4162, %v4164
    %v4166 = vadd.f32 %v4162, %v4165
    %vm4167 = vweird.f32 %v4146
    %vm4168 = vweird.f32 %v4162
    %vm4169 = vmor %vm4167, %vm4168
    %v4170 = vsel %vm4169, %v4162, %v4166
    %v4171 = vand.u32 2147483647, %v4146
    %vm4172 = vcmp.eq.f32.partialorder %v4171, 8.507059e+37
    %v4173 = vand.u32 %v4146, 2147483648
    %v4174 = vor.u32 1.1754944e-38, %v4173
    %v4175 = vsel %vm4172, %v4174, %v4170
    %v4176 = vmul.f32 1.0, %v4175
    %v4177 = vtanh.pop %v4097
    %v4178 = vtanh.pop %v4098
    %v4179 = vxor.u32 %v4099, 2147483648
    %v4180 = vxor.u32 %v4100, 2147483648
    %v4181 = vmul.f32 %v4179, 1.442695
    %v4182 = vpow.pop %v4181
    %v4183 = vmul.f32 %v4180, 1.442695
    %v4184 = vpow.pop %v4183
    %v4185 = vadd.f32 %v4182, 1.0
    %v4186 = vadd.f32 %v4184, 1.0
    %v4187 = vrcp.pop %v4185
    %v4188 = vmul.f32 %v4185, %v4187
    %v4189 = vsub.f32 1.0, %v4188
    %v4190 = vmul.f32 %v4187, %v4189
    %v4191 = vadd.f32 %v4187, %v4190
    %vm4192 = vweird.f32 %v4185
    %vm4193 = vweird.f32 %v4187
    %vm4194 = vmor %vm4192, %vm4193
    %v4195 = vsel %vm4194, %v4187, %v4191
    %v4196 = vand.u32 2147483647, %v4185
    %vm4197 = vcmp.eq.f32.partialorder %v4196, 8.507059e+37
    %v4198 = vand.u32 %v4185, 2147483648
    %v4199 = vor.u32 1.1754944e-38, %v4198
    %v4200 = vsel %vm4197, %v4199, %v4195
    %v4201 = vmul.f32 1.0, %v4200
    %v4202 = vrcp.pop %v4186
    %v4203 = vmul.f32 %v4186, %v4202
    %v4204 = vsub.f32 1.0, %v4203
    %v4205 = vmul.f32 %v4202, %v4204
    %v4206 = vadd.f32 %v4202, %v4205
    %vm4207 = vweird.f32 %v4186
    %vm4208 = vweird.f32 %v4202
    %vm4209 = vmor %vm4207, %vm4208
    %v4210 = vsel %vm4209, %v4202, %v4206
    %v4211 = vand.u32 2147483647, %v4186
    %vm4212 = vcmp.eq.f32.partialorder %v4211, 8.507059e+37
    %v4213 = vand.u32 %v4186, 2147483648
    %v4214 = vor.u32 1.1754944e-38, %v4213
    %v4215 = vsel %vm4212, %v4214, %v4210
    %v4216 = vmul.f32 1.0, %v4215
    %v4217 = vmul.f32 %v4161, %v3760
    %v4218 = vmul.f32 %v4176, %v3761
    %v4219 = vmul.f32 %v4123, %v4177
    %v4220 = vmul.f32 %v4138, %v4178
    %v4221 = vadd.f32 %v4217, %v4219
    %v4222 = vadd.f32 %v4218, %v4220
    %v4223 = vtanh.pop %v4221
    %v4224 = vtanh.pop %v4222
    %v4225 = vmul.f32 %v4201, %v4223
    %v4226 = vmul.f32 %v4216, %v4224
    %v4227 = vmul.f32 %v3865, %v241
    %v4228 = vmul.f32 %v3844, %v245
    %v4229 = vadd.f32 %v4227, %v4228
    %v4230 = vadd.f32 %v4229, %v249
    %v4231 = vxor.u32 %v4230, 2147483648
    %v4232 = vmul.f32 %v4231, 1.442695
    %v4233 = vpow.pop %v4232
    %v4234 = vadd.f32 %v4233, 1.0
    %v4235 = vrcp.pop %v4234
    %v4236 = vmul.f32 %v4234, %v4235
    %v4237 = vsub.f32 1.0, %v4236
    %v4238 = vmul.f32 %v4235, %v4237
    %v4239 = vadd.f32 %v4235, %v4238
    %vm4240 = vweird.f32 %v4234
    %vm4241 = vweird.f32 %v4235
    %vm4242 = vmor %vm4240, %vm4241
    %v4243 = vsel %vm4242, %v4235, %v4239
    %v4244 = vand.u32 2147483647, %v4234
    %vm4245 = vcmp.eq.f32.partialorder %v4244, 8.507059e+37
    %v4246 = vand.u32 %v4234, 2147483648
    %v4247 = vor.u32 1.1754944e-38, %v4246
    %v4248 = vsel %vm4245, %v4247, %v4243
    %v4249 = vmul.f32 1.0, %v4248
    %v4250 = vmul.f32 %v3865, %v242
    %v4251 = vmul.f32 %v3844, %v246
    %v4252 = vadd.f32 %v4250, %v4251
    %v4253 = vadd.f32 %v4252, %v250
    %v4254 = vxor.u32 %v4253, 2147483648
    %v4255 = vmul.f32 %v4254, 1.442695
    %v4256 = vpow.pop %v4255
    %v4257 = vadd.f32 %v4256, 1.0
    %v4258 = vrcp.pop %v4257
    %v4259 = vmul.f32 %v4257, %v4258
    %v4260 = vsub.f32 1.0, %v4259
    %v4261 = vmul.f32 %v4258, %v4260
    %v4262 = vadd.f32 %v4258, %v4261
    %vm4263 = vweird.f32 %v4257
    %vm4264 = vweird.f32 %v4258
    %vm4265 = vmor %vm4263, %vm4264
    %v4266 = vsel %vm4265, %v4258, %v4262
    %v4267 = vand.u32 2147483647, %v4257
    %vm4268 = vcmp.eq.f32.partialorder %v4267, 8.507059e+37
    %v4269 = vand.u32 %v4257, 2147483648
    %v4270 = vor.u32 1.1754944e-38, %v4269
    %v4271 = vsel %vm4268, %v4270, %v4266
    %v4272 = vmul.f32 1.0, %v4271
    %v4273 = vmul.f32 %v3865, %v243
    %v4274 = vmul.f32 %v3844, %v247
    %v4275 = vadd.f32 %v4273, %v4274
    %v4276 = vadd.f32 %v4275, %v251
    %v4277 = vtanh.pop %v4276
    %v4278 = vmul.f32 %v3865, %v244
    %v4279 = vmul.f32 %v3844, %v248
    %v4280 = vadd.f32 %v4278, %v4279
    %v4281 = vadd.f32 %v4280, %v252
    %v4282 = vxor.u32 %v4281, 2147483648
    %v4283 = vmul.f32 %v4282, 1.442695
    %v4284 = vpow.pop %v4283
    %v4285 = vadd.f32 %v4284, 1.0
    %v4286 = vrcp.pop %v4285
    %v4287 = vmul.f32 %v4285, %v4286
    %v4288 = vsub.f32 1.0, %v4287
    %v4289 = vmul.f32 %v4286, %v4288
    %v4290 = vadd.f32 %v4286, %v4289
    %vm4291 = vweird.f32 %v4285
    %vm4292 = vweird.f32 %v4286
    %vm4293 = vmor %vm4291, %vm4292
    %v4294 = vsel %vm4293, %v4286, %v4290
    %v4295 = vand.u32 2147483647, %v4285
    %vm4296 = vcmp.eq.f32.partialorder %v4295, 8.507059e+37
    %v4297 = vand.u32 %v4285, 2147483648
    %v4298 = vor.u32 1.1754944e-38, %v4297
    %v4299 = vsel %vm4296, %v4298, %v4294
    %v4300 = vmul.f32 1.0, %v4299
    %v4301 = vmul.f32 %v4272, %v3842
    %v4302 = vmul.f32 %v4249, %v4277
    %v4303 = vadd.f32 %v4301, %v4302
    %v4304 = vtanh.pop %v4303
    %v4305 = vmul.f32 %v4300, %v4304
    %4307 = vrot.lane.b32.xlu0 %v4305, 7
    %v4308 = vpop.permute.xlu0 %4307
    %vm4310 = vcmask 64568
    %4311 = vst.msk [vmem:[#allocation2] sm:$0xff] %vm4310, %v4308
    %4312 = vrot.lane.b32.xlu0 %v4305, 6
    %v4313 = vpop.permute.xlu0 %4312
    %4315 = vst.msk [vmem:[%s454] sm:$0xff] %vm4310, %v4313
    %4316 = vrot.lane.b32.xlu0 %v4305, 5
    %v4317 = vpop.permute.xlu0 %4316
    %4319 = vst.msk [vmem:[%s459] sm:$0xff] %vm4310, %v4317
    %4320 = vrot.lane.b32.xlu0 %v4305, 4
    %v4321 = vpop.permute.xlu0 %4320
    %4323 = vst.msk [vmem:[%s464] sm:$0xff] %vm4310, %v4321
    %vm4324 = vcmask 261120
    %v4326 = vsel %vm4324, %v4225, 0
    %v4329 = vsel %vm4324, %v4226, 0
    %4331 = vmatpush.xpose.msra.mxu0 0.0
    %4332 = vmatpush.xpose.msra.mxu0 0.0
    %4333 = vmatpush.xpose.msra.mxu0 0.0
    %4334 = vmatpush.xpose.msra.mxu0 0.0
    %4335 = vmatpush.xpose.msra.mxu0 0.0
    %4336 = vmatpush.xpose.msra.mxu0 0.0
    %4337 = vmatpush.xpose.msra.mxu0 0.0
    %4338 = vmatpush.xpose.msra.mxu0 0.0
    %4339 = vmatpush.xpose.msra.mxu0 0.0
    %4340 = vmatpush.xpose.msra.mxu0 0.0
    %4341 = vmatpush.xpose.msra.mxu0 0.0
    %4342 = vmatpush.xpose.msra.mxu0 0.0
    %4343 = vmatpush.xpose.msra.mxu0 0.0
    %4344 = vmatpush.xpose.msra.mxu0 0.0
    %4345 = vmatpush.xpose.msra.mxu0 0.0
    %4346 = vmatpush.xpose.msra.mxu0 %v4329
    %4347 = vmatmul.f32.gmra.mxu0 %v4326
    %v4348 = vpop.f32.mrf.mxu0
    %v4349 = vadd.f32 0.0, %v4348
    %4350 = vdwg.mxu0
    %v4351 = vmul.f32 %v4349, 0.17677669
    %vm4352 = vcmp.ge.f32.partialorder %v4351, 0.0
    %v4353 = vmul.f32 %v4351, 0.2
    %v4354 = vsel %vm4352, %v4351, %v4353
    %v4355 = vadd.f32 %v4354, %v201
    %vm4356 = vcmask 64512
    %v4357 = vsel %vm4356, %v4355, -inf
    %4358 = vmax.xlane.f32.xlu0 %v4357
    %v4359 = vpop.xlane.xlu0 %4358
    %v4360 = vsub.f32 %v4355, %v4359
    %v4361 = vmul.f32 %v4360, 1.442695
    %v4362 = vpow.pop %v4361
    %v4363 = vsel %vm4356, %v4362, 0.0
    %4364 = vadd.xlane.f32.xlu0 %v4363
    %v4365 = vpop.xlane.xlu0 %4364
    %v4366 = vrcp.pop %v4365
    %v4367 = vmul.f32 %v4362, %v4366
    %v4368 = vld [vmem:[#allocation2] sm:$0xff]
    %v4370 = vsel %vm4356, %v4367, 0
    %4372 = vmatpush.msra.mxu0 0.0
    %4373 = vmatpush.msra.mxu0 0.0
    %4374 = vmatpush.msra.mxu0 0.0
    %4375 = vmatpush.msra.mxu0 0.0
    %4376 = vmatpush.msra.mxu0 0.0
    %4377 = vmatpush.msra.mxu0 0.0
    %4378 = vmatpush.msra.mxu0 0.0
    %4379 = vmatpush.msra.mxu0 0.0
    %4380 = vmatpush.msra.mxu0 0.0
    %4381 = vmatpush.msra.mxu0 0.0
    %4382 = vmatpush.msra.mxu0 0.0
    %4383 = vmatpush.msra.mxu0 0.0
    %4384 = vmatpush.msra.mxu0 0.0
    %4385 = vmatpush.msra.mxu0 0.0
    %4386 = vmatpush.msra.mxu0 0.0
    %4387 = vmatpush.msra.mxu0 %v4368
    %4388 = vmatmul.f32.gmra.mxu0 %v4370
    %v4389 = vpop.f32.mrf.mxu0
    %v4390 = vadd.f32 0.0, %v4389
    %4391 = vdwg.mxu0
    %vm4392 = vcmp.ge.f32.partialorder %v4390, 0.0
    %v4393 = vmul.f32 %v4390, 0.2
    %v4394 = vsel %vm4392, %v4390, %v4393
    %s4395 = sld [smem:[#allocation8]]
    %v4396 = vstv %s4395
    %v4397 = vmul.f32 %v4394, %v4396
    %v4398 = vadd.f32 %v4397, 0.0
    %4399 = vrot.lane.b32.xlu0 %v4225, 96
    %v4400 = vpop.permute.xlu0 %4399
    %4401 = vrot.lane.b32.xlu0 %v4226, 96
    %v4402 = vpop.permute.xlu0 %4401
    %v4403 = vsel %vm4324, %v4400, 0
    %v4405 = vsel %vm4324, %v4402, 0
    %4407 = vmatpush.xpose.msra.mxu0 0.0
    %4408 = vmatpush.xpose.msra.mxu0 0.0
    %4409 = vmatpush.xpose.msra.mxu0 0.0
    %4410 = vmatpush.xpose.msra.mxu0 0.0
    %4411 = vmatpush.xpose.msra.mxu0 0.0
    %4412 = vmatpush.xpose.msra.mxu0 0.0
    %4413 = vmatpush.xpose.msra.mxu0 0.0
    %4414 = vmatpush.xpose.msra.mxu0 0.0
    %4415 = vmatpush.xpose.msra.mxu0 0.0
    %4416 = vmatpush.xpose.msra.mxu0 0.0
    %4417 = vmatpush.xpose.msra.mxu0 0.0
    %4418 = vmatpush.xpose.msra.mxu0 0.0
    %4419 = vmatpush.xpose.msra.mxu0 0.0
    %4420 = vmatpush.xpose.msra.mxu0 0.0
    %4421 = vmatpush.xpose.msra.mxu0 0.0
    %4422 = vmatpush.xpose.msra.mxu0 %v4405
    %4423 = vmatmul.f32.gmra.mxu0 %v4403
    %v4424 = vpop.f32.mrf.mxu0
    %v4425 = vadd.f32 0.0, %v4424
    %4426 = vdwg.mxu0
    %v4427 = vmul.f32 %v4425, 0.17677669
    %vm4428 = vcmp.ge.f32.partialorder %v4427, 0.0
    %v4429 = vmul.f32 %v4427, 0.2
    %v4430 = vsel %vm4428, %v4427, %v4429
    %v4431 = vadd.f32 %v4430, %v201
    %v4432 = vsel %vm4356, %v4431, -inf
    %4433 = vmax.xlane.f32.xlu0 %v4432
    %v4434 = vpop.xlane.xlu0 %4433
    %v4435 = vsub.f32 %v4431, %v4434
    %v4436 = vmul.f32 %v4435, 1.442695
    %v4437 = vpow.pop %v4436
    %v4438 = vsel %vm4356, %v4437, 0.0
    %4439 = vadd.xlane.f32.xlu0 %v4438
    %v4440 = vpop.xlane.xlu0 %4439
    %v4441 = vrcp.pop %v4440
    %v4442 = vmul.f32 %v4437, %v4441
    %v4443 = vld [vmem:[%s454] sm:$0xff]
    %v4445 = vsel %vm4356, %v4442, 0
    %4447 = vmatpush.msra.mxu0 0.0
    %4448 = vmatpush.msra.mxu0 0.0
    %4449 = vmatpush.msra.mxu0 0.0
    %4450 = vmatpush.msra.mxu0 0.0
    %4451 = vmatpush.msra.mxu0 0.0
    %4452 = vmatpush.msra.mxu0 0.0
    %4453 = vmatpush.msra.mxu0 0.0
    %4454 = vmatpush.msra.mxu0 0.0
    %4455 = vmatpush.msra.mxu0 0.0
    %4456 = vmatpush.msra.mxu0 0.0
    %4457 = vmatpush.msra.mxu0 0.0
    %4458 = vmatpush.msra.mxu0 0.0
    %4459 = vmatpush.msra.mxu0 0.0
    %4460 = vmatpush.msra.mxu0 0.0
    %4461 = vmatpush.msra.mxu0 0.0
    %4462 = vmatpush.msra.mxu0 %v4443
    %4463 = vmatmul.f32.gmra.mxu0 %v4445
    %v4464 = vpop.f32.mrf.mxu0
    %v4465 = vadd.f32 0.0, %v4464
    %4466 = vdwg.mxu0
    %vm4467 = vcmp.ge.f32.partialorder %v4465, 0.0
    %v4468 = vmul.f32 %v4465, 0.2
    %v4469 = vsel %vm4467, %v4465, %v4468
    %s4470 = sld [smem:[#allocation8 + $0x1]]
    %v4471 = vstv %s4470
    %v4472 = vmul.f32 %v4469, %v4471
    %v4473 = vadd.f32 %v4398, %v4472
    %4474 = vrot.lane.b32.xlu0 %v4225, 64
    %v4475 = vpop.permute.xlu0 %4474
    %4476 = vrot.lane.b32.xlu0 %v4226, 64
    %v4477 = vpop.permute.xlu0 %4476
    %v4478 = vsel %vm4324, %v4475, 0
    %v4480 = vsel %vm4324, %v4477, 0
    %4482 = vmatpush.xpose.msra.mxu0 0.0
    %4483 = vmatpush.xpose.msra.mxu0 0.0
    %4484 = vmatpush.xpose.msra.mxu0 0.0
    %4485 = vmatpush.xpose.msra.mxu0 0.0
    %4486 = vmatpush.xpose.msra.mxu0 0.0
    %4487 = vmatpush.xpose.msra.mxu0 0.0
    %4488 = vmatpush.xpose.msra.mxu0 0.0
    %4489 = vmatpush.xpose.msra.mxu0 0.0
    %4490 = vmatpush.xpose.msra.mxu0 0.0
    %4491 = vmatpush.xpose.msra.mxu0 0.0
    %4492 = vmatpush.xpose.msra.mxu0 0.0
    %4493 = vmatpush.xpose.msra.mxu0 0.0
    %4494 = vmatpush.xpose.msra.mxu0 0.0
    %4495 = vmatpush.xpose.msra.mxu0 0.0
    %4496 = vmatpush.xpose.msra.mxu0 0.0
    %4497 = vmatpush.xpose.msra.mxu0 %v4480
    %4498 = vmatmul.f32.gmra.mxu0 %v4478
    %v4499 = vpop.f32.mrf.mxu0
    %v4500 = vadd.f32 0.0, %v4499
    %4501 = vdwg.mxu0
    %v4502 = vmul.f32 %v4500, 0.17677669
    %vm4503 = vcmp.ge.f32.partialorder %v4502, 0.0
    %v4504 = vmul.f32 %v4502, 0.2
    %v4505 = vsel %vm4503, %v4502, %v4504
    %v4506 = vadd.f32 %v4505, %v201
    %v4507 = vsel %vm4356, %v4506, -inf
    %4508 = vmax.xlane.f32.xlu0 %v4507
    %v4509 = vpop.xlane.xlu0 %4508
    %v4510 = vsub.f32 %v4506, %v4509
    %v4511 = vmul.f32 %v4510, 1.442695
    %v4512 = vpow.pop %v4511
    %v4513 = vsel %vm4356, %v4512, 0.0
    %4514 = vadd.xlane.f32.xlu0 %v4513
    %v4515 = vpop.xlane.xlu0 %4514
    %v4516 = vrcp.pop %v4515
    %v4517 = vmul.f32 %v4512, %v4516
    %v4518 = vld [vmem:[%s459] sm:$0xff]
    %v4520 = vsel %vm4356, %v4517, 0
    %4522 = vmatpush.msra.mxu0 0.0
    %4523 = vmatpush.msra.mxu0 0.0
    %4524 = vmatpush.msra.mxu0 0.0
    %4525 = vmatpush.msra.mxu0 0.0
    %4526 = vmatpush.msra.mxu0 0.0
    %4527 = vmatpush.msra.mxu0 0.0
    %4528 = vmatpush.msra.mxu0 0.0
    %4529 = vmatpush.msra.mxu0 0.0
    %4530 = vmatpush.msra.mxu0 0.0
    %4531 = vmatpush.msra.mxu0 0.0
    %4532 = vmatpush.msra.mxu0 0.0
    %4533 = vmatpush.msra.mxu0 0.0
    %4534 = vmatpush.msra.mxu0 0.0
    %4535 = vmatpush.msra.mxu0 0.0
    %4536 = vmatpush.msra.mxu0 0.0
    %4537 = vmatpush.msra.mxu0 %v4518
    %4538 = vmatmul.f32.gmra.mxu0 %v4520
    %v4539 = vpop.f32.mrf.mxu0
    %v4540 = vadd.f32 0.0, %v4539
    %4541 = vdwg.mxu0
    %vm4542 = vcmp.ge.f32.partialorder %v4540, 0.0
    %v4543 = vmul.f32 %v4540, 0.2
    %v4544 = vsel %vm4542, %v4540, %v4543
    %s4545 = sld [smem:[#allocation8 + $0x2]]
    %v4546 = vstv %s4545
    %v4547 = vmul.f32 %v4544, %v4546
    %v4548 = vadd.f32 %v4473, %v4547
    %4549 = vrot.lane.b32.xlu0 %v4225, 32
    %v4550 = vpop.permute.xlu0 %4549
    %4551 = vrot.lane.b32.xlu0 %v4226, 32
    %v4552 = vpop.permute.xlu0 %4551
    %v4553 = vsel %vm4324, %v4550, 0
    %v4555 = vsel %vm4324, %v4552, 0
    %4557 = vmatpush.xpose.msra.mxu0 0.0
    %4558 = vmatpush.xpose.msra.mxu0 0.0
    %4559 = vmatpush.xpose.msra.mxu0 0.0
    %4560 = vmatpush.xpose.msra.mxu0 0.0
    %4561 = vmatpush.xpose.msra.mxu0 0.0
    %4562 = vmatpush.xpose.msra.mxu0 0.0
    %4563 = vmatpush.xpose.msra.mxu0 0.0
    %4564 = vmatpush.xpose.msra.mxu0 0.0
    %4565 = vmatpush.xpose.msra.mxu0 0.0
    %4566 = vmatpush.xpose.msra.mxu0 0.0
    %4567 = vmatpush.xpose.msra.mxu0 0.0
    %4568 = vmatpush.xpose.msra.mxu0 0.0
    %4569 = vmatpush.xpose.msra.mxu0 0.0
    %4570 = vmatpush.xpose.msra.mxu0 0.0
    %4571 = vmatpush.xpose.msra.mxu0 0.0
    %4572 = vmatpush.xpose.msra.mxu0 %v4555
    %4573 = vmatmul.f32.gmra.mxu0 %v4553
    %v4574 = vpop.f32.mrf.mxu0
    %v4575 = vadd.f32 0.0, %v4574
    %4576 = vdwg.mxu0
    %v4577 = vmul.f32 %v4575, 0.17677669
    %vm4578 = vcmp.ge.f32.partialorder %v4577, 0.0
    %v4579 = vmul.f32 %v4577, 0.2
    %v4580 = vsel %vm4578, %v4577, %v4579
    %v4581 = vadd.f32 %v4580, %v201
    %v4582 = vsel %vm4356, %v4581, -inf
    %4583 = vmax.xlane.f32.xlu0 %v4582
    %v4584 = vpop.xlane.xlu0 %4583
    %v4585 = vsub.f32 %v4581, %v4584
    %v4586 = vmul.f32 %v4585, 1.442695
    %v4587 = vpow.pop %v4586
    %v4588 = vsel %vm4356, %v4587, 0.0
    %4589 = vadd.xlane.f32.xlu0 %v4588
    %v4590 = vpop.xlane.xlu0 %4589
    %v4591 = vrcp.pop %v4590
    %v4592 = vmul.f32 %v4587, %v4591
    %v4593 = vld [vmem:[%s464] sm:$0xff]
    %v4595 = vsel %vm4356, %v4592, 0
    %4597 = vmatpush.msra.mxu0 0.0
    %4598 = vmatpush.msra.mxu0 0.0
    %4599 = vmatpush.msra.mxu0 0.0
    %4600 = vmatpush.msra.mxu0 0.0
    %4601 = vmatpush.msra.mxu0 0.0
    %4602 = vmatpush.msra.mxu0 0.0
    %4603 = vmatpush.msra.mxu0 0.0
    %4604 = vmatpush.msra.mxu0 0.0
    %4605 = vmatpush.msra.mxu0 0.0
    %4606 = vmatpush.msra.mxu0 0.0
    %4607 = vmatpush.msra.mxu0 0.0
    %4608 = vmatpush.msra.mxu0 0.0
    %4609 = vmatpush.msra.mxu0 0.0
    %4610 = vmatpush.msra.mxu0 0.0
    %4611 = vmatpush.msra.mxu0 0.0
    %4612 = vmatpush.msra.mxu0 %v4593
    %4613 = vmatmul.f32.gmra.mxu0 %v4595
    %v4614 = vpop.f32.mrf.mxu0
    %v4615 = vadd.f32 0.0, %v4614
    %4616 = vdwg.mxu0
    %vm4617 = vcmp.ge.f32.partialorder %v4615, 0.0
    %v4618 = vmul.f32 %v4615, 0.2
    %v4619 = vsel %vm4617, %v4615, %v4618
    %s4620 = sld [smem:[#allocation8 + $0x3]]
    %v4621 = vstv %s4620
    %v4622 = vmul.f32 %v4619, %v4621
    %v4623 = vadd.f32 %v4548, %v4622
    %s4624 = sld [smem:[#allocation3]]
    %v4625 = vstv %s4624
    %v4626 = vadd.f32 %v4623, %v4625
    %v4627 = vadd.f32 %v4626, %v72
    %vm4628 = vcmp.ge.f32.partialorder %v4627, 0.0
    %v4629 = vmul.f32 %v4627, 0.2
    %v4630 = vsel %vm4628, %v4627, %v4629
    %v4631 = vld [vmem:[%s10] sm:$0xff]
    %v4632 = vld [vmem:[%s11] sm:$0x1]
    %v4634 = vperm.slane %v4632, 0
    %v4637 = vsel %vm4356, %v4630, 0
    %4639 = vmatpush.msra.mxu0 0.0
    %4640 = vmatpush.msra.mxu0 0.0
    %4641 = vmatpush.msra.mxu0 0.0
    %4642 = vmatpush.msra.mxu0 0.0
    %4643 = vmatpush.msra.mxu0 0.0
    %4644 = vmatpush.msra.mxu0 0.0
    %4645 = vmatpush.msra.mxu0 0.0
    %4646 = vmatpush.msra.mxu0 0.0
    %4647 = vmatpush.msra.mxu0 0.0
    %4648 = vmatpush.msra.mxu0 0.0
    %4649 = vmatpush.msra.mxu0 0.0
    %4650 = vmatpush.msra.mxu0 0.0
    %4651 = vmatpush.msra.mxu0 0.0
    %4652 = vmatpush.msra.mxu0 0.0
    %4653 = vmatpush.msra.mxu0 0.0
    %4654 = vmatpush.msra.mxu0 %v4631
    %4655 = vmatmul.f32.gmra.mxu0 %v4637
    %v4656 = vpop.f32.mrf.mxu0
    %v4657 = vadd.f32 %v4634, %v4656
    %4658 = vdwg.mxu0
    %4659 = vst [vmem:[#allocation9] sm:$0xff] %v4657
    // Predicated region
    $region58: #{model_forward.1} parent=1 // pred_check
      _
    $region59: #{model_forward.1} parent=1 // pred_check_branch
      %4661 = sbr.rel (0) target = $region61
    $region60: #{model_forward.1} parent=1 // pred_region
      %4663 = vsyncadd [#allocation6], 0
      %s4665 = sshll.u32 [#allocation9], 4
      %s4666 = int_to_ptr.vmem [resolvable:$true] %s4665
      %s4667 = sshll.u32 %s12, 4
      %s4668 = int_to_ptr.hbm [resolvable:$true] %s4667
      %4670 = dma.vmem_to_hbm [thread:$0]  %s4666, 128, %s4668, [#allocation6]
    $region61: #{model_forward.1} parent=1 // pred_fallthru
      _
    // Predicated region
    $region62: #{model_forward.1} parent=1 // pred_check
      _
    $region63: #{model_forward.1} parent=1 // pred_check_branch
      %4672 = sbr.rel (0) target = $region65
    $region64: #{model_forward.1} parent=1 // pred_region
      %4674 = dma.done [#allocation6], 128
    $region65: #{model_forward.1} parent=1 // pred_fallthru
      _
    %4675 = vsyncpa [#allocation5], 1
    %4676 = vsyncpa [#allocation6], 1
    %4677 = vsyncpa [#allocation7], 1

</llo_original>
